<compile_context>
chip_gen: v7x
topology: tpu7x:2x2x1
jax: 0.10.0
libtpu: 0.0.40
codegen_flags: <defaults>
</compile_context>

<pallas_src>
import functools

import jax
import jax.numpy as jnp
from jax.experimental import pallas as pl
from jax.experimental.pallas import tpu as pltpu

EPS = 1e-5  # torch.nn.BatchNorm2d default eps


def _round_up(x, m):
    return (x + m - 1) // m * m


def _cdiv(a, b):
    return (a + b - 1) // b


# ------------------------------ compiler params ------------------------------

def _vmem_limit_bytes():
    # v5e/v6e: 128 MiB physical VMEM (default scoped cap is far lower); v7x: 64 MiB.
    # Use ~3/4 of physical when queryable, capped at 96 MiB; fall back to 32 MiB.
    try:
        cap = pltpu.get_tpu_info().vmem_capacity_bytes
        return int(min(cap * 3 // 4, 96 * 1024 * 1024))
    except Exception:
        return 32 * 1024 * 1024


def _compiler_params():
    # The single M grid axis is "parallel": shards across v7x's two TensorCores
    # and lets BlockSpec double-buffer every stream.
    return pltpu.CompilerParams(
        dimension_semantics=("parallel",),
        vmem_limit_bytes=_vmem_limit_bytes(),
    )


# --------------------------------- kernels -----------------------------------

def _conv1_kernel(*refs, taps, cout, has_proj):
    """3x3 conv1 (+ fused 1x1 shortcut conv) + masked per-tile BN partial stats.

    In-kernel halo im2col: the 9 taps are lane-shifted views of
    [left_halo | tile | right_halo]; each tap is one (Cout,Cin)x(Cin,TM) MXU
    matmul accumulated in f32 (no HBM-side patch tensor).
    """
    if has_proj:
        (xl_ref, xc_ref, xr_ref, m_ref, w1_ref, wsc_ref,
         y1_ref, ysc_ref, stats_ref) = refs
    else:
        xl_ref, xc_ref, xr_ref, m_ref, w1_ref, y1_ref, stats_ref = refs

    xc = xc_ref[...]                                             # (Cin, TM) bf16
    xcat = jnp.concatenate([xl_ref[...], xc, xr_ref[...]], axis=1)
    halo = xl_ref.shape[1]
    tm = xc.shape[1]

    acc = jnp.zeros((cout, tm), jnp.float32)
    for t, d in enumerate(taps):                                 # 9 shifted matmuls
        xs = xcat[:, halo + d: halo + d + tm]
        acc = acc + jnp.dot(w1_ref[t], xs, preferred_element_type=jnp.float32)
    y1_ref[...] = acc

    msk = m_ref[...]                                             # (1, TM) interior mask
    ym = acc * msk
    cols = [jnp.sum(ym, axis=1, keepdims=True),
            jnp.sum(acc * ym, axis=1, keepdims=True)]

    if has_proj:
        # 1x1 shortcut conv == the unshifted center tap -> reuse the same x tile.
        ysc = jnp.dot(wsc_ref[...], xc, preferred_element_type=jnp.float32)
        ysc_ref[...] = ysc
        sm = ysc * msk
        cols += [jnp.sum(sm, axis=1, keepdims=True),
                 jnp.sum(ysc * sm, axis=1, keepdims=True)]

    stats_ref[...] = jnp.concatenate(cols, axis=1)


def _conv2_kernel(y1l_ref, y1c_ref, y1r_ref, ml_ref, mc_ref, mr_ref,
                  ab1_ref, w2_ref, y2_ref, stats_ref, *, taps, cout):
    """bn1 affine + ReLU fused onto the (halo'd) conv1 output, then the 3x3 conv2
    as 9 shifted matmuls, plus masked per-tile BN partial stats for bn2."""
    scale = ab1_ref[:, 0:1]
    shift = ab1_ref[:, 1:2]

    def act(y_ref, m_ref):
        # bn1 affine + ReLU; the interior mask doubles as conv2's zero padding.
        return jnp.maximum(y_ref[...] * scale + shift, 0.0) * m_ref[...]

    hc = act(y1c_ref, mc_ref)                                    # (Cout, TM) f32
    hcat = jnp.concatenate([act(y1l_ref, ml_ref), hc, act(y1r_ref, mr_ref)], axis=1)
    halo = y1l_ref.shape[1]
    tm = hc.shape[1]

    acc = jnp.zeros((cout, tm), jnp.float32)
    for t, d in enumerate(taps):
        hs = hcat[:, halo + d: halo + d + tm]
        acc = acc + jnp.dot(w2_ref[t], hs, preferred_element_type=jnp.float32)
    y2_ref[...] = acc

    ym = acc * mc_ref[...]
    stats_ref[...] = jnp.concatenate(
        [jnp.sum(ym, axis=1, keepdims=True),
         jnp.sum(acc * ym, axis=1, keepdims=True)], axis=1)


def _bn_add_relu_kernel(y2_ref, sc_ref, ab2_ref, absc_ref, out_ref):
    """out = relu( affine_bn2(y2) + affine_bn_sc(shortcut) ); lane-dense stores."""
    y = y2_ref[...] * ab2_ref[:, 0:1] + ab2_ref[:, 1:2]
    s = sc_ref[...] * absc_ref[:, 0:1] + absc_ref[:, 1:2]
    out_ref[...] = jnp.maximum(y + s, 0.0).astype(out_ref.dtype)


# ----------------------------- pallas_call glue -------------------------------

def _conv1_call(x_bf, mask, w1, wsc, *, taps, cout, tm, halo, m_pad, has_proj):
    cin = x_bf.shape[0]
    grid = m_pad // tm
    r = tm // halo
    nhb = m_pad // halo

    left = lambda i: (0, jnp.maximum(i * r - 1, 0))          # clamped halo blocks;
    cur = lambda i: (0, i)                                    # garbage only ever lands
    right = lambda i: (0, jnp.minimum((i + 1) * r, nhb - 1))  # on masked positions.

    in_specs = [
        pl.BlockSpec((cin, halo), left),
        pl.BlockSpec((cin, tm), cur),
        pl.BlockSpec((cin, halo), right),
        pl.BlockSpec((1, tm), cur),
        pl.BlockSpec((9, cout, cin), lambda i: (0, 0, 0)),    # VMEM-resident weights
    ]
    operands = [x_bf, x_bf, x_bf, mask, w1]
    nst = 2 if has_proj else 1
    if has_proj:
        in_specs.append(pl.BlockSpec((cout, cin), lambda i: (0, 0)))
        operands.append(wsc)

    out_specs = [pl.BlockSpec((cout, tm), cur)]
    out_shape = [jax.ShapeDtypeStruct((cout, m_pad), jnp.float32)]
    if has_proj:
        out_specs.append(pl.BlockSpec((cout, tm), cur))
        out_shape.append(jax.ShapeDtypeStruct((cout, m_pad), jnp.float32))
    out_specs.append(pl.BlockSpec((None, cout, 2 * nst), lambda i: (i, 0, 0)))
    out_shape.append(jax.ShapeDtypeStruct((grid, cout, 2 * nst), jnp.float32))

    res = pl.pallas_call(
        functools.partial(_conv1_kernel, taps=taps, cout=cout, has_proj=has_proj),
        grid=(grid,),
        in_specs=in_specs,
        out_specs=out_specs,
        out_shape=out_shape,
        compiler_params=_compiler_params(),
    )(*operands)
    if has_proj:
        y1, ysc, stats = res
    else:
        y1, stats = res
        ysc = None
    return y1, ysc, jnp.sum(stats, axis=0)    # tiny cross-tile stats reduction in JAX


def _conv2_call(y1, mask, ab1, w2, *, taps, cout, tm, halo, m_pad):
    grid = m_pad // tm
    r = tm // halo
    nhb = m_pad // halo

    left = lambda i: (0, jnp.maximum(i * r - 1, 0))
    cur = lambda i: (0, i)
    right = lambda i: (0, jnp.minimum((i + 1) * r, nhb - 1))

    in_specs = [
        pl.BlockSpec((cout, halo), left),
        pl.BlockSpec((cout, tm), cur),
        pl.BlockSpec((cout, halo), right),
        pl.BlockSpec((1, halo), left),
        pl.BlockSpec((1, tm), cur),
        pl.BlockSpec((1, halo), right),
        pl.BlockSpec((cout, 2), lambda i: (0, 0)),            # bn1 scale/shift
        pl.BlockSpec((9, cout, cout), lambda i: (0, 0, 0)),   # resident weights
    ]
    out_specs = [pl.BlockSpec((cout, tm), cur),
                 pl.BlockSpec((None, cout, 2), lambda i: (i, 0, 0))]
    out_shape = [jax.ShapeDtypeStruct((cout, m_pad), jnp.float32),
                 jax.ShapeDtypeStruct((grid, cout, 2), jnp.float32)]

    y2, stats = pl.pallas_call(
        functools.partial(_conv2_kernel, taps=taps, cout=cout),
        grid=(grid,),
        in_specs=in_specs,
        out_specs=out_specs,
        out_shape=out_shape,
        compiler_params=_compiler_params(),
    )(y1, y1, y1, mask, mask, mask, ab1, w2)
    return y2, jnp.sum(stats, axis=0)


def _bn_add_relu_call(y2, sc, ab2, absc, *, cout, tm, m_pad):
    big = pl.BlockSpec((cout, tm), lambda i: (0, i))
    small = pl.BlockSpec((cout, 2), lambda i: (0, 0))
    return pl.pallas_call(
        _bn_add_relu_kernel,
        grid=(m_pad // tm,),
        in_specs=[big, big, small, small],
        out_specs=pl.BlockSpec((cout, tm), lambda i: (0, i)),
        out_shape=jax.ShapeDtypeStruct((cout, m_pad), jnp.float32),
        compiler_params=_compiler_params(),
    )(y2, sc, ab2, absc)


# --------------------------------- JAX glue -----------------------------------

def _bn_affine(s, ss, count, gamma, beta):
    """Training-mode BN (biased var) folded into per-channel scale/shift: (C, 2)."""
    mean = s / count
    var = jnp.maximum(ss / count - mean * mean, 0.0)
    scale = gamma * jax.lax.rsqrt(var + EPS)
    shift = beta - mean * scale
    return jnp.stack([scale, shift], axis=1).astype(jnp.float32)


# ------------------------------ module forward --------------------------------

def init_params(key, in_channels, out_channels):
    ks = jax.random.split(key, 9)
    f32 = jnp.float32
    return {
        # conv weights stored HWIO (3,3,Cin,Cout); torch stores OIHW — same tensor, transposed.
        "w1": 0.1 * jax.random.normal(ks[0], (3, 3, in_channels, out_channels), f32),
        "g1": 1.0 + 0.1 * jax.random.normal(ks[1], (out_channels,), f32),
        "b1": 0.1 * jax.random.normal(ks[2], (out_channels,), f32),
        "w2": 0.1 * jax.random.normal(ks[3], (3, 3, out_channels, out_channels), f32),
        "g2": 1.0 + 0.1 * jax.random.normal(ks[4], (out_channels,), f32),
        "b2": 0.1 * jax.random.normal(ks[5], (out_channels,), f32),
        # 1x1 shortcut conv (used because in_channels != expansion*out_channels)
        "wsc": 0.1 * jax.random.normal(ks[6], (in_channels, out_channels), f32),
        "gsc": 1.0 + 0.1 * jax.random.normal(ks[7], (out_channels,), f32),
        "bsc": 0.1 * jax.random.normal(ks[8], (out_channels,), f32),
    }


def residual_block_forward(x_nchw, params, out_channels, stride=1, tile_m=1024):
    # TODO(synk): stride > 1 and eval-mode (running-stats) BN are not implemented
    #             (module default is stride=1, training-mode BN).
    assert stride == 1
    n, cin, h, w = x_nchw.shape
    cout = out_channels
    hp, wp = h + 2, w + 2
    m = n * h * w                       # true BN element count (divisor)
    mprime = n * hp * wp                # padded-layout flat length

    # Halo covers one padded row + one column, lane-aligned.
    halo = _round_up(wp + 1, 128)
    # Largest lane tile <= tile_m that is a multiple of the halo AND keeps >= 2
    # grid steps (megacore / 2-TC sharding + pipelining).
    tm = min(_round_up(tile_m, halo), max(halo, _round_up(_cdiv(mprime, 2), halo)))
    m_pad = _round_up(mprime, tm)

    taps = tuple((kh - 1) * wp + (kw - 1) for kh in range(3) for kw in range(3))
    has_proj = (stride != 1) or (cin != cout)

    # Channel-major, spatially zero-padded, flattened activations: (C, N*Hp*Wp).
    xc = jnp.transpose(x_nchw, (1, 0, 2, 3)).astype(jnp.float32)
    xpad = jnp.pad(xc, ((0, 0), (0, 0), (1, 1), (1, 1)))
    xflat = jnp.pad(xpad.reshape(cin, mprime), ((0, 0), (0, m_pad - mprime)))
    x_bf = xflat.astype(jnp.bfloat16)                       # bf16 halves HBM reads

    # Interior mask: 1 on real output pixels, 0 on the padded ring / lane padding.
    mask = jnp.zeros((n, hp, wp), jnp.float32).at[:, 1:h + 1, 1:w + 1].set(1.0)
    mask = jnp.pad(mask.reshape(1, mprime), ((0, 0), (0, m_pad - mprime)))

    # Tap-major weights: (9, Cout, Cin) so w_ref[t] is one (Cout, Cin) matmul LHS.
    w1 = jnp.transpose(params["w1"], (0, 1, 3, 2)).reshape(9, cout, cin).astype(jnp.bfloat16)
    wsc = params["wsc"].T.astype(jnp.bfloat16) if has_proj else None

    # ---- conv1 (+ fused 1x1 shortcut) + masked BN partial stats -------------
    y1, ysc, st1 = _conv1_call(x_bf, mask, w1, wsc, taps=taps, cout=cout,
                               tm=tm, halo=halo, m_pad=m_pad, has_proj=has_proj)
    ab1 = _bn_affine(st1[:, 0], st1[:, 1], m, params["g1"], params["b1"])
    if has_proj:
        absc = _bn_affine(st1[:, 2], st1[:, 3], m, params["gsc"], params["bsc"])
        sct = ysc
    else:
        absc = jnp.stack([jnp.ones((cout,)), jnp.zeros((cout,))], axis=1).astype(jnp.float32)
        sct = xflat                     # identity shortcut (padded ring never read)

    # ---- conv2 with in-kernel bn1 affine + ReLU + masked BN partial stats ----
    # conv2's activations never touch HBM, so they stay f32 (see header TODO).
    w2 = jnp.transpose(params["w2"], (0, 1, 3, 2)).reshape(9, cout, cout).astype(jnp.float32)
    y2, st2 = _conv2_call(y1, mask, ab1, w2, taps=taps, cout=cout,
                          tm=tm, halo=halo, m_pad=m_pad)
    ab2 = _bn_affine(st2[:, 0], st2[:, 1], m, params["g2"], params["b2"])

    # ---- bn2 + shortcut-BN + residual add + relu (fused) ---------------------
    out_flat = _bn_add_relu_call(y2, sct, ab2, absc, cout=cout, tm=tm, m_pad=m_pad)

    out = out_flat[:, :mprime].reshape(cout, n, hp, wp)[:, :, 1:h + 1, 1:w + 1]
    return jnp.transpose(out, (1, 0, 2, 3))                 # -> NCHW


# ---------------------------- pure-JAX reference ------------------------------

def reference_forward(x_nchw, params, out_channels):
    """Mirrors the kernel's numerics: bf16 operands for the HBM-fed convs
    (conv1 / 1x1 shortcut), f32 for conv2, all BN math in f32."""
    x = jnp.transpose(x_nchw, (0, 2, 3, 1)).astype(jnp.float32)

    def conv(inp, wgt, pad, low_precision):
        dt = jnp.bfloat16 if low_precision else jnp.float32
        return jax.lax.conv_general_dilated(
            inp.astype(dt), wgt.astype(dt), (1, 1), pad,
            dimension_numbers=("NHWC", "HWIO", "NHWC"),
            preferred_element_type=jnp.float32)

    def bn(y, gamma, beta):
        mean = jnp.mean(y, axis=(0, 1, 2), keepdims=True)
        var = jnp.mean((y - mean) ** 2, axis=(0, 1, 2), keepdims=True)
        return (y - mean) * jax.lax.rsqrt(var + EPS) * gamma + beta

    cin = x.shape[-1]
    h1 = jax.nn.relu(bn(conv(x, params["w1"], [(1, 1), (1, 1)], True),
                        params["g1"], params["b1"]))
    h2 = bn(conv(h1, params["w2"], [(1, 1), (1, 1)], False),
            params["g2"], params["b2"])
    if cin != out_channels:
        wsc = params["wsc"].reshape(1, 1, cin, out_channels)
        sc = bn(conv(x, wsc, [(0, 0), (0, 0)], True), params["gsc"], params["bsc"])
    else:
        sc = x
    out = jax.nn.relu(h2 + sc)
    return jnp.transpose(out, (0, 3, 1, 2))


if __name__ == "__main__":
    key = jax.random.PRNGKey(0)
    kx, kp = jax.random.split(key)

    N, Cin, H, W = 2, 4, 16, 16
    Cout = 8  # != Cin -> exercises the fused 1x1-conv + BN shortcut branch

    x = jax.random.normal(kx, (N, Cin, H, W), jnp.float32)
    params = init_params(kp, Cin, Cout)

    fwd = jax.jit(functools.partial(residual_block_forward,
                                    out_channels=Cout, stride=1, tile_m=1024))
    out = jax.block_until_ready(fwd(x, params))
    assert out.shape == (N, Cout, H, W), out.shape

    ref = reference_forward(x, params, Cout)
    err = float(jnp.max(jnp.abs(out - ref)))
    assert err < 2e-3, f"max abs err {err}"

    print("KERNEL_OK")
</pallas_src>

<mosaic_0001>
module attributes {stable_mosaic.version = 11 : i64} {
  func.func @_conv1_kernel(%arg0: i32, %arg1: memref<4x128xbf16, #tpu.memory_space<vmem>>, %arg2: memref<4x384xbf16, #tpu.memory_space<vmem>>, %arg3: memref<4x128xbf16, #tpu.memory_space<vmem>>, %arg4: memref<1x384xf32, #tpu.memory_space<vmem>>, %arg5: memref<9x8x4xbf16, #tpu.memory_space<vmem>>, %arg6: memref<8x4xbf16, #tpu.memory_space<vmem>>, %arg7: memref<8x384xf32, #tpu.memory_space<vmem>>, %arg8: memref<8x384xf32, #tpu.memory_space<vmem>>, %arg9: memref<1x8x4xf32, #tpu.memory_space<vmem>>) attributes {dimension_semantics = [#tpu.dimension_semantics<parallel>], iteration_bounds = array<i64: 2>, scalar_prefetch = 0 : i64, scratch_operands = 0 : i64, tpu.core_type = #tpu.core_type<tc>, window_params = [{transform_indices = @transform_0, window_bounds = array<i64: 4, 128>}, {transform_indices = @transform_1, window_bounds = array<i64: 4, 384>}, {transform_indices = @transform_2, window_bounds = array<i64: 4, 128>}, {transform_indices = @transform_3, window_bounds = array<i64: 1, 384>}, {pipeline_mode = #tpu.pipeline_mode<synchronous>, transform_indices = @transform_4, window_bounds = array<i64: 9, 8, 4>}, {pipeline_mode = #tpu.pipeline_mode<synchronous>, transform_indices = @transform_5, window_bounds = array<i64: 8, 4>}, {transform_indices = @transform_6, window_bounds = array<i64: 8, 384>}, {transform_indices = @transform_7, window_bounds = array<i64: 8, 384>}, {transform_indices = @transform_8, window_bounds = array<i64: 1, 8, 4>}]} {
    %c0 = arith.constant 0 : index
    %c0_0 = arith.constant 0 : index
    %0 = vector.load %arg2[%c0, %c0_0] : memref<4x384xbf16, #tpu.memory_space<vmem>>, vector<4x384xbf16>
    %c0_1 = arith.constant 0 : index
    %c0_2 = arith.constant 0 : index
    %1 = vector.load %arg1[%c0_1, %c0_2] : memref<4x128xbf16, #tpu.memory_space<vmem>>, vector<4x128xbf16>
    %c0_3 = arith.constant 0 : index
    %c0_4 = arith.constant 0 : index
    %2 = vector.load %arg3[%c0_3, %c0_4] : memref<4x128xbf16, #tpu.memory_space<vmem>>, vector<4x128xbf16>
    %3 = tpu.concatenate %1, %0, %2 in 1 : vector<4x128xbf16>, vector<4x384xbf16>, vector<4x128xbf16> -> vector<4x640xbf16>
    %cst = arith.constant 0.000000e+00 : f32
    %4 = vector.broadcast %cst : f32 to vector<8x384xf32>
    %5 = vector.extract_strided_slice %3 {offsets = [0, 109], sizes = [4, 384], strides = [1, 1]} : vector<4x640xbf16> to vector<4x384xbf16>
    %c0_5 = arith.constant 0 : index
    %c0_6 = arith.constant 0 : index
    %c0_7 = arith.constant 0 : index
    %6 = vector.load %arg5[%c0_5, %c0_6, %c0_7] : memref<9x8x4xbf16, #tpu.memory_space<vmem>>, vector<1x8x4xbf16>
    %7 = vector.shape_cast %6 : vector<1x8x4xbf16> to vector<8x4xbf16>
    %cst_8 = arith.constant dense<0.000000e+00> : vector<8x384xf32>
    %8 = tpu.matmul %7, %5, %cst_8 {dimension_numbers = #tpu.dot_dimension_numbers<[1], [0], [0], [1], [0, 0, 1, 1], [], []>} : vector<8x4xbf16>, vector<4x384xbf16>, vector<8x384xf32> -> vector<8x384xf32>
    %9 = arith.addf %4, %8 : vector<8x384xf32>
    %10 = vector.extract_strided_slice %3 {offsets = [0, 110], sizes = [4, 384], strides = [1, 1]} : vector<4x640xbf16> to vector<4x384xbf16>
    %c1 = arith.constant 1 : index
    %c0_9 = arith.constant 0 : index
    %c0_10 = arith.constant 0 : index
    %11 = vector.load %arg5[%c1, %c0_9, %c0_10] : memref<9x8x4xbf16, #tpu.memory_space<vmem>>, vector<1x8x4xbf16>
    %12 = vector.shape_cast %11 : vector<1x8x4xbf16> to vector<8x4xbf16>
    %cst_11 = arith.constant dense<0.000000e+00> : vector<8x384xf32>
    %13 = tpu.matmul %12, %10, %cst_11 {dimension_numbers = #tpu.dot_dimension_numbers<[1], [0], [0], [1], [0, 0, 1, 1], [], []>} : vector<8x4xbf16>, vector<4x384xbf16>, vector<8x384xf32> -> vector<8x384xf32>
    %14 = arith.addf %9, %13 : vector<8x384xf32>
    %15 = vector.extract_strided_slice %3 {offsets = [0, 111], sizes = [4, 384], strides = [1, 1]} : vector<4x640xbf16> to vector<4x384xbf16>
    %c2 = arith.constant 2 : index
    %c0_12 = arith.constant 0 : index
    %c0_13 = arith.constant 0 : index
    %16 = vector.load %arg5[%c2, %c0_12, %c0_13] : memref<9x8x4xbf16, #tpu.memory_space<vmem>>, vector<1x8x4xbf16>
    %17 = vector.shape_cast %16 : vector<1x8x4xbf16> to vector<8x4xbf16>
    %cst_14 = arith.constant dense<0.000000e+00> : vector<8x384xf32>
    %18 = tpu.matmul %17, %15, %cst_14 {dimension_numbers = #tpu.dot_dimension_numbers<[1], [0], [0], [1], [0, 0, 1, 1], [], []>} : vector<8x4xbf16>, vector<4x384xbf16>, vector<8x384xf32> -> vector<8x384xf32>
    %19 = arith.addf %14, %18 : vector<8x384xf32>
    %20 = vector.extract_strided_slice %3 {offsets = [0, 127], sizes = [4, 384], strides = [1, 1]} : vector<4x640xbf16> to vector<4x384xbf16>
    %c3 = arith.constant 3 : index
    %c0_15 = arith.constant 0 : index
    %c0_16 = arith.constant 0 : index
    %21 = vector.load %arg5[%c3, %c0_15, %c0_16] : memref<9x8x4xbf16, #tpu.memory_space<vmem>>, vector<1x8x4xbf16>
    %22 = vector.shape_cast %21 : vector<1x8x4xbf16> to vector<8x4xbf16>
    %cst_17 = arith.constant dense<0.000000e+00> : vector<8x384xf32>
    %23 = tpu.matmul %22, %20, %cst_17 {dimension_numbers = #tpu.dot_dimension_numbers<[1], [0], [0], [1], [0, 0, 1, 1], [], []>} : vector<8x4xbf16>, vector<4x384xbf16>, vector<8x384xf32> -> vector<8x384xf32>
    %24 = arith.addf %19, %23 : vector<8x384xf32>
    %25 = vector.extract_strided_slice %3 {offsets = [0, 128], sizes = [4, 384], strides = [1, 1]} : vector<4x640xbf16> to vector<4x384xbf16>
    %c4 = arith.constant 4 : index
    %c0_18 = arith.constant 0 : index
    %c0_19 = arith.constant 0 : index
    %26 = vector.load %arg5[%c4, %c0_18, %c0_19] : memref<9x8x4xbf16, #tpu.memory_space<vmem>>, vector<1x8x4xbf16>
    %27 = vector.shape_cast %26 : vector<1x8x4xbf16> to vector<8x4xbf16>
    %cst_20 = arith.constant dense<0.000000e+00> : vector<8x384xf32>
    %28 = tpu.matmul %27, %25, %cst_20 {dimension_numbers = #tpu.dot_dimension_numbers<[1], [0], [0], [1], [0, 0, 1, 1], [], []>} : vector<8x4xbf16>, vector<4x384xbf16>, vector<8x384xf32> -> vector<8x384xf32>
    %29 = arith.addf %24, %28 : vector<8x384xf32>
    %30 = vector.extract_strided_slice %3 {offsets = [0, 129], sizes = [4, 384], strides = [1, 1]} : vector<4x640xbf16> to vector<4x384xbf16>
    %c5 = arith.constant 5 : index
    %c0_21 = arith.constant 0 : index
    %c0_22 = arith.constant 0 : index
    %31 = vector.load %arg5[%c5, %c0_21, %c0_22] : memref<9x8x4xbf16, #tpu.memory_space<vmem>>, vector<1x8x4xbf16>
    %32 = vector.shape_cast %31 : vector<1x8x4xbf16> to vector<8x4xbf16>
    %cst_23 = arith.constant dense<0.000000e+00> : vector<8x384xf32>
    %33 = tpu.matmul %32, %30, %cst_23 {dimension_numbers = #tpu.dot_dimension_numbers<[1], [0], [0], [1], [0, 0, 1, 1], [], []>} : vector<8x4xbf16>, vector<4x384xbf16>, vector<8x384xf32> -> vector<8x384xf32>
    %34 = arith.addf %29, %33 : vector<8x384xf32>
    %35 = vector.extract_strided_slice %3 {offsets = [0, 145], sizes = [4, 384], strides = [1, 1]} : vector<4x640xbf16> to vector<4x384xbf16>
    %c6 = arith.constant 6 : index
    %c0_24 = arith.constant 0 : index
    %c0_25 = arith.constant 0 : index
    %36 = vector.load %arg5[%c6, %c0_24, %c0_25] : memref<9x8x4xbf16, #tpu.memory_space<vmem>>, vector<1x8x4xbf16>
    %37 = vector.shape_cast %36 : vector<1x8x4xbf16> to vector<8x4xbf16>
    %cst_26 = arith.constant dense<0.000000e+00> : vector<8x384xf32>
    %38 = tpu.matmul %37, %35, %cst_26 {dimension_numbers = #tpu.dot_dimension_numbers<[1], [0], [0], [1], [0, 0, 1, 1], [], []>} : vector<8x4xbf16>, vector<4x384xbf16>, vector<8x384xf32> -> vector<8x384xf32>
    %39 = arith.addf %34, %38 : vector<8x384xf32>
    %40 = vector.extract_strided_slice %3 {offsets = [0, 146], sizes = [4, 384], strides = [1, 1]} : vector<4x640xbf16> to vector<4x384xbf16>
    %c7 = arith.constant 7 : index
    %c0_27 = arith.constant 0 : index
    %c0_28 = arith.constant 0 : index
    %41 = vector.load %arg5[%c7, %c0_27, %c0_28] : memref<9x8x4xbf16, #tpu.memory_space<vmem>>, vector<1x8x4xbf16>
    %42 = vector.shape_cast %41 : vector<1x8x4xbf16> to vector<8x4xbf16>
    %cst_29 = arith.constant dense<0.000000e+00> : vector<8x384xf32>
    %43 = tpu.matmul %42, %40, %cst_29 {dimension_numbers = #tpu.dot_dimension_numbers<[1], [0], [0], [1], [0, 0, 1, 1], [], []>} : vector<8x4xbf16>, vector<4x384xbf16>, vector<8x384xf32> -> vector<8x384xf32>
    %44 = arith.addf %39, %43 : vector<8x384xf32>
    %45 = vector.extract_strided_slice %3 {offsets = [0, 147], sizes = [4, 384], strides = [1, 1]} : vector<4x640xbf16> to vector<4x384xbf16>
    %c8 = arith.constant 8 : index
    %c0_30 = arith.constant 0 : index
    %c0_31 = arith.constant 0 : index
    %46 = vector.load %arg5[%c8, %c0_30, %c0_31] : memref<9x8x4xbf16, #tpu.memory_space<vmem>>, vector<1x8x4xbf16>
    %47 = vector.shape_cast %46 : vector<1x8x4xbf16> to vector<8x4xbf16>
    %cst_32 = arith.constant dense<0.000000e+00> : vector<8x384xf32>
    %48 = tpu.matmul %47, %45, %cst_32 {dimension_numbers = #tpu.dot_dimension_numbers<[1], [0], [0], [1], [0, 0, 1, 1], [], []>} : vector<8x4xbf16>, vector<4x384xbf16>, vector<8x384xf32> -> vector<8x384xf32>
    %49 = arith.addf %44, %48 : vector<8x384xf32>
    %c0_33 = arith.constant 0 : index
    %c0_34 = arith.constant 0 : index
    %50 = vector.load %arg7[%c0_33, %c0_34] : memref<8x384xf32, #tpu.memory_space<vmem>>, vector<8x384xf32>
    tpu.vector_store %arg7[%c0_33, %c0_34], %49 {strides = array<i32>} : memref<8x384xf32, #tpu.memory_space<vmem>>, vector<8x384xf32>,
    %c0_35 = arith.constant 0 : index
    %c0_36 = arith.constant 0 : index
    %51 = vector.load %arg4[%c0_35, %c0_36] : memref<1x384xf32, #tpu.memory_space<vmem>>, vector<1x384xf32>
    %52 = vector.broadcast %51 : vector<1x384xf32> to vector<8x384xf32>
    %53 = arith.mulf %49, %52 : vector<8x384xf32>
    %cst_37 = arith.constant dense<0.000000e+00> : vector<8xf32>
    %54 = vector.multi_reduction <add>, %53, %cst_37 [1] : vector<8x384xf32> to vector<8xf32>
    %55 = vector.shape_cast %54 : vector<8xf32> to vector<8x1xf32>
    %56 = arith.mulf %49, %53 : vector<8x384xf32>
    %cst_38 = arith.constant dense<0.000000e+00> : vector<8xf32>
    %57 = vector.multi_reduction <add>, %56, %cst_38 [1] : vector<8x384xf32> to vector<8xf32>
    %58 = vector.shape_cast %57 : vector<8xf32> to vector<8x1xf32>
    %c0_39 = arith.constant 0 : index
    %c0_40 = arith.constant 0 : index
    %59 = vector.load %arg6[%c0_39, %c0_40] : memref<8x4xbf16, #tpu.memory_space<vmem>>, vector<8x4xbf16>
    %cst_41 = arith.constant dense<0.000000e+00> : vector<8x384xf32>
    %60 = tpu.matmul %59, %0, %cst_41 {dimension_numbers = #tpu.dot_dimension_numbers<[1], [0], [0], [1], [0, 0, 1, 1], [], []>} : vector<8x4xbf16>, vector<4x384xbf16>, vector<8x384xf32> -> vector<8x384xf32>
    %c0_42 = arith.constant 0 : index
    %c0_43 = arith.constant 0 : index
    %61 = vector.load %arg8[%c0_42, %c0_43] : memref<8x384xf32, #tpu.memory_space<vmem>>, vector<8x384xf32>
    tpu.vector_store %arg8[%c0_42, %c0_43], %60 {strides = array<i32>} : memref<8x384xf32, #tpu.memory_space<vmem>>, vector<8x384xf32>,
    %62 = vector.broadcast %51 : vector<1x384xf32> to vector<8x384xf32>
    %63 = arith.mulf %60, %62 : vector<8x384xf32>
    %cst_44 = arith.constant dense<0.000000e+00> : vector<8xf32>
    %64 = vector.multi_reduction <add>, %63, %cst_44 [1] : vector<8x384xf32> to vector<8xf32>
    %65 = vector.shape_cast %64 : vector<8xf32> to vector<8x1xf32>
    %66 = arith.mulf %60, %63 : vector<8x384xf32>
    %cst_45 = arith.constant dense<0.000000e+00> : vector<8xf32>
    %67 = vector.multi_reduction <add>, %66, %cst_45 [1] : vector<8x384xf32> to vector<8xf32>
    %68 = vector.shape_cast %67 : vector<8xf32> to vector<8x1xf32>
    %69 = tpu.concatenate %55, %58, %65, %68 in 1 : vector<8x1xf32>, vector<8x1xf32>, vector<8x1xf32>, vector<8x1xf32> -> vector<8x4xf32>
    %c0_46 = arith.constant 0 : index
    %c0_47 = arith.constant 0 : index
    %c0_48 = arith.constant 0 : index
    %70 = vector.load %arg9[%c0_46, %c0_47, %c0_48] : memref<1x8x4xf32, #tpu.memory_space<vmem>>, vector<1x8x4xf32>
    %71 = vector.shape_cast %70 : vector<1x8x4xf32> to vector<8x4xf32>
    %72 = vector.shape_cast %69 : vector<8x4xf32> to vector<1x8x4xf32>
    tpu.vector_store %arg9[%c0_46, %c0_47, %c0_48], %72 {strides = array<i32>} : memref<1x8x4xf32, #tpu.memory_space<vmem>>, vector<1x8x4xf32>,
    return
  }
  func.func @transform_0(%arg0: i32) -> (i32, i32) {
    %c3_i32 = arith.constant 3 : i32
    %0 = arith.muli %arg0, %c3_i32 : i32
    %c1_i32 = arith.constant 1 : i32
    %1 = arith.subi %0, %c1_i32 : i32
    %c0_i32 = arith.constant 0 : i32
    %2 = arith.maxsi %1, %c0_i32 : i32
    %c0_i32_0 = arith.constant 0 : i32
    %c0_i32_1 = arith.constant 0 : i32
    return %c0_i32_0, %2 : i32, i32
  }
  func.func @transform_1(%arg0: i32) -> (i32, i32) {
    %c0_i32 = arith.constant 0 : i32
    %c0_i32_0 = arith.constant 0 : i32
    return %c0_i32, %arg0 : i32, i32
  }
  func.func @transform_2(%arg0: i32) -> (i32, i32) {
    %c1_i32 = arith.constant 1 : i32
    %0 = arith.addi %arg0, %c1_i32 : i32
    %c3_i32 = arith.constant 3 : i32
    %1 = arith.muli %0, %c3_i32 : i32
    %c5_i32 = arith.constant 5 : i32
    %2 = arith.minsi %1, %c5_i32 : i32
    %c0_i32 = arith.constant 0 : i32
    %c0_i32_0 = arith.constant 0 : i32
    return %c0_i32, %2 : i32, i32
  }
  func.func @transform_3(%arg0: i32) -> (i32, i32) {
    %c0_i32 = arith.constant 0 : i32
    %c0_i32_0 = arith.constant 0 : i32
    return %c0_i32, %arg0 : i32, i32
  }
  func.func @transform_4(%arg0: i32) -> (i32, i32, i32) {
    %c0_i32 = arith.constant 0 : i32
    %c0_i32_0 = arith.constant 0 : i32
    %c0_i32_1 = arith.constant 0 : i32
    %c0_i32_2 = arith.constant 0 : i32
    return %c0_i32, %c0_i32_0, %c0_i32_1 : i32, i32, i32
  }
  func.func @transform_5(%arg0: i32) -> (i32, i32) {
    %c0_i32 = arith.constant 0 : i32
    %c0_i32_0 = arith.constant 0 : i32
    %c0_i32_1 = arith.constant 0 : i32
    return %c0_i32, %c0_i32_0 : i32, i32
  }
  func.func @transform_6(%arg0: i32) -> (i32, i32) {
    %c0_i32 = arith.constant 0 : i32
    %c0_i32_0 = arith.constant 0 : i32
    return %c0_i32, %arg0 : i32, i32
  }
  func.func @transform_7(%arg0: i32) -> (i32, i32) {
    %c0_i32 = arith.constant 0 : i32
    %c0_i32_0 = arith.constant 0 : i32
    return %c0_i32, %arg0 : i32, i32
  }
  func.func @transform_8(%arg0: i32) -> (i32, i32, i32) {
    %c0_i32 = arith.constant 0 : i32
    %c0_i32_0 = arith.constant 0 : i32
    %c0_i32_1 = arith.constant 0 : i32
    return %arg0, %c0_i32, %c0_i32_0 : i32, i32, i32
  }
}

module attributes {stable_mosaic.version = 11 : i64} {
  func.func @_bn_add_relu_kernel(%arg0: i32, %arg1: memref<8x384xf32, #tpu.memory_space<vmem>>, %arg2: memref<8x384xf32, #tpu.memory_space<vmem>>, %arg3: memref<8x2xf32, #tpu.memory_space<vmem>>, %arg4: memref<8x2xf32, #tpu.memory_space<vmem>>, %arg5: memref<8x384xf32, #tpu.memory_space<vmem>>) attributes {dimension_semantics = [#tpu.dimension_semantics<parallel>], iteration_bounds = array<i64: 2>, scalar_prefetch = 0 : i64, scratch_operands = 0 : i64, tpu.core_type = #tpu.core_type<tc>, window_params = [{transform_indices = @transform_0, window_bounds = array<i64: 8, 384>}, {transform_indices = @transform_1, window_bounds = array<i64: 8, 384>}, {pipeline_mode = #tpu.pipeline_mode<synchronous>, transform_indices = @transform_2, window_bounds = array<i64: 8, 2>}, {pipeline_mode = #tpu.pipeline_mode<synchronous>, transform_indices = @transform_3, window_bounds = array<i64: 8, 2>}, {transform_indices = @transform_4, window_bounds = array<i64: 8, 384>}]} {
    %c0 = arith.constant 0 : index
    %c0_0 = arith.constant 0 : index
    %0 = vector.load %arg1[%c0, %c0_0] : memref<8x384xf32, #tpu.memory_space<vmem>>, vector<8x384xf32>
    %c0_1 = arith.constant 0 : index
    %c0_2 = arith.constant 0 : index
    %1 = vector.load %arg3[%c0_1, %c0_2] : memref<8x2xf32, #tpu.memory_space<vmem>>, vector<8x1xf32>
    %2 = vector.broadcast %1 : vector<8x1xf32> to vector<8x384xf32>
    %3 = arith.mulf %0, %2 : vector<8x384xf32>
    %c0_3 = arith.constant 0 : index
    %c1 = arith.constant 1 : index
    %4 = vector.load %arg3[%c0_3, %c1] : memref<8x2xf32, #tpu.memory_space<vmem>>, vector<8x1xf32>
    %5 = vector.broadcast %4 : vector<8x1xf32> to vector<8x384xf32>
    %6 = arith.addf %3, %5 : vector<8x384xf32>
    %c0_4 = arith.constant 0 : index
    %c0_5 = arith.constant 0 : index
    %7 = vector.load %arg2[%c0_4, %c0_5] : memref<8x384xf32, #tpu.memory_space<vmem>>, vector<8x384xf32>
    %c0_6 = arith.constant 0 : index
    %c0_7 = arith.constant 0 : index
    %8 = vector.load %arg4[%c0_6, %c0_7] : memref<8x2xf32, #tpu.memory_space<vmem>>, vector<8x1xf32>
    %9 = vector.broadcast %8 : vector<8x1xf32> to vector<8x384xf32>
    %10 = arith.mulf %7, %9 : vector<8x384xf32>
    %c0_8 = arith.constant 0 : index
    %c1_9 = arith.constant 1 : index
    %11 = vector.load %arg4[%c0_8, %c1_9] : memref<8x2xf32, #tpu.memory_space<vmem>>, vector<8x1xf32>
    %12 = vector.broadcast %11 : vector<8x1xf32> to vector<8x384xf32>
    %13 = arith.addf %10, %12 : vector<8x384xf32>
    %14 = arith.addf %6, %13 : vector<8x384xf32>
    %cst = arith.constant 0.000000e+00 : f32
    %15 = vector.broadcast %cst : f32 to vector<8x384xf32>
    %16 = arith.maximumf %14, %15 : vector<8x384xf32>
    %c0_10 = arith.constant 0 : index
    %c0_11 = arith.constant 0 : index
    %17 = vector.load %arg5[%c0_10, %c0_11] : memref<8x384xf32, #tpu.memory_space<vmem>>, vector<8x384xf32>
    tpu.vector_store %arg5[%c0_10, %c0_11], %16 {strides = array<i32>} : memref<8x384xf32, #tpu.memory_space<vmem>>, vector<8x384xf32>,
    return
  }
  func.func @transform_0(%arg0: i32) -> (i32, i32) {
    %c0_i32 = arith.constant 0 : i32
    %c0_i32_0 = arith.constant 0 : i32
    return %c0_i32, %arg0 : i32, i32
  }
  func.func @transform_1(%arg0: i32) -> (i32, i32) {
    %c0_i32 = arith.constant 0 : i32
    %c0_i32_0 = arith.constant 0 : i32
    return %c0_i32, %arg0 : i32, i32
  }
  func.func @transform_2(%arg0: i32) -> (i32, i32) {
    %c0_i32 = arith.constant 0 : i32
    %c0_i32_0 = arith.constant 0 : i32
    %c0_i32_1 = arith.constant 0 : i32
    return %c0_i32, %c0_i32_0 : i32, i32
  }
  func.func @transform_3(%arg0: i32) -> (i32, i32) {
    %c0_i32 = arith.constant 0 : i32
    %c0_i32_0 = arith.constant 0 : i32
    %c0_i32_1 = arith.constant 0 : i32
    return %c0_i32, %c0_i32_0 : i32, i32
  }
  func.func @transform_4(%arg0: i32) -> (i32, i32) {
    %c0_i32 = arith.constant 0 : i32
    %c0_i32_0 = arith.constant 0 : i32
    return %c0_i32, %arg0 : i32, i32
  }
}

module attributes {stable_mosaic.version = 11 : i64} {
  func.func @_conv2_kernel(%arg0: i32, %arg1: memref<8x128xf32, #tpu.memory_space<vmem>>, %arg2: memref<8x384xf32, #tpu.memory_space<vmem>>, %arg3: memref<8x128xf32, #tpu.memory_space<vmem>>, %arg4: memref<1x128xf32, #tpu.memory_space<vmem>>, %arg5: memref<1x384xf32, #tpu.memory_space<vmem>>, %arg6: memref<1x128xf32, #tpu.memory_space<vmem>>, %arg7: memref<8x2xf32, #tpu.memory_space<vmem>>, %arg8: memref<9x8x8xf32, #tpu.memory_space<vmem>>, %arg9: memref<8x384xf32, #tpu.memory_space<vmem>>, %arg10: memref<1x8x2xf32, #tpu.memory_space<vmem>>) attributes {dimension_semantics = [#tpu.dimension_semantics<parallel>], iteration_bounds = array<i64: 2>, scalar_prefetch = 0 : i64, scratch_operands = 0 : i64, tpu.core_type = #tpu.core_type<tc>, window_params = [{transform_indices = @transform_0, window_bounds = array<i64: 8, 128>}, {transform_indices = @transform_1, window_bounds = array<i64: 8, 384>}, {transform_indices = @transform_2, window_bounds = array<i64: 8, 128>}, {transform_indices = @transform_3, window_bounds = array<i64: 1, 128>}, {transform_indices = @transform_4, window_bounds = array<i64: 1, 384>}, {transform_indices = @transform_5, window_bounds = array<i64: 1, 128>}, {pipeline_mode = #tpu.pipeline_mode<synchronous>, transform_indices = @transform_6, window_bounds = array<i64: 8, 2>}, {pipeline_mode = #tpu.pipeline_mode<synchronous>, transform_indices = @transform_7, window_bounds = array<i64: 9, 8, 8>}, {transform_indices = @transform_8, window_bounds = array<i64: 8, 384>}, {transform_indices = @transform_9, window_bounds = array<i64: 1, 8, 2>}]} {
    %c0 = arith.constant 0 : index
    %c0_0 = arith.constant 0 : index
    %0 = vector.load %arg7[%c0, %c0_0] : memref<8x2xf32, #tpu.memory_space<vmem>>, vector<8x1xf32>
    %c0_1 = arith.constant 0 : index
    %c1 = arith.constant 1 : index
    %1 = vector.load %arg7[%c0_1, %c1] : memref<8x2xf32, #tpu.memory_space<vmem>>, vector<8x1xf32>
    %c0_2 = arith.constant 0 : index
    %c0_3 = arith.constant 0 : index
    %2 = vector.load %arg2[%c0_2, %c0_3] : memref<8x384xf32, #tpu.memory_space<vmem>>, vector<8x384xf32>
    %3 = vector.broadcast %0 : vector<8x1xf32> to vector<8x384xf32>
    %4 = arith.mulf %2, %3 : vector<8x384xf32>
    %5 = vector.broadcast %1 : vector<8x1xf32> to vector<8x384xf32>
    %6 = arith.addf %4, %5 : vector<8x384xf32>
    %cst = arith.constant 0.000000e+00 : f32
    %7 = vector.broadcast %cst : f32 to vector<8x384xf32>
    %8 = arith.maximumf %6, %7 : vector<8x384xf32>
    %c0_4 = arith.constant 0 : index
    %c0_5 = arith.constant 0 : index
    %9 = vector.load %arg5[%c0_4, %c0_5] : memref<1x384xf32, #tpu.memory_space<vmem>>, vector<1x384xf32>
    %10 = vector.broadcast %9 : vector<1x384xf32> to vector<8x384xf32>
    %11 = arith.mulf %8, %10 : vector<8x384xf32>
    %c0_6 = arith.constant 0 : index
    %c0_7 = arith.constant 0 : index
    %12 = vector.load %arg1[%c0_6, %c0_7] : memref<8x128xf32, #tpu.memory_space<vmem>>, vector<8x128xf32>
    %13 = vector.broadcast %0 : vector<8x1xf32> to vector<8x128xf32>
    %14 = arith.mulf %12, %13 : vector<8x128xf32>
    %15 = vector.broadcast %1 : vector<8x1xf32> to vector<8x128xf32>
    %16 = arith.addf %14, %15 : vector<8x128xf32>
    %cst_8 = arith.constant 0.000000e+00 : f32
    %17 = vector.broadcast %cst_8 : f32 to vector<8x128xf32>
    %18 = arith.maximumf %16, %17 : vector<8x128xf32>
    %c0_9 = arith.constant 0 : index
    %c0_10 = arith.constant 0 : index
    %19 = vector.load %arg4[%c0_9, %c0_10] : memref<1x128xf32, #tpu.memory_space<vmem>>, vector<1x128xf32>
    %20 = vector.broadcast %19 : vector<1x128xf32> to vector<8x128xf32>
    %21 = arith.mulf %18, %20 : vector<8x128xf32>
    %c0_11 = arith.constant 0 : index
    %c0_12 = arith.constant 0 : index
    %22 = vector.load %arg3[%c0_11, %c0_12] : memref<8x128xf32, #tpu.memory_space<vmem>>, vector<8x128xf32>
    %23 = vector.broadcast %0 : vector<8x1xf32> to vector<8x128xf32>
    %24 = arith.mulf %22, %23 : vector<8x128xf32>
    %25 = vector.broadcast %1 : vector<8x1xf32> to vector<8x128xf32>
    %26 = arith.addf %24, %25 : vector<8x128xf32>
    %cst_13 = arith.constant 0.000000e+00 : f32
    %27 = vector.broadcast %cst_13 : f32 to vector<8x128xf32>
    %28 = arith.maximumf %26, %27 : vector<8x128xf32>
    %c0_14 = arith.constant 0 : index
    %c0_15 = arith.constant 0 : index
    %29 = vector.load %arg6[%c0_14, %c0_15] : memref<1x128xf32, #tpu.memory_space<vmem>>, vector<1x128xf32>
    %30 = vector.broadcast %29 : vector<1x128xf32> to vector<8x128xf32>
    %31 = arith.mulf %28, %30 : vector<8x128xf32>
    %32 = tpu.concatenate %21, %11, %31 in 1 : vector<8x128xf32>, vector<8x384xf32>, vector<8x128xf32> -> vector<8x640xf32>
    %cst_16 = arith.constant 0.000000e+00 : f32
    %33 = vector.broadcast %cst_16 : f32 to vector<8x384xf32>
    %34 = vector.extract_strided_slice %32 {offsets = [0, 109], sizes = [8, 384], strides = [1, 1]} : vector<8x640xf32> to vector<8x384xf32>
    %c0_17 = arith.constant 0 : index
    %c0_18 = arith.constant 0 : index
    %c0_19 = arith.constant 0 : index
    %35 = vector.load %arg8[%c0_17, %c0_18, %c0_19] : memref<9x8x8xf32, #tpu.memory_space<vmem>>, vector<1x8x8xf32>
    %36 = vector.shape_cast %35 : vector<1x8x8xf32> to vector<8x8xf32>
    %cst_20 = arith.constant dense<0.000000e+00> : vector<8x384xf32>
    %37 = tpu.matmul %36, %34, %cst_20 {dimension_numbers = #tpu.dot_dimension_numbers<[1], [0], [0], [1], [0, 0, 1, 1], [], []>} : vector<8x8xf32>, vector<8x384xf32>, vector<8x384xf32> -> vector<8x384xf32>
    %38 = arith.addf %33, %37 : vector<8x384xf32>
    %39 = vector.extract_strided_slice %32 {offsets = [0, 110], sizes = [8, 384], strides = [1, 1]} : vector<8x640xf32> to vector<8x384xf32>
    %c1_21 = arith.constant 1 : index
    %c0_22 = arith.constant 0 : index
    %c0_23 = arith.constant 0 : index
    %40 = vector.load %arg8[%c1_21, %c0_22, %c0_23] : memref<9x8x8xf32, #tpu.memory_space<vmem>>, vector<1x8x8xf32>
    %41 = vector.shape_cast %40 : vector<1x8x8xf32> to vector<8x8xf32>
    %cst_24 = arith.constant dense<0.000000e+00> : vector<8x384xf32>
    %42 = tpu.matmul %41, %39, %cst_24 {dimension_numbers = #tpu.dot_dimension_numbers<[1], [0], [0], [1], [0, 0, 1, 1], [], []>} : vector<8x8xf32>, vector<8x384xf32>, vector<8x384xf32> -> vector<8x384xf32>
    %43 = arith.addf %38, %42 : vector<8x384xf32>
    %44 = vector.extract_strided_slice %32 {offsets = [0, 111], sizes = [8, 384], strides = [1, 1]} : vector<8x640xf32> to vector<8x384xf32>
    %c2 = arith.constant 2 : index
    %c0_25 = arith.constant 0 : index
    %c0_26 = arith.constant 0 : index
    %45 = vector.load %arg8[%c2, %c0_25, %c0_26] : memref<9x8x8xf32, #tpu.memory_space<vmem>>, vector<1x8x8xf32>
    %46 = vector.shape_cast %45 : vector<1x8x8xf32> to vector<8x8xf32>
    %cst_27 = arith.constant dense<0.000000e+00> : vector<8x384xf32>
    %47 = tpu.matmul %46, %44, %cst_27 {dimension_numbers = #tpu.dot_dimension_numbers<[1], [0], [0], [1], [0, 0, 1, 1], [], []>} : vector<8x8xf32>, vector<8x384xf32>, vector<8x384xf32> -> vector<8x384xf32>
    %48 = arith.addf %43, %47 : vector<8x384xf32>
    %49 = vector.extract_strided_slice %32 {offsets = [0, 127], sizes = [8, 384], strides = [1, 1]} : vector<8x640xf32> to vector<8x384xf32>
    %c3 = arith.constant 3 : index
    %c0_28 = arith.constant 0 : index
    %c0_29 = arith.constant 0 : index
    %50 = vector.load %arg8[%c3, %c0_28, %c0_29] : memref<9x8x8xf32, #tpu.memory_space<vmem>>, vector<1x8x8xf32>
    %51 = vector.shape_cast %50 : vector<1x8x8xf32> to vector<8x8xf32>
    %cst_30 = arith.constant dense<0.000000e+00> : vector<8x384xf32>
    %52 = tpu.matmul %51, %49, %cst_30 {dimension_numbers = #tpu.dot_dimension_numbers<[1], [0], [0], [1], [0, 0, 1, 1], [], []>} : vector<8x8xf32>, vector<8x384xf32>, vector<8x384xf32> -> vector<8x384xf32>
    %53 = arith.addf %48, %52 : vector<8x384xf32>
    %54 = vector.extract_strided_slice %32 {offsets = [0, 128], sizes = [8, 384], strides = [1, 1]} : vector<8x640xf32> to vector<8x384xf32>
    %c4 = arith.constant 4 : index
    %c0_31 = arith.constant 0 : index
    %c0_32 = arith.constant 0 : index
    %55 = vector.load %arg8[%c4, %c0_31, %c0_32] : memref<9x8x8xf32, #tpu.memory_space<vmem>>, vector<1x8x8xf32>
    %56 = vector.shape_cast %55 : vector<1x8x8xf32> to vector<8x8xf32>
    %cst_33 = arith.constant dense<0.000000e+00> : vector<8x384xf32>
    %57 = tpu.matmul %56, %54, %cst_33 {dimension_numbers = #tpu.dot_dimension_numbers<[1], [0], [0], [1], [0, 0, 1, 1], [], []>} : vector<8x8xf32>, vector<8x384xf32>, vector<8x384xf32> -> vector<8x384xf32>
    %58 = arith.addf %53, %57 : vector<8x384xf32>
    %59 = vector.extract_strided_slice %32 {offsets = [0, 129], sizes = [8, 384], strides = [1, 1]} : vector<8x640xf32> to vector<8x384xf32>
    %c5 = arith.constant 5 : index
    %c0_34 = arith.constant 0 : index
    %c0_35 = arith.constant 0 : index
    %60 = vector.load %arg8[%c5, %c0_34, %c0_35] : memref<9x8x8xf32, #tpu.memory_space<vmem>>, vector<1x8x8xf32>
    %61 = vector.shape_cast %60 : vector<1x8x8xf32> to vector<8x8xf32>
    %cst_36 = arith.constant dense<0.000000e+00> : vector<8x384xf32>
    %62 = tpu.matmul %61, %59, %cst_36 {dimension_numbers = #tpu.dot_dimension_numbers<[1], [0], [0], [1], [0, 0, 1, 1], [], []>} : vector<8x8xf32>, vector<8x384xf32>, vector<8x384xf32> -> vector<8x384xf32>
    %63 = arith.addf %58, %62 : vector<8x384xf32>
    %64 = vector.extract_strided_slice %32 {offsets = [0, 145], sizes = [8, 384], strides = [1, 1]} : vector<8x640xf32> to vector<8x384xf32>
    %c6 = arith.constant 6 : index
    %c0_37 = arith.constant 0 : index
    %c0_38 = arith.constant 0 : index
    %65 = vector.load %arg8[%c6, %c0_37, %c0_38] : memref<9x8x8xf32, #tpu.memory_space<vmem>>, vector<1x8x8xf32>
    %66 = vector.shape_cast %65 : vector<1x8x8xf32> to vector<8x8xf32>
    %cst_39 = arith.constant dense<0.000000e+00> : vector<8x384xf32>
    %67 = tpu.matmul %66, %64, %cst_39 {dimension_numbers = #tpu.dot_dimension_numbers<[1], [0], [0], [1], [0, 0, 1, 1], [], []>} : vector<8x8xf32>, vector<8x384xf32>, vector<8x384xf32> -> vector<8x384xf32>
    %68 = arith.addf %63, %67 : vector<8x384xf32>
    %69 = vector.extract_strided_slice %32 {offsets = [0, 146], sizes = [8, 384], strides = [1, 1]} : vector<8x640xf32> to vector<8x384xf32>
    %c7 = arith.constant 7 : index
    %c0_40 = arith.constant 0 : index
    %c0_41 = arith.constant 0 : index
    %70 = vector.load %arg8[%c7, %c0_40, %c0_41] : memref<9x8x8xf32, #tpu.memory_space<vmem>>, vector<1x8x8xf32>
    %71 = vector.shape_cast %70 : vector<1x8x8xf32> to vector<8x8xf32>
    %cst_42 = arith.constant dense<0.000000e+00> : vector<8x384xf32>
    %72 = tpu.matmul %71, %69, %cst_42 {dimension_numbers = #tpu.dot_dimension_numbers<[1], [0], [0], [1], [0, 0, 1, 1], [], []>} : vector<8x8xf32>, vector<8x384xf32>, vector<8x384xf32> -> vector<8x384xf32>
    %73 = arith.addf %68, %72 : vector<8x384xf32>
    %74 = vector.extract_strided_slice %32 {offsets = [0, 147], sizes = [8, 384], strides = [1, 1]} : vector<8x640xf32> to vector<8x384xf32>
    %c8 = arith.constant 8 : index
    %c0_43 = arith.constant 0 : index
    %c0_44 = arith.constant 0 : index
    %75 = vector.load %arg8[%c8, %c0_43, %c0_44] : memref<9x8x8xf32, #tpu.memory_space<vmem>>, vector<1x8x8xf32>
    %76 = vector.shape_cast %75 : vector<1x8x8xf32> to vector<8x8xf32>
    %cst_45 = arith.constant dense<0.000000e+00> : vector<8x384xf32>
    %77 = tpu.matmul %76, %74, %cst_45 {dimension_numbers = #tpu.dot_dimension_numbers<[1], [0], [0], [1], [0, 0, 1, 1], [], []>} : vector<8x8xf32>, vector<8x384xf32>, vector<8x384xf32> -> vector<8x384xf32>
    %78 = arith.addf %73, %77 : vector<8x384xf32>
    %c0_46 = arith.constant 0 : index
    %c0_47 = arith.constant 0 : index
    %79 = vector.load %arg9[%c0_46, %c0_47] : memref<8x384xf32, #tpu.memory_space<vmem>>, vector<8x384xf32>
    tpu.vector_store %arg9[%c0_46, %c0_47], %78 {strides = array<i32>} : memref<8x384xf32, #tpu.memory_space<vmem>>, vector<8x384xf32>,
    %c0_48 = arith.constant 0 : index
    %c0_49 = arith.constant 0 : index
    %80 = vector.load %arg5[%c0_48, %c0_49] : memref<1x384xf32, #tpu.memory_space<vmem>>, vector<1x384xf32>
    %81 = vector.broadcast %80 : vector<1x384xf32> to vector<8x384xf32>
    %82 = arith.mulf %78, %81 : vector<8x384xf32>
    %cst_50 = arith.constant dense<0.000000e+00> : vector<8xf32>
    %83 = vector.multi_reduction <add>, %82, %cst_50 [1] : vector<8x384xf32> to vector<8xf32>
    %84 = vector.shape_cast %83 : vector<8xf32> to vector<8x1xf32>
    %85 = arith.mulf %78, %82 : vector<8x384xf32>
    %cst_51 = arith.constant dense<0.000000e+00> : vector<8xf32>
    %86 = vector.multi_reduction <add>, %85, %cst_51 [1] : vector<8x384xf32> to vector<8xf32>
    %87 = vector.shape_cast %86 : vector<8xf32> to vector<8x1xf32>
    %88 = tpu.concatenate %84, %87 in 1 : vector<8x1xf32>, vector<8x1xf32> -> vector<8x2xf32>
    %c0_52 = arith.constant 0 : index
    %c0_53 = arith.constant 0 : index
    %c0_54 = arith.constant 0 : index
    %89 = vector.load %arg10[%c0_52, %c0_53, %c0_54] : memref<1x8x2xf32, #tpu.memory_space<vmem>>, vector<1x8x2xf32>
    %90 = vector.shape_cast %89 : vector<1x8x2xf32> to vector<8x2xf32>
    %91 = vector.shape_cast %88 : vector<8x2xf32> to vector<1x8x2xf32>
    tpu.vector_store %arg10[%c0_52, %c0_53, %c0_54], %91 {strides = array<i32>} : memref<1x8x2xf32, #tpu.memory_space<vmem>>, vector<1x8x2xf32>,
    return
  }
  func.func @transform_0(%arg0: i32) -> (i32, i32) {
    %c3_i32 = arith.constant 3 : i32
    %0 = arith.muli %arg0, %c3_i32 : i32
    %c1_i32 = arith.constant 1 : i32
    %1 = arith.subi %0, %c1_i32 : i32
    %c0_i32 = arith.constant 0 : i32
    %2 = arith.maxsi %1, %c0_i32 : i32
    %c0_i32_0 = arith.constant 0 : i32
    %c0_i32_1 = arith.constant 0 : i32
    return %c0_i32_0, %2 : i32, i32
  }
  func.func @transform_1(%arg0: i32) -> (i32, i32) {
    %c0_i32 = arith.constant 0 : i32
    %c0_i32_0 = arith.constant 0 : i32
    return %c0_i32, %arg0 : i32, i32
  }
  func.func @transform_2(%arg0: i32) -> (i32, i32) {
    %c1_i32 = arith.constant 1 : i32
    %0 = arith.addi %arg0, %c1_i32 : i32
    %c3_i32 = arith.constant 3 : i32
    %1 = arith.muli %0, %c3_i32 : i32
    %c5_i32 = arith.constant 5 : i32
    %2 = arith.minsi %1, %c5_i32 : i32
    %c0_i32 = arith.constant 0 : i32
    %c0_i32_0 = arith.constant 0 : i32
    return %c0_i32, %2 : i32, i32
  }
  func.func @transform_3(%arg0: i32) -> (i32, i32) {
    %c3_i32 = arith.constant 3 : i32
    %0 = arith.muli %arg0, %c3_i32 : i32
    %c1_i32 = arith.constant 1 : i32
    %1 = arith.subi %0, %c1_i32 : i32
    %c0_i32 = arith.constant 0 : i32
    %2 = arith.maxsi %1, %c0_i32 : i32
    %c0_i32_0 = arith.constant 0 : i32
    %c0_i32_1 = arith.constant 0 : i32
    return %c0_i32_0, %2 : i32, i32
  }
  func.func @transform_4(%arg0: i32) -> (i32, i32) {
    %c0_i32 = arith.constant 0 : i32
    %c0_i32_0 = arith.constant 0 : i32
    return %c0_i32, %arg0 : i32, i32
  }
  func.func @transform_5(%arg0: i32) -> (i32, i32) {
    %c1_i32 = arith.constant 1 : i32
    %0 = arith.addi %arg0, %c1_i32 : i32
    %c3_i32 = arith.constant 3 : i32
    %1 = arith.muli %0, %c3_i32 : i32
    %c5_i32 = arith.constant 5 : i32
    %2 = arith.minsi %1, %c5_i32 : i32
    %c0_i32 = arith.constant 0 : i32
    %c0_i32_0 = arith.constant 0 : i32
    return %c0_i32, %2 : i32, i32
  }
  func.func @transform_6(%arg0: i32) -> (i32, i32) {
    %c0_i32 = arith.constant 0 : i32
    %c0_i32_0 = arith.constant 0 : i32
    %c0_i32_1 = arith.constant 0 : i32
    return %c0_i32, %c0_i32_0 : i32, i32
  }
  func.func @transform_7(%arg0: i32) -> (i32, i32, i32) {
    %c0_i32 = arith.constant 0 : i32
    %c0_i32_0 = arith.constant 0 : i32
    %c0_i32_1 = arith.constant 0 : i32
    %c0_i32_2 = arith.constant 0 : i32
    return %c0_i32, %c0_i32_0, %c0_i32_1 : i32, i32, i32
  }
  func.func @transform_8(%arg0: i32) -> (i32, i32) {
    %c0_i32 = arith.constant 0 : i32
    %c0_i32_0 = arith.constant 0 : i32
    return %c0_i32, %arg0 : i32, i32
  }
  func.func @transform_9(%arg0: i32) -> (i32, i32, i32) {
    %c0_i32 = arith.constant 0 : i32
    %c0_i32_0 = arith.constant 0 : i32
    %c0_i32_1 = arith.constant 0 : i32
    return %arg0, %c0_i32, %c0_i32_0 : i32, i32, i32
  }
}

</mosaic_0001>

<llo_original>
// kernel: residual_block_forward.5
$region0: #{residual_block_forward.5}
  #allocation0 [shape = 'u32[]', space=smem, size = 0x4, offset = 0x4, fixed_abs, tag = 'smem constant byte address 0x4 - core index']
  #allocation1 [shape = 'u32[144,128]{1,0:T(1,128)}', space=vmem, size = 0x12000, scoped, tag = 'internal scratch']
  %s0 = inlined_call_operand.vmem [shape: f32[8,768], index: 0, kind: input, shape index: {}]
  %s1 = inlined_call_operand.vmem [shape: f32[8,768], index: 1, kind: input, shape index: {}]
  %s2 = inlined_call_operand.vmem [shape: f32[8,2], index: 2, kind: input, shape index: {}]
  %s3 = inlined_call_operand.vmem [shape: f32[8,2], index: 3, kind: input, shape index: {}]
  %s4 = inlined_call_operand.vmem [shape: f32[8,768], index: 4, kind: output, shape index: {}]
  %s5 = sld [smem:[#allocation0]]
  $region49: #{residual_block_forward.5} parent=0
    _
  %s7 = ssub.s32 1, %s5
  %s8 = scalar_select 0, %s7, %s5
  loop: start=0, step=1, limit=4
  $region2: #{residual_block_forward.5} parent=0 // loop_pre_header
    _
  $region3: #{residual_block_forward.5} parent=0 // loop_header
    %s10 = sphi 0, %s14
    %p11 = scmp.ge.s32.totalorder %s10, 4
    %s20 = sphi 0, %s22
    %s23 = sphi 0, %s20
    %s24 = sphi 0, %s23
    %s40 = sphi 0, %s24
    %s46 = sphi 0, %s48
    %s49 = sphi 0, %s46
    %s50 = sphi 0, %s49
    %s66 = sphi 0, %s50
    %s70 = sphi 0, %s70
    %s72 = sphi 0, %s70
    %s73 = sphi 0, %s72
    %s87 = sphi 0, %s73
    %s91 = sphi 0, %s91
    %s93 = sphi 0, %s91
    %s94 = sphi 0, %s93
    %s108 = sphi 0, %s94
    %s114 = sphi 0, %s116
    %s117 = sphi 0, %s114
    %s118 = sphi 0, %s117
    %s134 = sphi 0, %s118
  $region4: #{residual_block_forward.5} parent=0 // loop_header_branch
    %13 = sbr.rel (%p11) target = $region8
  $region5: #{residual_block_forward.5} parent=0 // loop_body
    %s15 = ssub.s32 %s10, 1
    %s16 = ssub.s32 %s10, 2
    %s17 = sadd.s32 %s10, 1
    %s18 = ssub.s32 %s10, %s17
    %p19 = scmp.eq.s32.totalorder %s18, 0
    %s21 = sadd.s32 %s20, 1
    %s22 = scalar_select %p19, %s20, %s21
    %p25 = pneg %p19
    %p26 = scmp.eq.s32.totalorder %s10, 1
    %p27 = por %p25, %p26
    %p28 = scmp.ne.s32.totalorder %s20, %s23
    %p29 = scmp.eq.s32.totalorder %s10, 0
    %p30 = por %p28, %p29
    %p31 = scmp.ne.s32.totalorder %s20, %s23
    %p32 = scmp.eq.s32.totalorder %s15, 1
    %p33 = por %p31, %p32
    %p34 = scmp.ne.s32.totalorder %s23, %s24
    %p35 = scmp.eq.s32.totalorder %s15, 0
    %p36 = por %p34, %p35
    %p37 = scmp.ne.s32.totalorder %s23, %s24
    %p38 = scmp.eq.s32.totalorder %s16, 1
    %p39 = por %p37, %p38
    %p41 = scmp.ne.s32.totalorder %s24, %s40
    %p42 = scmp.eq.s32.totalorder %s16, 0
    %p43 = por %p41, %p42
    %s44 = ssub.s32 %s10, %s17
    %p45 = scmp.eq.s32.totalorder %s44, 0
    %s47 = sadd.s32 %s46, 1
    %s48 = scalar_select %p45, %s46, %s47
    %p51 = pneg %p45
    %p52 = scmp.eq.s32.totalorder %s10, 1
    %p53 = por %p51, %p52
    %p54 = scmp.ne.s32.totalorder %s46, %s49
    %p55 = scmp.eq.s32.totalorder %s10, 0
    %p56 = por %p54, %p55
    %p57 = scmp.ne.s32.totalorder %s46, %s49
    %p58 = scmp.eq.s32.totalorder %s15, 1
    %p59 = por %p57, %p58
    %p60 = scmp.ne.s32.totalorder %s49, %s50
    %p61 = scmp.eq.s32.totalorder %s15, 0
    %p62 = por %p60, %p61
    %p63 = scmp.ne.s32.totalorder %s49, %s50
    %p64 = scmp.eq.s32.totalorder %s16, 1
    %p65 = por %p63, %p64
    %p67 = scmp.ne.s32.totalorder %s50, %s66
    %p68 = scmp.eq.s32.totalorder %s16, 0
    %p69 = por %p67, %p68
    %s71 = sadd.s32 %s70, 1
    %p74 = scmp.eq.s32.totalorder %s10, 1
    %p75 = scmp.ne.s32.totalorder %s70, %s72
    %p76 = scmp.eq.s32.totalorder %s10, 0
    %p77 = por %p75, %p76
    %p78 = scmp.ne.s32.totalorder %s70, %s72
    %p79 = scmp.eq.s32.totalorder %s15, 1
    %p80 = por %p78, %p79
    %p81 = scmp.ne.s32.totalorder %s72, %s73
    %p82 = scmp.eq.s32.totalorder %s15, 0
    %p83 = por %p81, %p82
    %p84 = scmp.ne.s32.totalorder %s72, %s73
    %p85 = scmp.eq.s32.totalorder %s16, 1
    %p86 = por %p84, %p85
    %p88 = scmp.ne.s32.totalorder %s73, %s87
    %p89 = scmp.eq.s32.totalorder %s16, 0
    %p90 = por %p88, %p89
    %s92 = sadd.s32 %s91, 1
    %p95 = scmp.eq.s32.totalorder %s10, 1
    %p96 = scmp.ne.s32.totalorder %s91, %s93
    %p97 = scmp.eq.s32.totalorder %s10, 0
    %p98 = por %p96, %p97
    %p99 = scmp.ne.s32.totalorder %s91, %s93
    %p100 = scmp.eq.s32.totalorder %s15, 1
    %p101 = por %p99, %p100
    %p102 = scmp.ne.s32.totalorder %s93, %s94
    %p103 = scmp.eq.s32.totalorder %s15, 0
    %p104 = por %p102, %p103
    %p105 = scmp.ne.s32.totalorder %s93, %s94
    %p106 = scmp.eq.s32.totalorder %s16, 1
    %p107 = por %p105, %p106
    %p109 = scmp.ne.s32.totalorder %s94, %s108
    %p110 = scmp.eq.s32.totalorder %s16, 0
    %p111 = por %p109, %p110
    %s112 = ssub.s32 %s10, %s17
    %p113 = scmp.eq.s32.totalorder %s112, 0
    %s115 = sadd.s32 %s114, 1
    %s116 = scalar_select %p113, %s114, %s115
    %p119 = pneg %p113
    %p120 = scmp.eq.s32.totalorder %s10, 1
    %p121 = por %p119, %p120
    %p122 = scmp.ne.s32.totalorder %s114, %s117
    %p123 = scmp.eq.s32.totalorder %s10, 0
    %p124 = por %p122, %p123
    %p125 = scmp.ne.s32.totalorder %s114, %s117
    %p126 = scmp.eq.s32.totalorder %s15, 1
    %p127 = por %p125, %p126
    %p128 = scmp.ne.s32.totalorder %s117, %s118
    %p129 = scmp.eq.s32.totalorder %s15, 0
    %p130 = por %p128, %p129
    %p131 = scmp.ne.s32.totalorder %s117, %s118
    %p132 = scmp.eq.s32.totalorder %s16, 1
    %p133 = por %p131, %p132
    %p135 = scmp.ne.s32.totalorder %s118, %s134
    %p136 = scmp.eq.s32.totalorder %s16, 0
    %p137 = por %p135, %p136
    %p138 = scmp.le.s32.totalorder 1, %s10
    %p139 = scmp.lt.s32.totalorder %s10, 3
    %p140 = pnand %p138, %p139
    %p141 = pneg %p140
    // Predicated region
    $region9: #{residual_block_forward.5} parent=5 // pred_check
      _
    $region10: #{residual_block_forward.5} parent=5 // pred_check_branch
      %143 = sbr.rel (%p140) target = $region12
    $region11: #{residual_block_forward.5} parent=5 // pred_region
      %s144 = ssub.s32 %s10, 1
      // Predicated region
      $region13: #{residual_block_forward.5} parent=11 // pred_check
        %p145 = pneg %p83
      $region14: #{residual_block_forward.5} parent=11 // pred_check_branch
        %147 = sbr.rel (%p145) target = $region16
      $region15: #{residual_block_forward.5} parent=11 // pred_region
        _
      $region16: #{residual_block_forward.5} parent=11 // pred_fallthru
        _
      // Predicated region
      $region17: #{residual_block_forward.5} parent=11 // pred_check
        %p148 = pneg %p104
      $region18: #{residual_block_forward.5} parent=11 // pred_check_branch
        %150 = sbr.rel (%p148) target = $region20
      $region19: #{residual_block_forward.5} parent=11 // pred_region
        _
      $region20: #{residual_block_forward.5} parent=11 // pred_fallthru
        _
    $region12: #{residual_block_forward.5} parent=5 // pred_fallthru
      _
    %p151 = scmp.lt.s32.totalorder %s10, 2
    // Predicated region
    $region21: #{residual_block_forward.5} parent=5 // pred_check
      %p152 = pneg %p151
    $region22: #{residual_block_forward.5} parent=5 // pred_check_branch
      %154 = sbr.rel (%p152) target = $region24
    $region23: #{residual_block_forward.5} parent=5 // pred_region
      // Predicated region
      $region25: #{residual_block_forward.5} parent=23 // pred_check
        %p155 = pneg %p30
      $region26: #{residual_block_forward.5} parent=23 // pred_check_branch
        %157 = sbr.rel (%p155) target = $region28
      $region27: #{residual_block_forward.5} parent=23 // pred_region
        %s158 = smul.u32 3, %s10
        %p159 = scmp.lt.s32.totalorder %s158, 5
        %s160 = scalar_select %p159, %s158, 5
        %s161 = smul.addr %s160, 8
        %s162 = scalar_lea.vmem %s0, %s161
        %s163 = smul.u32 3, %s10
      $region28: #{residual_block_forward.5} parent=23 // pred_fallthru
        _
      // Predicated region
      $region29: #{residual_block_forward.5} parent=23 // pred_check
        %p164 = pneg %p56
      $region30: #{residual_block_forward.5} parent=23 // pred_check_branch
        %166 = sbr.rel (%p164) target = $region32
      $region31: #{residual_block_forward.5} parent=23 // pred_region
        %s167 = smul.u32 3, %s10
        %p168 = scmp.lt.s32.totalorder %s167, 5
        %s169 = scalar_select %p168, %s167, 5
        %s170 = smul.addr %s169, 8
        %s171 = scalar_lea.vmem %s1, %s170
        %s172 = smul.u32 3, %s10
      $region32: #{residual_block_forward.5} parent=23 // pred_fallthru
        _
    $region24: #{residual_block_forward.5} parent=5 // pred_fallthru
      _
    %p173 = scmp.le.s32.totalorder 1, %s10
    %p174 = scmp.lt.s32.totalorder %s10, 3
    %p175 = pnand %p173, %p174
    %p176 = pneg %p175
    // Predicated region
    $region33: #{residual_block_forward.5} parent=5 // pred_check
      _
    $region34: #{residual_block_forward.5} parent=5 // pred_check_branch
      %178 = sbr.rel (%p175) target = $region36
    $region35: #{residual_block_forward.5} parent=5 // pred_region
      %s179 = ssub.s32 %s10, 1
      %s180 = smul.u32 3, %s15
      %p181 = scmp.lt.s32.totalorder %s180, 5
      %s182 = scalar_select %p181, %s180, 5
      %s183 = smul.addr %s182, 8
      %s184 = scalar_lea.vmem %s0, %s183
      %p185 = pneg %p36
      %p186 = pneg %p33
      %s187 = smul.u32 3, %s15
      %p188 = scmp.lt.s32.totalorder %s187, 5
      %s189 = scalar_select %p188, %s187, 5
      %s190 = smul.addr %s189, 8
      %s191 = scalar_lea.vmem %s1, %s190
      %p192 = pneg %p62
      %p193 = pneg %p59
      %p194 = pneg %p83
      %p195 = pneg %p80
      %p196 = pneg %p104
      %p197 = pneg %p101
      %p198 = pneg %p130
      %p199 = pneg %p127
      %s200 = smul.u32 3, %s15
      %p201 = scmp.lt.s32.totalorder %s200, 5
      %s202 = scalar_select %p201, %s200, 5
      %s203 = smul.addr %s202, 8
      %s204 = scalar_lea.vmem %s4, %s203
      %s205 = smul.u32 3, %s15
      %p206 = scmp.lt.s32.totalorder %s205, 5
      %s207 = scalar_select %p206, %s205, 5
      %s208 = smul.addr %s207, 8
      %s209 = scalar_lea.vmem %s0, %s208
      %s210 = smul.u32 3, %s15
      %s211 = smul.u32 3, %s15
      %p212 = scmp.lt.s32.totalorder %s211, 5
      %s213 = scalar_select %p212, %s211, 5
      %s214 = smul.addr %s213, 8
      %s215 = scalar_lea.vmem %s1, %s214
      %s216 = smul.u32 3, %s15
      %s217 = smul.u32 3, %s15
      %p218 = scmp.lt.s32.totalorder %s217, 5
      %s219 = scalar_select %p218, %s217, 5
      %s220 = smul.addr %s219, 8
      %s221 = scalar_lea.vmem %s4, %s220
      %s222 = smul.u32 3, %s15
      %v223 = vld [vmem:[%s209] sm:$0xff]
      %v224 = vld [vmem:[%s209 + $0x8] sm:$0xff]
      %v225 = vld [vmem:[%s209 + $0x10] sm:$0xff]
      %v226 = vld [vmem:[%s2] sm:$0xff]
      %228 = vset.pattern.permute.xlu0 0
      %229 = vperm.xlu0 %228, %v226
      %v230 = vpop.permute.xlu0 %229
      %v232 = vmul.f32 %v223, %v230
      %v233 = vmul.f32 %v224, %v230
      %v234 = vmul.f32 %v225, %v230
      %235 = vset.pattern.permute.xlu0 1
      %236 = vperm.xlu0 %235, %v226
      %v237 = vpop.permute.xlu0 %236
      %v239 = vadd.f32 %v232, %v237
      %v240 = vadd.f32 %v233, %v237
      %v241 = vadd.f32 %v234, %v237
      %v242 = vld [vmem:[%s215] sm:$0xff]
      %v243 = vld [vmem:[%s215 + $0x8] sm:$0xff]
      %v244 = vld [vmem:[%s215 + $0x10] sm:$0xff]
      %v245 = vld [vmem:[%s3] sm:$0xff]
      %247 = vset.pattern.permute.xlu0 0
      %248 = vperm.xlu0 %247, %v245
      %v249 = vpop.permute.xlu0 %248
      %v251 = vmul.f32 %v242, %v249
      %v252 = vmul.f32 %v243, %v249
      %v253 = vmul.f32 %v244, %v249
      %254 = vset.pattern.permute.xlu0 1
      %255 = vperm.xlu0 %254, %v245
      %v256 = vpop.permute.xlu0 %255
      %v258 = vadd.f32 %v251, %v256
      %v259 = vadd.f32 %v252, %v256
      %v260 = vadd.f32 %v253, %v256
      %v261 = vadd.f32 %v239, %v258
      %v262 = vadd.f32 %v240, %v259
      %v263 = vadd.f32 %v241, %v260
      %v264 = vmax.f32 %v261, 0.0
      %v265 = vmax.f32 %v262, 0.0
      %v266 = vmax.f32 %v263, 0.0
      %267 = vst [vmem:[%s221] sm:$0xff] %v264
      %268 = vst [vmem:[%s221 + $0x8] sm:$0xff] %v265
      %269 = vst [vmem:[%s221 + $0x10] sm:$0xff] %v266
      %s270 = smul.u32 3, %s15
      %p271 = scmp.lt.s32.totalorder %s270, 5
      %s272 = scalar_select %p271, %s270, 5
      %s273 = smul.addr %s272, 8
      %s274 = scalar_lea.vmem %s4, %s273
      // Predicated region
      $region37: #{residual_block_forward.5} parent=35 // pred_check
        %p275 = pneg %p127
      $region38: #{residual_block_forward.5} parent=35 // pred_check_branch
        %277 = sbr.rel (%p275) target = $region40
      $region39: #{residual_block_forward.5} parent=35 // pred_region
        %s278 = smul.u32 3, %s15
      $region40: #{residual_block_forward.5} parent=35 // pred_fallthru
        _
    $region36: #{residual_block_forward.5} parent=5 // pred_fallthru
      _
    %p279 = scmp.le.s32.totalorder 2, %s10
    // Predicated region
    $region41: #{residual_block_forward.5} parent=5 // pred_check
      %p280 = pneg %p279
    $region42: #{residual_block_forward.5} parent=5 // pred_check_branch
      %282 = sbr.rel (%p280) target = $region44
    $region43: #{residual_block_forward.5} parent=5 // pred_region
      %s283 = ssub.s32 %s10, 2
      // Predicated region
      $region45: #{residual_block_forward.5} parent=43 // pred_check
        %p284 = pneg %p133
      $region46: #{residual_block_forward.5} parent=43 // pred_check_branch
        %286 = sbr.rel (%p284) target = $region48
      $region47: #{residual_block_forward.5} parent=43 // pred_region
        %s287 = smul.u32 3, %s16
        %p288 = scmp.lt.s32.totalorder %s287, 5
        %s289 = scalar_select %p288, %s287, 5
        %s290 = smul.addr %s289, 8
        %s291 = scalar_lea.vmem %s4, %s290
      $region48: #{residual_block_forward.5} parent=43 // pred_fallthru
        _
    $region44: #{residual_block_forward.5} parent=5 // pred_fallthru
      _
  $region6: #{residual_block_forward.5} parent=0 // loop_footer
    %s14 = sadd.s32 1, %s10
  $region7: #{residual_block_forward.5} parent=0 // loop_footer_branch
    %9 = sbr.rel target = $region3
  $region8: #{residual_block_forward.5} parent=0 // loop_exit
    _

// kernel: residual_block_forward.3
$region0: #{residual_block_forward.3}
  #allocation0 [shape = 'u32[]', space=smem, size = 0x4, offset = 0x4, fixed_abs, tag = 'smem constant byte address 0x4 - core index']
  #allocation1 [shape = 'u32[144,128]{1,0:T(1,128)}', space=vmem, size = 0x12000, scoped, tag = 'internal scratch']
  %s0 = inlined_call_operand.vmem [shape: bf16[4,768], index: 0, kind: input, shape index: {}, may-alias: {0,1,2}]
  %s1 = inlined_call_operand.vmem [shape: bf16[4,768], index: 1, kind: input, shape index: {}, may-alias: {0,1,2}]
  %s2 = inlined_call_operand.vmem [shape: bf16[4,768], index: 2, kind: input, shape index: {}, may-alias: {0,1,2}]
  %s3 = inlined_call_operand.vmem [shape: f32[1,768], index: 3, kind: input, shape index: {}]
  %s4 = inlined_call_operand.vmem [shape: bf16[9,8,4], index: 4, kind: input, shape index: {}]
  %s5 = inlined_call_operand.vmem [shape: bf16[8,4], index: 5, kind: input, shape index: {}]
  %s6 = inlined_call_operand.vmem [shape: f32[8,768], index: 6, kind: output, shape index: {0}]
  %s7 = inlined_call_operand.vmem [shape: f32[8,768], index: 7, kind: output, shape index: {1}]
  %s8 = inlined_call_operand.vmem [shape: f32[2,8,4], index: 8, kind: output, shape index: {2}]
  %9 = xla_tuple %s6, %s7, %s8
  %s10 = sld [smem:[#allocation0]]
  $region73: #{residual_block_forward.3} parent=0
    _
  %s12 = ssub.s32 1, %s10
  %s13 = scalar_select 0, %s12, %s10
  loop: start=0, step=1, limit=4
  $region2: #{residual_block_forward.3} parent=0 // loop_pre_header
    _
  $region3: #{residual_block_forward.3} parent=0 // loop_header
    %s15 = sphi 0, %s19
    %p16 = scmp.ge.s32.totalorder %s15, 4
    %s33 = sphi 0, %s35
    %s36 = sphi 0, %s33
    %s37 = sphi 0, %s36
    %s53 = sphi 0, %s37
    %s59 = sphi 0, %s61
    %s62 = sphi 0, %s59
    %s63 = sphi 0, %s62
    %s79 = sphi 0, %s63
    %s93 = sphi 0, %s95
    %s96 = sphi 0, %s93
    %s97 = sphi 0, %s96
    %s113 = sphi 0, %s97
    %s119 = sphi 0, %s121
    %s122 = sphi 0, %s119
    %s123 = sphi 0, %s122
    %s139 = sphi 0, %s123
    %s143 = sphi 0, %s143
    %s145 = sphi 0, %s143
    %s146 = sphi 0, %s145
    %s160 = sphi 0, %s146
    %s164 = sphi 0, %s164
    %s166 = sphi 0, %s164
    %s167 = sphi 0, %s166
    %s181 = sphi 0, %s167
    %s187 = sphi 0, %s189
    %s190 = sphi 0, %s187
    %s191 = sphi 0, %s190
    %s207 = sphi 0, %s191
    %s213 = sphi 0, %s215
    %s216 = sphi 0, %s213
    %s217 = sphi 0, %s216
    %s233 = sphi 0, %s217
    %s239 = sphi 0, %s241
    %s242 = sphi 0, %s239
    %s243 = sphi 0, %s242
    %s259 = sphi 0, %s243
  $region4: #{residual_block_forward.3} parent=0 // loop_header_branch
    %18 = sbr.rel (%p16) target = $region8
  $region5: #{residual_block_forward.3} parent=0 // loop_body
    %s20 = ssub.s32 %s15, 1
    %s21 = ssub.s32 %s15, 2
    %s22 = sadd.s32 %s15, 1
    %s23 = smul.u32 %s15, 3
    %s24 = ssub.s32 %s23, 1
    %p25 = scmp.gt.s32.totalorder %s24, 0
    %s26 = scalar_select %p25, %s24, 0
    %s27 = smul.u32 %s22, 3
    %s28 = ssub.s32 %s27, 1
    %p29 = scmp.gt.s32.totalorder %s28, 0
    %s30 = scalar_select %p29, %s28, 0
    %s31 = ssub.s32 %s26, %s30
    %p32 = scmp.eq.s32.totalorder %s31, 0
    %s34 = sadd.s32 %s33, 1
    %s35 = scalar_select %p32, %s33, %s34
    %p38 = pneg %p32
    %p39 = scmp.eq.s32.totalorder %s15, 1
    %p40 = por %p38, %p39
    %p41 = scmp.ne.s32.totalorder %s33, %s36
    %p42 = scmp.eq.s32.totalorder %s15, 0
    %p43 = por %p41, %p42
    %p44 = scmp.ne.s32.totalorder %s33, %s36
    %p45 = scmp.eq.s32.totalorder %s20, 1
    %p46 = por %p44, %p45
    %p47 = scmp.ne.s32.totalorder %s36, %s37
    %p48 = scmp.eq.s32.totalorder %s20, 0
    %p49 = por %p47, %p48
    %p50 = scmp.ne.s32.totalorder %s36, %s37
    %p51 = scmp.eq.s32.totalorder %s21, 1
    %p52 = por %p50, %p51
    %p54 = scmp.ne.s32.totalorder %s37, %s53
    %p55 = scmp.eq.s32.totalorder %s21, 0
    %p56 = por %p54, %p55
    %s57 = ssub.s32 %s15, %s22
    %p58 = scmp.eq.s32.totalorder %s57, 0
    %s60 = sadd.s32 %s59, 1
    %s61 = scalar_select %p58, %s59, %s60
    %p64 = pneg %p58
    %p65 = scmp.eq.s32.totalorder %s15, 1
    %p66 = por %p64, %p65
    %p67 = scmp.ne.s32.totalorder %s59, %s62
    %p68 = scmp.eq.s32.totalorder %s15, 0
    %p69 = por %p67, %p68
    %p70 = scmp.ne.s32.totalorder %s59, %s62
    %p71 = scmp.eq.s32.totalorder %s20, 1
    %p72 = por %p70, %p71
    %p73 = scmp.ne.s32.totalorder %s62, %s63
    %p74 = scmp.eq.s32.totalorder %s20, 0
    %p75 = por %p73, %p74
    %p76 = scmp.ne.s32.totalorder %s62, %s63
    %p77 = scmp.eq.s32.totalorder %s21, 1
    %p78 = por %p76, %p77
    %p80 = scmp.ne.s32.totalorder %s63, %s79
    %p81 = scmp.eq.s32.totalorder %s21, 0
    %p82 = por %p80, %p81
    %s83 = sadd.s32 %s15, 1
    %s84 = smul.u32 %s83, 3
    %p85 = scmp.lt.s32.totalorder %s84, 5
    %s86 = scalar_select %p85, %s84, 5
    %s87 = sadd.s32 %s22, 1
    %s88 = smul.u32 %s87, 3
    %p89 = scmp.lt.s32.totalorder %s88, 5
    %s90 = scalar_select %p89, %s88, 5
    %s91 = ssub.s32 %s86, %s90
    %p92 = scmp.eq.s32.totalorder %s91, 0
    %s94 = sadd.s32 %s93, 1
    %s95 = scalar_select %p92, %s93, %s94
    %p98 = pneg %p92
    %p99 = scmp.eq.s32.totalorder %s15, 1
    %p100 = por %p98, %p99
    %p101 = scmp.ne.s32.totalorder %s93, %s96
    %p102 = scmp.eq.s32.totalorder %s15, 0
    %p103 = por %p101, %p102
    %p104 = scmp.ne.s32.totalorder %s93, %s96
    %p105 = scmp.eq.s32.totalorder %s20, 1
    %p106 = por %p104, %p105
    %p107 = scmp.ne.s32.totalorder %s96, %s97
    %p108 = scmp.eq.s32.totalorder %s20, 0
    %p109 = por %p107, %p108
    %p110 = scmp.ne.s32.totalorder %s96, %s97
    %p111 = scmp.eq.s32.totalorder %s21, 1
    %p112 = por %p110, %p111
    %p114 = scmp.ne.s32.totalorder %s97, %s113
    %p115 = scmp.eq.s32.totalorder %s21, 0
    %p116 = por %p114, %p115
    %s117 = ssub.s32 %s15, %s22
    %p118 = scmp.eq.s32.totalorder %s117, 0
    %s120 = sadd.s32 %s119, 1
    %s121 = scalar_select %p118, %s119, %s120
    %p124 = pneg %p118
    %p125 = scmp.eq.s32.totalorder %s15, 1
    %p126 = por %p124, %p125
    %p127 = scmp.ne.s32.totalorder %s119, %s122
    %p128 = scmp.eq.s32.totalorder %s15, 0
    %p129 = por %p127, %p128
    %p130 = scmp.ne.s32.totalorder %s119, %s122
    %p131 = scmp.eq.s32.totalorder %s20, 1
    %p132 = por %p130, %p131
    %p133 = scmp.ne.s32.totalorder %s122, %s123
    %p134 = scmp.eq.s32.totalorder %s20, 0
    %p135 = por %p133, %p134
    %p136 = scmp.ne.s32.totalorder %s122, %s123
    %p137 = scmp.eq.s32.totalorder %s21, 1
    %p138 = por %p136, %p137
    %p140 = scmp.ne.s32.totalorder %s123, %s139
    %p141 = scmp.eq.s32.totalorder %s21, 0
    %p142 = por %p140, %p141
    %s144 = sadd.s32 %s143, 1
    %p147 = scmp.eq.s32.totalorder %s15, 1
    %p148 = scmp.ne.s32.totalorder %s143, %s145
    %p149 = scmp.eq.s32.totalorder %s15, 0
    %p150 = por %p148, %p149
    %p151 = scmp.ne.s32.totalorder %s143, %s145
    %p152 = scmp.eq.s32.totalorder %s20, 1
    %p153 = por %p151, %p152
    %p154 = scmp.ne.s32.totalorder %s145, %s146
    %p155 = scmp.eq.s32.totalorder %s20, 0
    %p156 = por %p154, %p155
    %p157 = scmp.ne.s32.totalorder %s145, %s146
    %p158 = scmp.eq.s32.totalorder %s21, 1
    %p159 = por %p157, %p158
    %p161 = scmp.ne.s32.totalorder %s146, %s160
    %p162 = scmp.eq.s32.totalorder %s21, 0
    %p163 = por %p161, %p162
    %s165 = sadd.s32 %s164, 1
    %p168 = scmp.eq.s32.totalorder %s15, 1
    %p169 = scmp.ne.s32.totalorder %s164, %s166
    %p170 = scmp.eq.s32.totalorder %s15, 0
    %p171 = por %p169, %p170
    %p172 = scmp.ne.s32.totalorder %s164, %s166
    %p173 = scmp.eq.s32.totalorder %s20, 1
    %p174 = por %p172, %p173
    %p175 = scmp.ne.s32.totalorder %s166, %s167
    %p176 = scmp.eq.s32.totalorder %s20, 0
    %p177 = por %p175, %p176
    %p178 = scmp.ne.s32.totalorder %s166, %s167
    %p179 = scmp.eq.s32.totalorder %s21, 1
    %p180 = por %p178, %p179
    %p182 = scmp.ne.s32.totalorder %s167, %s181
    %p183 = scmp.eq.s32.totalorder %s21, 0
    %p184 = por %p182, %p183
    %s185 = ssub.s32 %s15, %s22
    %p186 = scmp.eq.s32.totalorder %s185, 0
    %s188 = sadd.s32 %s187, 1
    %s189 = scalar_select %p186, %s187, %s188
    %p192 = pneg %p186
    %p193 = scmp.eq.s32.totalorder %s15, 1
    %p194 = por %p192, %p193
    %p195 = scmp.ne.s32.totalorder %s187, %s190
    %p196 = scmp.eq.s32.totalorder %s15, 0
    %p197 = por %p195, %p196
    %p198 = scmp.ne.s32.totalorder %s187, %s190
    %p199 = scmp.eq.s32.totalorder %s20, 1
    %p200 = por %p198, %p199
    %p201 = scmp.ne.s32.totalorder %s190, %s191
    %p202 = scmp.eq.s32.totalorder %s20, 0
    %p203 = por %p201, %p202
    %p204 = scmp.ne.s32.totalorder %s190, %s191
    %p205 = scmp.eq.s32.totalorder %s21, 1
    %p206 = por %p204, %p205
    %p208 = scmp.ne.s32.totalorder %s191, %s207
    %p209 = scmp.eq.s32.totalorder %s21, 0
    %p210 = por %p208, %p209
    %s211 = ssub.s32 %s15, %s22
    %p212 = scmp.eq.s32.totalorder %s211, 0
    %s214 = sadd.s32 %s213, 1
    %s215 = scalar_select %p212, %s213, %s214
    %p218 = pneg %p212
    %p219 = scmp.eq.s32.totalorder %s15, 1
    %p220 = por %p218, %p219
    %p221 = scmp.ne.s32.totalorder %s213, %s216
    %p222 = scmp.eq.s32.totalorder %s15, 0
    %p223 = por %p221, %p222
    %p224 = scmp.ne.s32.totalorder %s213, %s216
    %p225 = scmp.eq.s32.totalorder %s20, 1
    %p226 = por %p224, %p225
    %p227 = scmp.ne.s32.totalorder %s216, %s217
    %p228 = scmp.eq.s32.totalorder %s20, 0
    %p229 = por %p227, %p228
    %p230 = scmp.ne.s32.totalorder %s216, %s217
    %p231 = scmp.eq.s32.totalorder %s21, 1
    %p232 = por %p230, %p231
    %p234 = scmp.ne.s32.totalorder %s217, %s233
    %p235 = scmp.eq.s32.totalorder %s21, 0
    %p236 = por %p234, %p235
    %s237 = ssub.s32 %s15, %s22
    %p238 = scmp.eq.s32.totalorder %s237, 0
    %s240 = sadd.s32 %s239, 1
    %s241 = scalar_select %p238, %s239, %s240
    %p244 = pneg %p238
    %p245 = scmp.eq.s32.totalorder %s15, 1
    %p246 = por %p244, %p245
    %p247 = scmp.ne.s32.totalorder %s239, %s242
    %p248 = scmp.eq.s32.totalorder %s15, 0
    %p249 = por %p247, %p248
    %p250 = scmp.ne.s32.totalorder %s239, %s242
    %p251 = scmp.eq.s32.totalorder %s20, 1
    %p252 = por %p250, %p251
    %p253 = scmp.ne.s32.totalorder %s242, %s243
    %p254 = scmp.eq.s32.totalorder %s20, 0
    %p255 = por %p253, %p254
    %p256 = scmp.ne.s32.totalorder %s242, %s243
    %p257 = scmp.eq.s32.totalorder %s21, 1
    %p258 = por %p256, %p257
    %p260 = scmp.ne.s32.totalorder %s243, %s259
    %p261 = scmp.eq.s32.totalorder %s21, 0
    %p262 = por %p260, %p261
    %p263 = scmp.le.s32.totalorder 1, %s15
    %p264 = scmp.lt.s32.totalorder %s15, 3
    %p265 = pnand %p263, %p264
    %p266 = pneg %p265
    // Predicated region
    $region9: #{residual_block_forward.3} parent=5 // pred_check
      _
    $region10: #{residual_block_forward.3} parent=5 // pred_check_branch
      %268 = sbr.rel (%p265) target = $region12
    $region11: #{residual_block_forward.3} parent=5 // pred_region
      %s269 = ssub.s32 %s15, 1
      // Predicated region
      $region13: #{residual_block_forward.3} parent=11 // pred_check
        %p270 = pneg %p156
      $region14: #{residual_block_forward.3} parent=11 // pred_check_branch
        %272 = sbr.rel (%p270) target = $region16
      $region15: #{residual_block_forward.3} parent=11 // pred_region
        _
      $region16: #{residual_block_forward.3} parent=11 // pred_fallthru
        _
      // Predicated region
      $region17: #{residual_block_forward.3} parent=11 // pred_check
        %p273 = pneg %p177
      $region18: #{residual_block_forward.3} parent=11 // pred_check_branch
        %275 = sbr.rel (%p273) target = $region20
      $region19: #{residual_block_forward.3} parent=11 // pred_region
        _
      $region20: #{residual_block_forward.3} parent=11 // pred_fallthru
        _
    $region12: #{residual_block_forward.3} parent=5 // pred_fallthru
      _
    %p276 = scmp.lt.s32.totalorder %s15, 2
    // Predicated region
    $region21: #{residual_block_forward.3} parent=5 // pred_check
      %p277 = pneg %p276
    $region22: #{residual_block_forward.3} parent=5 // pred_check_branch
      %279 = sbr.rel (%p277) target = $region24
    $region23: #{residual_block_forward.3} parent=5 // pred_region
      // Predicated region
      $region25: #{residual_block_forward.3} parent=23 // pred_check
        %p280 = pneg %p43
      $region26: #{residual_block_forward.3} parent=23 // pred_check_branch
        %282 = sbr.rel (%p280) target = $region28
      $region27: #{residual_block_forward.3} parent=23 // pred_region
        %s283 = smul.u32 %s15, 3
        %s284 = ssub.s32 %s283, 1
        %p285 = scmp.gt.s32.totalorder %s284, 0
        %s286 = scalar_select %p285, %s284, 0
        %p287 = scmp.lt.s32.totalorder %s286, 5
        %s288 = scalar_select %p287, %s286, 5
        %s289 = smul.addr %s288, 2
        %s290 = scalar_lea.vmem %s0, %s289
        %s291 = smul.u32 %s15, 3
        %s292 = ssub.s32 %s291, 1
        %p293 = scmp.gt.s32.totalorder %s292, 0
        %s294 = scalar_select %p293, %s292, 0
      $region28: #{residual_block_forward.3} parent=23 // pred_fallthru
        _
      // Predicated region
      $region29: #{residual_block_forward.3} parent=23 // pred_check
        %p295 = pneg %p69
      $region30: #{residual_block_forward.3} parent=23 // pred_check_branch
        %297 = sbr.rel (%p295) target = $region32
      $region31: #{residual_block_forward.3} parent=23 // pred_region
        %s298 = smul.u32 3, %s15
        %p299 = scmp.lt.s32.totalorder %s298, 5
        %s300 = scalar_select %p299, %s298, 5
        %s301 = smul.addr %s300, 2
        %s302 = scalar_lea.vmem %s1, %s301
        %s303 = smul.u32 3, %s15
      $region32: #{residual_block_forward.3} parent=23 // pred_fallthru
        _
      // Predicated region
      $region33: #{residual_block_forward.3} parent=23 // pred_check
        %p304 = pneg %p103
      $region34: #{residual_block_forward.3} parent=23 // pred_check_branch
        %306 = sbr.rel (%p304) target = $region36
      $region35: #{residual_block_forward.3} parent=23 // pred_region
        %s307 = sadd.s32 %s15, 1
        %s308 = smul.u32 %s307, 3
        %p309 = scmp.lt.s32.totalorder %s308, 5
        %s310 = scalar_select %p309, %s308, 5
        %p311 = scmp.lt.s32.totalorder %s310, 5
        %s312 = scalar_select %p311, %s310, 5
        %s313 = smul.addr %s312, 2
        %s314 = scalar_lea.vmem %s2, %s313
        %s315 = sadd.s32 %s15, 1
        %s316 = smul.u32 %s315, 3
        %p317 = scmp.lt.s32.totalorder %s316, 5
        %s318 = scalar_select %p317, %s316, 5
      $region36: #{residual_block_forward.3} parent=23 // pred_fallthru
        _
      // Predicated region
      $region37: #{residual_block_forward.3} parent=23 // pred_check
        %p319 = pneg %p129
      $region38: #{residual_block_forward.3} parent=23 // pred_check_branch
        %321 = sbr.rel (%p319) target = $region40
      $region39: #{residual_block_forward.3} parent=23 // pred_region
        %s322 = smul.u32 3, %s15
        %p323 = scmp.lt.s32.totalorder %s322, 5
        %s324 = scalar_select %p323, %s322, 5
        %s325 = scalar_lea.vmem %s3, %s324
        %s326 = smul.u32 3, %s15
      $region40: #{residual_block_forward.3} parent=23 // pred_fallthru
        _
    $region24: #{residual_block_forward.3} parent=5 // pred_fallthru
      _
    %p327 = scmp.le.s32.totalorder 1, %s15
    %p328 = scmp.lt.s32.totalorder %s15, 3
    %p329 = pnand %p327, %p328
    %p330 = pneg %p329
    // Predicated region
    $region41: #{residual_block_forward.3} parent=5 // pred_check
      _
    $region42: #{residual_block_forward.3} parent=5 // pred_check_branch
      %332 = sbr.rel (%p329) target = $region44
    $region43: #{residual_block_forward.3} parent=5 // pred_region
      %s333 = ssub.s32 %s15, 1
      %s334 = smul.u32 %s20, 3
      %s335 = ssub.s32 %s334, 1
      %p336 = scmp.gt.s32.totalorder %s335, 0
      %s337 = scalar_select %p336, %s335, 0
      %p338 = scmp.lt.s32.totalorder %s337, 5
      %s339 = scalar_select %p338, %s337, 5
      %s340 = smul.addr %s339, 2
      %s341 = scalar_lea.vmem %s0, %s340
      %p342 = pneg %p49
      %p343 = pneg %p46
      %s344 = smul.u32 3, %s20
      %p345 = scmp.lt.s32.totalorder %s344, 5
      %s346 = scalar_select %p345, %s344, 5
      %s347 = smul.addr %s346, 2
      %s348 = scalar_lea.vmem %s1, %s347
      %p349 = pneg %p75
      %p350 = pneg %p72
      %s351 = sadd.s32 %s20, 1
      %s352 = smul.u32 %s351, 3
      %p353 = scmp.lt.s32.totalorder %s352, 5
      %s354 = scalar_select %p353, %s352, 5
      %p355 = scmp.lt.s32.totalorder %s354, 5
      %s356 = scalar_select %p355, %s354, 5
      %s357 = smul.addr %s356, 2
      %s358 = scalar_lea.vmem %s2, %s357
      %p359 = pneg %p109
      %p360 = pneg %p106
      %s361 = smul.u32 3, %s20
      %p362 = scmp.lt.s32.totalorder %s361, 5
      %s363 = scalar_select %p362, %s361, 5
      %s364 = scalar_lea.vmem %s3, %s363
      %p365 = pneg %p135
      %p366 = pneg %p132
      %p367 = pneg %p156
      %p368 = pneg %p153
      %p369 = pneg %p177
      %p370 = pneg %p174
      %p371 = pneg %p203
      %p372 = pneg %p200
      %s373 = smul.u32 3, %s20
      %p374 = scmp.lt.s32.totalorder %s373, 5
      %s375 = scalar_select %p374, %s373, 5
      %s376 = smul.addr %s375, 8
      %s377 = scalar_lea.vmem %s6, %s376
      %p378 = pneg %p229
      %p379 = pneg %p226
      %s380 = smul.u32 3, %s20
      %p381 = scmp.lt.s32.totalorder %s380, 5
      %s382 = scalar_select %p381, %s380, 5
      %s383 = smul.addr %s382, 8
      %s384 = scalar_lea.vmem %s7, %s383
      %p385 = pneg %p255
      %p386 = pneg %p252
      %p387 = scmp.lt.s32.totalorder %s20, 1
      %s388 = scalar_select %p387, %s20, 1
      %s389 = smul.addr %s388, 8
      %s390 = scalar_lea.vmem %s8, %s389
      %s391 = smul.u32 %s20, 3
      %s392 = ssub.s32 %s391, 1
      %p393 = scmp.gt.s32.totalorder %s392, 0
      %s394 = scalar_select %p393, %s392, 0
      %p395 = scmp.lt.s32.totalorder %s394, 5
      %s396 = scalar_select %p395, %s394, 5
      %s397 = smul.addr %s396, 2
      %s398 = scalar_lea.vmem %s0, %s397
      %s399 = smul.u32 %s20, 3
      %s400 = ssub.s32 %s399, 1
      %p401 = scmp.gt.s32.totalorder %s400, 0
      %s402 = scalar_select %p401, %s400, 0
      %s403 = smul.u32 3, %s20
      %p404 = scmp.lt.s32.totalorder %s403, 5
      %s405 = scalar_select %p404, %s403, 5
      %s406 = smul.addr %s405, 2
      %s407 = scalar_lea.vmem %s1, %s406
      %s408 = smul.u32 3, %s20
      %s409 = sadd.s32 %s20, 1
      %s410 = smul.u32 %s409, 3
      %p411 = scmp.lt.s32.totalorder %s410, 5
      %s412 = scalar_select %p411, %s410, 5
      %p413 = scmp.lt.s32.totalorder %s412, 5
      %s414 = scalar_select %p413, %s412, 5
      %s415 = smul.addr %s414, 2
      %s416 = scalar_lea.vmem %s2, %s415
      %s417 = sadd.s32 %s20, 1
      %s418 = smul.u32 %s417, 3
      %p419 = scmp.lt.s32.totalorder %s418, 5
      %s420 = scalar_select %p419, %s418, 5
      %s421 = smul.u32 3, %s20
      %p422 = scmp.lt.s32.totalorder %s421, 5
      %s423 = scalar_select %p422, %s421, 5
      %s424 = scalar_lea.vmem %s3, %s423
      %s425 = smul.u32 3, %s20
      %s426 = smul.u32 3, %s20
      %p427 = scmp.lt.s32.totalorder %s426, 5
      %s428 = scalar_select %p427, %s426, 5
      %s429 = smul.addr %s428, 8
      %s430 = scalar_lea.vmem %s6, %s429
      %s431 = smul.u32 3, %s20
      %s432 = smul.u32 3, %s20
      %p433 = scmp.lt.s32.totalorder %s432, 5
      %s434 = scalar_select %p433, %s432, 5
      %s435 = smul.addr %s434, 8
      %s436 = scalar_lea.vmem %s7, %s435
      %s437 = smul.u32 3, %s20
      %p438 = scmp.lt.s32.totalorder %s20, 1
      %s439 = scalar_select %p438, %s20, 1
      %s440 = smul.addr %s439, 8
      %s441 = scalar_lea.vmem %s8, %s440
      %v443 = vld [vmem:[%s407] sm:$0x3f]
      %v444 = vld [vmem:[%s398] sm:$0x3]
      %v445 = vld [vmem:[%s416] sm:$0x3]
      %v447 = vcombine.high %v443, %v443
      %v449 = vunpack.c.l.s4 1983009808
      %v450 = vunpack.c.0.s8 %v449
      %v451 = vlaneseq
      %v452 = vshrl.u32 %v451, 7
      %v453 = vsub.s32 %v450, %v452
      %v454 = vrot.slane %v443, %v453
      %v456 = vunpack.c.l.s4 1983009808
      %v457 = vunpack.c.0.s8 %v456
      %v458 = vlaneseq
      %v459 = vshrl.u32 %v458, 7
      %v460 = vsub.s32 %v457, %v459
      %v461 = vrot.slane %v447, %v460
      %v462 = vcombine.high %v454, %v454
      %v463 = vld [vmem:[%s4] sm:$0xf]
      %s464 = scalar_lea.vmem %s4, 4
      %v465 = vld [vmem:[%s464] sm:$0xf]
      %467 = vrot.lane.b32.xlu0 %v444, 18
      %v468 = vpop.permute.xlu0 %467
      %469 = vrot.lane.b32.xlu0 %v454, 18
      %v470 = vpop.permute.xlu0 %469
      %471 = vrot.lane.b32.xlu0 %v462, 18
      %v472 = vpop.permute.xlu0 %471
      %473 = vrot.lane.b32.xlu0 %v461, 18
      %v474 = vpop.permute.xlu0 %473
      %vm475 = vcmask 146432
      %v476 = vsel %vm475, %v468, %v470
      %v477 = vsel %vm475, %v470, %v472
      %v478 = vsel %vm475, %v472, %v474
      %vm479 = vcmask 31744
      %v481 = vsel %vm479, %v465, 0
      %vm483 = vcmask 1041408
      %v485 = vsel %vm483, %v476, 0
      %v488 = vsel %vm483, %v477, 0
      %v491 = vsel %vm483, %v478, 0
      %493 = vmatprep.subr.bf16.mxu0 %v488
      %494 = vmatpush1.bf16.msra.mxu0 %v485
      %495 = vmatprep.subr.bf16.mxu0 0
      %496 = vmatpush1.bf16.msra.mxu0 0
      %497 = vmatprep.subr.bf16.mxu0 0
      %498 = vmatpush1.bf16.msra.mxu0 0
      %499 = vmatprep.subr.bf16.mxu0 0
      %500 = vmatpush1.bf16.msra.mxu0 0
      %501 = vmatprep.subr.bf16.mxu0 0
      %502 = vmatpush1.bf16.msra.mxu0 0
      %503 = vmatprep.subr.bf16.mxu0 0
      %504 = vmatpush1.bf16.msra.mxu0 0
      %505 = vmatprep.subr.bf16.mxu0 0
      %506 = vmatpush1.bf16.msra.mxu0 0
      %507 = vmatprep.subr.bf16.mxu0 0
      %508 = vmatpush1.bf16.msra.mxu0 0
      %509 = vmatprep.subr.bf16.mxu0 0
      %510 = vmatpush1.bf16.msra.mxu0 0
      %511 = vmatprep.subr.bf16.mxu0 0
      %512 = vmatpush1.bf16.msra.mxu0 0
      %513 = vmatprep.subr.bf16.mxu0 0
      %514 = vmatpush1.bf16.msra.mxu0 0
      %515 = vmatprep.subr.bf16.mxu0 0
      %516 = vmatpush1.bf16.msra.mxu0 0
      %517 = vmatprep.subr.bf16.mxu0 0
      %518 = vmatpush1.bf16.msra.mxu0 0
      %519 = vmatprep.subr.bf16.mxu0 0
      %520 = vmatpush1.bf16.msra.mxu0 0
      %521 = vmatprep.subr.bf16.mxu0 0
      %522 = vmatpush1.bf16.msra.mxu0 0
      %523 = vmatprep.subr.bf16.mxu0 0
      %524 = vmatpush1.bf16.msra.mxu0 0
      %525 = vmatprep.mubr.bf16.mxu0 0
      %526 = vmatmul.mubr.bf16.gmra.mrb[0].mxu0 %v481
      %v527 = vpop.f32.mrb[0].mxu0
      %v528 = vadd.f32 0.0, %v527
      %v529 = vpop.f32.mrb[0].mxu0
      %v530 = vadd.f32 0.0, %v529
      %v531 = vpop.f32.mrb[0].mxu0
      %v532 = vpop.f32.mrb[0].mxu0
      %533 = vdwg.mxu0
      %534 = vmatprep.subr.bf16.mxu0 0
      %535 = vmatpush1.bf16.msra.mxu0 %v491
      %536 = vmatprep.subr.bf16.mxu0 0
      %537 = vmatpush1.bf16.msra.mxu0 0
      %538 = vmatprep.subr.bf16.mxu0 0
      %539 = vmatpush1.bf16.msra.mxu0 0
      %540 = vmatprep.subr.bf16.mxu0 0
      %541 = vmatpush1.bf16.msra.mxu0 0
      %542 = vmatprep.subr.bf16.mxu0 0
      %543 = vmatpush1.bf16.msra.mxu0 0
      %544 = vmatprep.subr.bf16.mxu0 0
      %545 = vmatpush1.bf16.msra.mxu0 0
      %546 = vmatprep.subr.bf16.mxu0 0
      %547 = vmatpush1.bf16.msra.mxu0 0
      %548 = vmatprep.subr.bf16.mxu0 0
      %549 = vmatpush1.bf16.msra.mxu0 0
      %550 = vmatprep.subr.bf16.mxu0 0
      %551 = vmatpush1.bf16.msra.mxu0 0
      %552 = vmatprep.subr.bf16.mxu0 0
      %553 = vmatpush1.bf16.msra.mxu0 0
      %554 = vmatprep.subr.bf16.mxu0 0
      %555 = vmatpush1.bf16.msra.mxu0 0
      %556 = vmatprep.subr.bf16.mxu0 0
      %557 = vmatpush1.bf16.msra.mxu0 0
      %558 = vmatprep.subr.bf16.mxu0 0
      %559 = vmatpush1.bf16.msra.mxu0 0
      %560 = vmatprep.subr.bf16.mxu0 0
      %561 = vmatpush1.bf16.msra.mxu0 0
      %562 = vmatprep.subr.bf16.mxu0 0
      %563 = vmatpush1.bf16.msra.mxu0 0
      %564 = vmatprep.subr.bf16.mxu0 0
      %565 = vmatpush1.bf16.msra.mxu0 0
      %566 = vmatprep.mubr.bf16.mxu0 0
      %567 = vmatmul.mubr.bf16.gmra.mrb[0].mxu0 %v481
      %v568 = vpop.f32.mrb[0].mxu0
      %v569 = vadd.f32 0.0, %v568
      %v570 = vpop.f32.mrb[0].mxu0
      %v571 = vpop.f32.mrb[0].mxu0
      %v572 = vpop.f32.mrb[0].mxu0
      %573 = vdwg.mxu0
      %574 = vrot.lane.b32.xlu0 %v444, 19
      %v575 = vpop.permute.xlu0 %574
      %576 = vrot.lane.b32.xlu0 %v454, 19
      %v577 = vpop.permute.xlu0 %576
      %578 = vrot.lane.b32.xlu0 %v462, 19
      %v579 = vpop.permute.xlu0 %578
      %580 = vrot.lane.b32.xlu0 %v461, 19
      %v581 = vpop.permute.xlu0 %580
      %vm582 = vcmask 154624
      %v583 = vsel %vm582, %v575, %v577
      %v584 = vsel %vm582, %v577, %v579
      %v585 = vsel %vm582, %v579, %v581
      %v587 = vsel %vm479, %v463, 0
      %v590 = vsel %vm483, %v583, 0
      %v593 = vsel %vm483, %v584, 0
      %v596 = vsel %vm483, %v585, 0
      %598 = vmatprep.subr.bf16.mxu0 %v593
      %599 = vmatpush1.bf16.msra.mxu0 %v590
      %600 = vmatprep.subr.bf16.mxu0 0
      %601 = vmatpush1.bf16.msra.mxu0 0
      %602 = vmatprep.subr.bf16.mxu0 0
      %603 = vmatpush1.bf16.msra.mxu0 0
      %604 = vmatprep.subr.bf16.mxu0 0
      %605 = vmatpush1.bf16.msra.mxu0 0
      %606 = vmatprep.subr.bf16.mxu0 0
      %607 = vmatpush1.bf16.msra.mxu0 0
      %608 = vmatprep.subr.bf16.mxu0 0
      %609 = vmatpush1.bf16.msra.mxu0 0
      %610 = vmatprep.subr.bf16.mxu0 0
      %611 = vmatpush1.bf16.msra.mxu0 0
      %612 = vmatprep.subr.bf16.mxu0 0
      %613 = vmatpush1.bf16.msra.mxu0 0
      %614 = vmatprep.subr.bf16.mxu0 0
      %615 = vmatpush1.bf16.msra.mxu0 0
      %616 = vmatprep.subr.bf16.mxu0 0
      %617 = vmatpush1.bf16.msra.mxu0 0
      %618 = vmatprep.subr.bf16.mxu0 0
      %619 = vmatpush1.bf16.msra.mxu0 0
      %620 = vmatprep.subr.bf16.mxu0 0
      %621 = vmatpush1.bf16.msra.mxu0 0
      %622 = vmatprep.subr.bf16.mxu0 0
      %623 = vmatpush1.bf16.msra.mxu0 0
      %624 = vmatprep.subr.bf16.mxu0 0
      %625 = vmatpush1.bf16.msra.mxu0 0
      %626 = vmatprep.subr.bf16.mxu0 0
      %627 = vmatpush1.bf16.msra.mxu0 0
      %628 = vmatprep.subr.bf16.mxu0 0
      %629 = vmatpush1.bf16.msra.mxu0 0
      %630 = vmatprep.mubr.bf16.mxu0 0
      %631 = vmatmul.mubr.bf16.gmra.mrb[0].mxu0 %v587
      %v632 = vpop.f32.mrb[0].mxu0
      %v633 = vadd.f32 %v528, %v632
      %v634 = vpop.f32.mrb[0].mxu0
      %v635 = vadd.f32 %v530, %v634
      %v636 = vpop.f32.mrb[0].mxu0
      %v637 = vpop.f32.mrb[0].mxu0
      %638 = vdwg.mxu0
      %639 = vmatprep.subr.bf16.mxu0 0
      %640 = vmatpush1.bf16.msra.mxu0 %v596
      %641 = vmatprep.subr.bf16.mxu0 0
      %642 = vmatpush1.bf16.msra.mxu0 0
      %643 = vmatprep.subr.bf16.mxu0 0
      %644 = vmatpush1.bf16.msra.mxu0 0
      %645 = vmatprep.subr.bf16.mxu0 0
      %646 = vmatpush1.bf16.msra.mxu0 0
      %647 = vmatprep.subr.bf16.mxu0 0
      %648 = vmatpush1.bf16.msra.mxu0 0
      %649 = vmatprep.subr.bf16.mxu0 0
      %650 = vmatpush1.bf16.msra.mxu0 0
      %651 = vmatprep.subr.bf16.mxu0 0
      %652 = vmatpush1.bf16.msra.mxu0 0
      %653 = vmatprep.subr.bf16.mxu0 0
      %654 = vmatpush1.bf16.msra.mxu0 0
      %655 = vmatprep.subr.bf16.mxu0 0
      %656 = vmatpush1.bf16.msra.mxu0 0
      %657 = vmatprep.subr.bf16.mxu0 0
      %658 = vmatpush1.bf16.msra.mxu0 0
      %659 = vmatprep.subr.bf16.mxu0 0
      %660 = vmatpush1.bf16.msra.mxu0 0
      %661 = vmatprep.subr.bf16.mxu0 0
      %662 = vmatpush1.bf16.msra.mxu0 0
      %663 = vmatprep.subr.bf16.mxu0 0
      %664 = vmatpush1.bf16.msra.mxu0 0
      %665 = vmatprep.subr.bf16.mxu0 0
      %666 = vmatpush1.bf16.msra.mxu0 0
      %667 = vmatprep.subr.bf16.mxu0 0
      %668 = vmatpush1.bf16.msra.mxu0 0
      %669 = vmatprep.subr.bf16.mxu0 0
      %670 = vmatpush1.bf16.msra.mxu0 0
      %671 = vmatprep.mubr.bf16.mxu0 0
      %672 = vmatmul.mubr.bf16.gmra.mrb[0].mxu0 %v587
      %v673 = vpop.f32.mrb[0].mxu0
      %v674 = vadd.f32 %v569, %v673
      %v675 = vpop.f32.mrb[0].mxu0
      %v676 = vpop.f32.mrb[0].mxu0
      %v677 = vpop.f32.mrb[0].mxu0
      %678 = vdwg.mxu0
      %s679 = scalar_lea.vmem %s4, 8
      %v680 = vld [vmem:[%s679] sm:$0xf]
      %681 = vrot.lane.b32.xlu0 %v444, 17
      %v682 = vpop.permute.xlu0 %681
      %683 = vrot.lane.b32.xlu0 %v454, 17
      %v684 = vpop.permute.xlu0 %683
      %685 = vrot.lane.b32.xlu0 %v462, 17
      %v686 = vpop.permute.xlu0 %685
      %687 = vrot.lane.b32.xlu0 %v461, 17
      %v688 = vpop.permute.xlu0 %687
      %vm689 = vcmask 138240
      %v690 = vsel %vm689, %v682, %v684
      %v691 = vsel %vm689, %v684, %v686
      %v692 = vsel %vm689, %v686, %v688
      %v694 = vsel %vm479, %v680, 0
      %v697 = vsel %vm483, %v690, 0
      %v700 = vsel %vm483, %v691, 0
      %v703 = vsel %vm483, %v692, 0
      %705 = vmatprep.subr.bf16.mxu0 %v700
      %706 = vmatpush1.bf16.msra.mxu0 %v697
      %707 = vmatprep.subr.bf16.mxu0 0
      %708 = vmatpush1.bf16.msra.mxu0 0
      %709 = vmatprep.subr.bf16.mxu0 0
      %710 = vmatpush1.bf16.msra.mxu0 0
      %711 = vmatprep.subr.bf16.mxu0 0
      %712 = vmatpush1.bf16.msra.mxu0 0
      %713 = vmatprep.subr.bf16.mxu0 0
      %714 = vmatpush1.bf16.msra.mxu0 0
      %715 = vmatprep.subr.bf16.mxu0 0
      %716 = vmatpush1.bf16.msra.mxu0 0
      %717 = vmatprep.subr.bf16.mxu0 0
      %718 = vmatpush1.bf16.msra.mxu0 0
      %719 = vmatprep.subr.bf16.mxu0 0
      %720 = vmatpush1.bf16.msra.mxu0 0
      %721 = vmatprep.subr.bf16.mxu0 0
      %722 = vmatpush1.bf16.msra.mxu0 0
      %723 = vmatprep.subr.bf16.mxu0 0
      %724 = vmatpush1.bf16.msra.mxu0 0
      %725 = vmatprep.subr.bf16.mxu0 0
      %726 = vmatpush1.bf16.msra.mxu0 0
      %727 = vmatprep.subr.bf16.mxu0 0
      %728 = vmatpush1.bf16.msra.mxu0 0
      %729 = vmatprep.subr.bf16.mxu0 0
      %730 = vmatpush1.bf16.msra.mxu0 0
      %731 = vmatprep.subr.bf16.mxu0 0
      %732 = vmatpush1.bf16.msra.mxu0 0
      %733 = vmatprep.subr.bf16.mxu0 0
      %734 = vmatpush1.bf16.msra.mxu0 0
      %735 = vmatprep.subr.bf16.mxu0 0
      %736 = vmatpush1.bf16.msra.mxu0 0
      %737 = vmatprep.mubr.bf16.mxu0 0
      %738 = vmatmul.mubr.bf16.gmra.mrb[0].mxu0 %v694
      %v739 = vpop.f32.mrb[0].mxu0
      %v740 = vadd.f32 0.0, %v739
      %v741 = vpop.f32.mrb[0].mxu0
      %v742 = vadd.f32 0.0, %v741
      %v743 = vpop.f32.mrb[0].mxu0
      %v744 = vpop.f32.mrb[0].mxu0
      %745 = vdwg.mxu0
      %746 = vmatprep.subr.bf16.mxu0 0
      %747 = vmatpush1.bf16.msra.mxu0 %v703
      %748 = vmatprep.subr.bf16.mxu0 0
      %749 = vmatpush1.bf16.msra.mxu0 0
      %750 = vmatprep.subr.bf16.mxu0 0
      %751 = vmatpush1.bf16.msra.mxu0 0
      %752 = vmatprep.subr.bf16.mxu0 0
      %753 = vmatpush1.bf16.msra.mxu0 0
      %754 = vmatprep.subr.bf16.mxu0 0
      %755 = vmatpush1.bf16.msra.mxu0 0
      %756 = vmatprep.subr.bf16.mxu0 0
      %757 = vmatpush1.bf16.msra.mxu0 0
      %758 = vmatprep.subr.bf16.mxu0 0
      %759 = vmatpush1.bf16.msra.mxu0 0
      %760 = vmatprep.subr.bf16.mxu0 0
      %761 = vmatpush1.bf16.msra.mxu0 0
      %762 = vmatprep.subr.bf16.mxu0 0
      %763 = vmatpush1.bf16.msra.mxu0 0
      %764 = vmatprep.subr.bf16.mxu0 0
      %765 = vmatpush1.bf16.msra.mxu0 0
      %766 = vmatprep.subr.bf16.mxu0 0
      %767 = vmatpush1.bf16.msra.mxu0 0
      %768 = vmatprep.subr.bf16.mxu0 0
      %769 = vmatpush1.bf16.msra.mxu0 0
      %770 = vmatprep.subr.bf16.mxu0 0
      %771 = vmatpush1.bf16.msra.mxu0 0
      %772 = vmatprep.subr.bf16.mxu0 0
      %773 = vmatpush1.bf16.msra.mxu0 0
      %774 = vmatprep.subr.bf16.mxu0 0
      %775 = vmatpush1.bf16.msra.mxu0 0
      %776 = vmatprep.subr.bf16.mxu0 0
      %777 = vmatpush1.bf16.msra.mxu0 0
      %778 = vmatprep.mubr.bf16.mxu0 0
      %779 = vmatmul.mubr.bf16.gmra.mrb[0].mxu0 %v694
      %v780 = vpop.f32.mrb[0].mxu0
      %v781 = vadd.f32 0.0, %v780
      %v782 = vpop.f32.mrb[0].mxu0
      %v783 = vpop.f32.mrb[0].mxu0
      %v784 = vpop.f32.mrb[0].mxu0
      %785 = vdwg.mxu0
      %v786 = vadd.f32 %v633, %v740
      %v787 = vadd.f32 %v635, %v742
      %v788 = vadd.f32 %v674, %v781
      %s789 = scalar_lea.vmem %s4, 12
      %v790 = vld [vmem:[%s789] sm:$0xf]
      %791 = vrot.lane.b32.xlu0 %v444, 1
      %v792 = vpop.permute.xlu0 %791
      %793 = vrot.lane.b32.xlu0 %v454, 1
      %v794 = vpop.permute.xlu0 %793
      %795 = vrot.lane.b32.xlu0 %v462, 1
      %v796 = vpop.permute.xlu0 %795
      %797 = vrot.lane.b32.xlu0 %v461, 1
      %v798 = vpop.permute.xlu0 %797
      %vm799 = vcmask 7168
      %v800 = vsel %vm799, %v792, %v794
      %v801 = vsel %vm799, %v794, %v796
      %v802 = vsel %vm799, %v796, %v798
      %v804 = vsel %vm479, %v790, 0
      %v807 = vsel %vm483, %v800, 0
      %v810 = vsel %vm483, %v801, 0
      %v813 = vsel %vm483, %v802, 0
      %815 = vmatprep.subr.bf16.mxu0 %v810
      %816 = vmatpush1.bf16.msra.mxu0 %v807
      %817 = vmatprep.subr.bf16.mxu0 0
      %818 = vmatpush1.bf16.msra.mxu0 0
      %819 = vmatprep.subr.bf16.mxu0 0
      %820 = vmatpush1.bf16.msra.mxu0 0
      %821 = vmatprep.subr.bf16.mxu0 0
      %822 = vmatpush1.bf16.msra.mxu0 0
      %823 = vmatprep.subr.bf16.mxu0 0
      %824 = vmatpush1.bf16.msra.mxu0 0
      %825 = vmatprep.subr.bf16.mxu0 0
      %826 = vmatpush1.bf16.msra.mxu0 0
      %827 = vmatprep.subr.bf16.mxu0 0
      %828 = vmatpush1.bf16.msra.mxu0 0
      %829 = vmatprep.subr.bf16.mxu0 0
      %830 = vmatpush1.bf16.msra.mxu0 0
      %831 = vmatprep.subr.bf16.mxu0 0
      %832 = vmatpush1.bf16.msra.mxu0 0
      %833 = vmatprep.subr.bf16.mxu0 0
      %834 = vmatpush1.bf16.msra.mxu0 0
      %835 = vmatprep.subr.bf16.mxu0 0
      %836 = vmatpush1.bf16.msra.mxu0 0
      %837 = vmatprep.subr.bf16.mxu0 0
      %838 = vmatpush1.bf16.msra.mxu0 0
      %839 = vmatprep.subr.bf16.mxu0 0
      %840 = vmatpush1.bf16.msra.mxu0 0
      %841 = vmatprep.subr.bf16.mxu0 0
      %842 = vmatpush1.bf16.msra.mxu0 0
      %843 = vmatprep.subr.bf16.mxu0 0
      %844 = vmatpush1.bf16.msra.mxu0 0
      %845 = vmatprep.subr.bf16.mxu0 0
      %846 = vmatpush1.bf16.msra.mxu0 0
      %847 = vmatprep.mubr.bf16.mxu0 0
      %848 = vmatmul.mubr.bf16.gmra.mrb[0].mxu0 %v804
      %v849 = vpop.f32.mrb[0].mxu0
      %v850 = vadd.f32 0.0, %v849
      %v851 = vpop.f32.mrb[0].mxu0
      %v852 = vadd.f32 0.0, %v851
      %v853 = vpop.f32.mrb[0].mxu0
      %v854 = vpop.f32.mrb[0].mxu0
      %855 = vdwg.mxu0
      %856 = vmatprep.subr.bf16.mxu0 0
      %857 = vmatpush1.bf16.msra.mxu0 %v813
      %858 = vmatprep.subr.bf16.mxu0 0
      %859 = vmatpush1.bf16.msra.mxu0 0
      %860 = vmatprep.subr.bf16.mxu0 0
      %861 = vmatpush1.bf16.msra.mxu0 0
      %862 = vmatprep.subr.bf16.mxu0 0
      %863 = vmatpush1.bf16.msra.mxu0 0
      %864 = vmatprep.subr.bf16.mxu0 0
      %865 = vmatpush1.bf16.msra.mxu0 0
      %866 = vmatprep.subr.bf16.mxu0 0
      %867 = vmatpush1.bf16.msra.mxu0 0
      %868 = vmatprep.subr.bf16.mxu0 0
      %869 = vmatpush1.bf16.msra.mxu0 0
      %870 = vmatprep.subr.bf16.mxu0 0
      %871 = vmatpush1.bf16.msra.mxu0 0
      %872 = vmatprep.subr.bf16.mxu0 0
      %873 = vmatpush1.bf16.msra.mxu0 0
      %874 = vmatprep.subr.bf16.mxu0 0
      %875 = vmatpush1.bf16.msra.mxu0 0
      %876 = vmatprep.subr.bf16.mxu0 0
      %877 = vmatpush1.bf16.msra.mxu0 0
      %878 = vmatprep.subr.bf16.mxu0 0
      %879 = vmatpush1.bf16.msra.mxu0 0
      %880 = vmatprep.subr.bf16.mxu0 0
      %881 = vmatpush1.bf16.msra.mxu0 0
      %882 = vmatprep.subr.bf16.mxu0 0
      %883 = vmatpush1.bf16.msra.mxu0 0
      %884 = vmatprep.subr.bf16.mxu0 0
      %885 = vmatpush1.bf16.msra.mxu0 0
      %886 = vmatprep.subr.bf16.mxu0 0
      %887 = vmatpush1.bf16.msra.mxu0 0
      %888 = vmatprep.mubr.bf16.mxu0 0
      %889 = vmatmul.mubr.bf16.gmra.mrb[0].mxu0 %v804
      %v890 = vpop.f32.mrb[0].mxu0
      %v891 = vadd.f32 0.0, %v890
      %v892 = vpop.f32.mrb[0].mxu0
      %v893 = vpop.f32.mrb[0].mxu0
      %v894 = vpop.f32.mrb[0].mxu0
      %895 = vdwg.mxu0
      %v896 = vadd.f32 %v786, %v850
      %v897 = vadd.f32 %v787, %v852
      %v898 = vadd.f32 %v788, %v891
      %s899 = scalar_lea.vmem %s4, 16
      %v900 = vld [vmem:[%s899] sm:$0xf]
      %v902 = vsel %vm479, %v900, 0
      %v905 = vsel %vm483, %v454, 0
      %v908 = vsel %vm483, %v462, 0
      %v911 = vsel %vm483, %v461, 0
      %913 = vmatprep.subr.bf16.mxu0 %v908
      %914 = vmatpush1.bf16.msra.mxu0 %v905
      %915 = vmatprep.subr.bf16.mxu0 0
      %916 = vmatpush1.bf16.msra.mxu0 0
      %917 = vmatprep.subr.bf16.mxu0 0
      %918 = vmatpush1.bf16.msra.mxu0 0
      %919 = vmatprep.subr.bf16.mxu0 0
      %920 = vmatpush1.bf16.msra.mxu0 0
      %921 = vmatprep.subr.bf16.mxu0 0
      %922 = vmatpush1.bf16.msra.mxu0 0
      %923 = vmatprep.subr.bf16.mxu0 0
      %924 = vmatpush1.bf16.msra.mxu0 0
      %925 = vmatprep.subr.bf16.mxu0 0
      %926 = vmatpush1.bf16.msra.mxu0 0
      %927 = vmatprep.subr.bf16.mxu0 0
      %928 = vmatpush1.bf16.msra.mxu0 0
      %929 = vmatprep.subr.bf16.mxu0 0
      %930 = vmatpush1.bf16.msra.mxu0 0
      %931 = vmatprep.subr.bf16.mxu0 0
      %932 = vmatpush1.bf16.msra.mxu0 0
      %933 = vmatprep.subr.bf16.mxu0 0
      %934 = vmatpush1.bf16.msra.mxu0 0
      %935 = vmatprep.subr.bf16.mxu0 0
      %936 = vmatpush1.bf16.msra.mxu0 0
      %937 = vmatprep.subr.bf16.mxu0 0
      %938 = vmatpush1.bf16.msra.mxu0 0
      %939 = vmatprep.subr.bf16.mxu0 0
      %940 = vmatpush1.bf16.msra.mxu0 0
      %941 = vmatprep.subr.bf16.mxu0 0
      %942 = vmatpush1.bf16.msra.mxu0 0
      %943 = vmatprep.subr.bf16.mxu0 0
      %944 = vmatpush1.bf16.msra.mxu0 0
      %945 = vmatprep.mubr.bf16.mxu0 0
      %946 = vmatmul.mubr.bf16.gmra.mrb[0].mxu0 %v902
      %v947 = vpop.f32.mrb[0].mxu0
      %v948 = vadd.f32 0.0, %v947
      %v949 = vpop.f32.mrb[0].mxu0
      %v950 = vadd.f32 0.0, %v949
      %v951 = vpop.f32.mrb[0].mxu0
      %v952 = vpop.f32.mrb[0].mxu0
      %953 = vdwg.mxu0
      %954 = vmatprep.subr.bf16.mxu0 0
      %955 = vmatpush1.bf16.msra.mxu0 %v911
      %956 = vmatprep.subr.bf16.mxu0 0
      %957 = vmatpush1.bf16.msra.mxu0 0
      %958 = vmatprep.subr.bf16.mxu0 0
      %959 = vmatpush1.bf16.msra.mxu0 0
      %960 = vmatprep.subr.bf16.mxu0 0
      %961 = vmatpush1.bf16.msra.mxu0 0
      %962 = vmatprep.subr.bf16.mxu0 0
      %963 = vmatpush1.bf16.msra.mxu0 0
      %964 = vmatprep.subr.bf16.mxu0 0
      %965 = vmatpush1.bf16.msra.mxu0 0
      %966 = vmatprep.subr.bf16.mxu0 0
      %967 = vmatpush1.bf16.msra.mxu0 0
      %968 = vmatprep.subr.bf16.mxu0 0
      %969 = vmatpush1.bf16.msra.mxu0 0
      %970 = vmatprep.subr.bf16.mxu0 0
      %971 = vmatpush1.bf16.msra.mxu0 0
      %972 = vmatprep.subr.bf16.mxu0 0
      %973 = vmatpush1.bf16.msra.mxu0 0
      %974 = vmatprep.subr.bf16.mxu0 0
      %975 = vmatpush1.bf16.msra.mxu0 0
      %976 = vmatprep.subr.bf16.mxu0 0
      %977 = vmatpush1.bf16.msra.mxu0 0
      %978 = vmatprep.subr.bf16.mxu0 0
      %979 = vmatpush1.bf16.msra.mxu0 0
      %980 = vmatprep.subr.bf16.mxu0 0
      %981 = vmatpush1.bf16.msra.mxu0 0
      %982 = vmatprep.subr.bf16.mxu0 0
      %983 = vmatpush1.bf16.msra.mxu0 0
      %984 = vmatprep.subr.bf16.mxu0 0
      %985 = vmatpush1.bf16.msra.mxu0 0
      %986 = vmatprep.mubr.bf16.mxu0 0
      %987 = vmatmul.mubr.bf16.gmra.mrb[0].mxu0 %v902
      %v988 = vpop.f32.mrb[0].mxu0
      %v989 = vadd.f32 0.0, %v988
      %v990 = vpop.f32.mrb[0].mxu0
      %v991 = vpop.f32.mrb[0].mxu0
      %v992 = vpop.f32.mrb[0].mxu0
      %993 = vdwg.mxu0
      %v994 = vadd.f32 %v896, %v948
      %v995 = vadd.f32 %v897, %v950
      %v996 = vadd.f32 %v898, %v989
      %s997 = scalar_lea.vmem %s4, 20
      %v998 = vld [vmem:[%s997] sm:$0xf]
      %1000 = vrot.lane.b32.xlu0 %v454, 127
      %v1001 = vpop.permute.xlu0 %1000
      %1002 = vrot.lane.b32.xlu0 %v462, 127
      %v1003 = vpop.permute.xlu0 %1002
      %1004 = vrot.lane.b32.xlu0 %v461, 127
      %v1005 = vpop.permute.xlu0 %1004
      %1006 = vrot.lane.b32.xlu0 %v445, 127
      %v1007 = vpop.permute.xlu0 %1006
      %vm1008 = vcmask 1039360
      %v1009 = vsel %vm1008, %v1001, %v1003
      %v1010 = vsel %vm1008, %v1003, %v1005
      %v1011 = vsel %vm1008, %v1005, %v1007
      %v1013 = vsel %vm479, %v998, 0
      %v1016 = vsel %vm483, %v1009, 0
      %v1019 = vsel %vm483, %v1010, 0
      %v1022 = vsel %vm483, %v1011, 0
      %1024 = vmatprep.subr.bf16.mxu0 %v1019
      %1025 = vmatpush1.bf16.msra.mxu0 %v1016
      %1026 = vmatprep.subr.bf16.mxu0 0
      %1027 = vmatpush1.bf16.msra.mxu0 0
      %1028 = vmatprep.subr.bf16.mxu0 0
      %1029 = vmatpush1.bf16.msra.mxu0 0
      %1030 = vmatprep.subr.bf16.mxu0 0
      %1031 = vmatpush1.bf16.msra.mxu0 0
      %1032 = vmatprep.subr.bf16.mxu0 0
      %1033 = vmatpush1.bf16.msra.mxu0 0
      %1034 = vmatprep.subr.bf16.mxu0 0
      %1035 = vmatpush1.bf16.msra.mxu0 0
      %1036 = vmatprep.subr.bf16.mxu0 0
      %1037 = vmatpush1.bf16.msra.mxu0 0
      %1038 = vmatprep.subr.bf16.mxu0 0
      %1039 = vmatpush1.bf16.msra.mxu0 0
      %1040 = vmatprep.subr.bf16.mxu0 0
      %1041 = vmatpush1.bf16.msra.mxu0 0
      %1042 = vmatprep.subr.bf16.mxu0 0
      %1043 = vmatpush1.bf16.msra.mxu0 0
      %1044 = vmatprep.subr.bf16.mxu0 0
      %1045 = vmatpush1.bf16.msra.mxu0 0
      %1046 = vmatprep.subr.bf16.mxu0 0
      %1047 = vmatpush1.bf16.msra.mxu0 0
      %1048 = vmatprep.subr.bf16.mxu0 0
      %1049 = vmatpush1.bf16.msra.mxu0 0
      %1050 = vmatprep.subr.bf16.mxu0 0
      %1051 = vmatpush1.bf16.msra.mxu0 0
      %1052 = vmatprep.subr.bf16.mxu0 0
      %1053 = vmatpush1.bf16.msra.mxu0 0
      %1054 = vmatprep.subr.bf16.mxu0 0
      %1055 = vmatpush1.bf16.msra.mxu0 0
      %1056 = vmatprep.mubr.bf16.mxu0 0
      %1057 = vmatmul.mubr.bf16.gmra.mrb[0].mxu0 %v1013
      %v1058 = vpop.f32.mrb[0].mxu0
      %v1059 = vadd.f32 0.0, %v1058
      %v1060 = vpop.f32.mrb[0].mxu0
      %v1061 = vadd.f32 0.0, %v1060
      %v1062 = vpop.f32.mrb[0].mxu0
      %v1063 = vpop.f32.mrb[0].mxu0
      %1064 = vdwg.mxu0
      %1065 = vmatprep.subr.bf16.mxu0 0
      %1066 = vmatpush1.bf16.msra.mxu0 %v1022
      %1067 = vmatprep.subr.bf16.mxu0 0
      %1068 = vmatpush1.bf16.msra.mxu0 0
      %1069 = vmatprep.subr.bf16.mxu0 0
      %1070 = vmatpush1.bf16.msra.mxu0 0
      %1071 = vmatprep.subr.bf16.mxu0 0
      %1072 = vmatpush1.bf16.msra.mxu0 0
      %1073 = vmatprep.subr.bf16.mxu0 0
      %1074 = vmatpush1.bf16.msra.mxu0 0
      %1075 = vmatprep.subr.bf16.mxu0 0
      %1076 = vmatpush1.bf16.msra.mxu0 0
      %1077 = vmatprep.subr.bf16.mxu0 0
      %1078 = vmatpush1.bf16.msra.mxu0 0
      %1079 = vmatprep.subr.bf16.mxu0 0
      %1080 = vmatpush1.bf16.msra.mxu0 0
      %1081 = vmatprep.subr.bf16.mxu0 0
      %1082 = vmatpush1.bf16.msra.mxu0 0
      %1083 = vmatprep.subr.bf16.mxu0 0
      %1084 = vmatpush1.bf16.msra.mxu0 0
      %1085 = vmatprep.subr.bf16.mxu0 0
      %1086 = vmatpush1.bf16.msra.mxu0 0
      %1087 = vmatprep.subr.bf16.mxu0 0
      %1088 = vmatpush1.bf16.msra.mxu0 0
      %1089 = vmatprep.subr.bf16.mxu0 0
      %1090 = vmatpush1.bf16.msra.mxu0 0
      %1091 = vmatprep.subr.bf16.mxu0 0
      %1092 = vmatpush1.bf16.msra.mxu0 0
      %1093 = vmatprep.subr.bf16.mxu0 0
      %1094 = vmatpush1.bf16.msra.mxu0 0
      %1095 = vmatprep.subr.bf16.mxu0 0
      %1096 = vmatpush1.bf16.msra.mxu0 0
      %1097 = vmatprep.mubr.bf16.mxu0 0
      %1098 = vmatmul.mubr.bf16.gmra.mrb[0].mxu0 %v1013
      %v1099 = vpop.f32.mrb[0].mxu0
      %v1100 = vadd.f32 0.0, %v1099
      %v1101 = vpop.f32.mrb[0].mxu0
      %v1102 = vpop.f32.mrb[0].mxu0
      %v1103 = vpop.f32.mrb[0].mxu0
      %1104 = vdwg.mxu0
      %v1105 = vadd.f32 %v994, %v1059
      %v1106 = vadd.f32 %v995, %v1061
      %v1107 = vadd.f32 %v996, %v1100
      %s1108 = scalar_lea.vmem %s4, 24
      %v1109 = vld [vmem:[%s1108] sm:$0xf]
      %1110 = vrot.lane.b32.xlu0 %v454, 111
      %v1111 = vpop.permute.xlu0 %1110
      %1112 = vrot.lane.b32.xlu0 %v462, 111
      %v1113 = vpop.permute.xlu0 %1112
      %1114 = vrot.lane.b32.xlu0 %v461, 111
      %v1115 = vpop.permute.xlu0 %1114
      %1116 = vrot.lane.b32.xlu0 %v445, 111
      %v1117 = vpop.permute.xlu0 %1116
      %vm1118 = vcmask 908288
      %v1119 = vsel %vm1118, %v1111, %v1113
      %v1120 = vsel %vm1118, %v1113, %v1115
      %v1121 = vsel %vm1118, %v1115, %v1117
      %v1123 = vsel %vm479, %v1109, 0
      %v1126 = vsel %vm483, %v1119, 0
      %v1129 = vsel %vm483, %v1120, 0
      %v1132 = vsel %vm483, %v1121, 0
      %1134 = vmatprep.subr.bf16.mxu0 %v1129
      %1135 = vmatpush1.bf16.msra.mxu0 %v1126
      %1136 = vmatprep.subr.bf16.mxu0 0
      %1137 = vmatpush1.bf16.msra.mxu0 0
      %1138 = vmatprep.subr.bf16.mxu0 0
      %1139 = vmatpush1.bf16.msra.mxu0 0
      %1140 = vmatprep.subr.bf16.mxu0 0
      %1141 = vmatpush1.bf16.msra.mxu0 0
      %1142 = vmatprep.subr.bf16.mxu0 0
      %1143 = vmatpush1.bf16.msra.mxu0 0
      %1144 = vmatprep.subr.bf16.mxu0 0
      %1145 = vmatpush1.bf16.msra.mxu0 0
      %1146 = vmatprep.subr.bf16.mxu0 0
      %1147 = vmatpush1.bf16.msra.mxu0 0
      %1148 = vmatprep.subr.bf16.mxu0 0
      %1149 = vmatpush1.bf16.msra.mxu0 0
      %1150 = vmatprep.subr.bf16.mxu0 0
      %1151 = vmatpush1.bf16.msra.mxu0 0
      %1152 = vmatprep.subr.bf16.mxu0 0
      %1153 = vmatpush1.bf16.msra.mxu0 0
      %1154 = vmatprep.subr.bf16.mxu0 0
      %1155 = vmatpush1.bf16.msra.mxu0 0
      %1156 = vmatprep.subr.bf16.mxu0 0
      %1157 = vmatpush1.bf16.msra.mxu0 0
      %1158 = vmatprep.subr.bf16.mxu0 0
      %1159 = vmatpush1.bf16.msra.mxu0 0
      %1160 = vmatprep.subr.bf16.mxu0 0
      %1161 = vmatpush1.bf16.msra.mxu0 0
      %1162 = vmatprep.subr.bf16.mxu0 0
      %1163 = vmatpush1.bf16.msra.mxu0 0
      %1164 = vmatprep.subr.bf16.mxu0 0
      %1165 = vmatpush1.bf16.msra.mxu0 0
      %1166 = vmatprep.mubr.bf16.mxu0 0
      %1167 = vmatmul.mubr.bf16.gmra.mrb[0].mxu0 %v1123
      %v1168 = vpop.f32.mrb[0].mxu0
      %v1169 = vadd.f32 0.0, %v1168
      %v1170 = vpop.f32.mrb[0].mxu0
      %v1171 = vadd.f32 0.0, %v1170
      %v1172 = vpop.f32.mrb[0].mxu0
      %v1173 = vpop.f32.mrb[0].mxu0
      %1174 = vdwg.mxu0
      %1175 = vmatprep.subr.bf16.mxu0 0
      %1176 = vmatpush1.bf16.msra.mxu0 %v1132
      %1177 = vmatprep.subr.bf16.mxu0 0
      %1178 = vmatpush1.bf16.msra.mxu0 0
      %1179 = vmatprep.subr.bf16.mxu0 0
      %1180 = vmatpush1.bf16.msra.mxu0 0
      %1181 = vmatprep.subr.bf16.mxu0 0
      %1182 = vmatpush1.bf16.msra.mxu0 0
      %1183 = vmatprep.subr.bf16.mxu0 0
      %1184 = vmatpush1.bf16.msra.mxu0 0
      %1185 = vmatprep.subr.bf16.mxu0 0
      %1186 = vmatpush1.bf16.msra.mxu0 0
      %1187 = vmatprep.subr.bf16.mxu0 0
      %1188 = vmatpush1.bf16.msra.mxu0 0
      %1189 = vmatprep.subr.bf16.mxu0 0
      %1190 = vmatpush1.bf16.msra.mxu0 0
      %1191 = vmatprep.subr.bf16.mxu0 0
      %1192 = vmatpush1.bf16.msra.mxu0 0
      %1193 = vmatprep.subr.bf16.mxu0 0
      %1194 = vmatpush1.bf16.msra.mxu0 0
      %1195 = vmatprep.subr.bf16.mxu0 0
      %1196 = vmatpush1.bf16.msra.mxu0 0
      %1197 = vmatprep.subr.bf16.mxu0 0
      %1198 = vmatpush1.bf16.msra.mxu0 0
      %1199 = vmatprep.subr.bf16.mxu0 0
      %1200 = vmatpush1.bf16.msra.mxu0 0
      %1201 = vmatprep.subr.bf16.mxu0 0
      %1202 = vmatpush1.bf16.msra.mxu0 0
      %1203 = vmatprep.subr.bf16.mxu0 0
      %1204 = vmatpush1.bf16.msra.mxu0 0
      %1205 = vmatprep.subr.bf16.mxu0 0
      %1206 = vmatpush1.bf16.msra.mxu0 0
      %1207 = vmatprep.mubr.bf16.mxu0 0
      %1208 = vmatmul.mubr.bf16.gmra.mrb[0].mxu0 %v1123
      %v1209 = vpop.f32.mrb[0].mxu0
      %v1210 = vadd.f32 0.0, %v1209
      %v1211 = vpop.f32.mrb[0].mxu0
      %v1212 = vpop.f32.mrb[0].mxu0
      %v1213 = vpop.f32.mrb[0].mxu0
      %1214 = vdwg.mxu0
      %v1215 = vadd.f32 %v1105, %v1169
      %v1216 = vadd.f32 %v1106, %v1171
      %v1217 = vadd.f32 %v1107, %v1210
      %s1218 = scalar_lea.vmem %s4, 28
      %v1219 = vld [vmem:[%s1218] sm:$0xf]
      %1220 = vrot.lane.b32.xlu0 %v454, 110
      %v1221 = vpop.permute.xlu0 %1220
      %1222 = vrot.lane.b32.xlu0 %v462, 110
      %v1223 = vpop.permute.xlu0 %1222
      %1224 = vrot.lane.b32.xlu0 %v461, 110
      %v1225 = vpop.permute.xlu0 %1224
      %1226 = vrot.lane.b32.xlu0 %v445, 110
      %v1227 = vpop.permute.xlu0 %1226
      %vm1228 = vcmask 900096
      %v1229 = vsel %vm1228, %v1221, %v1223
      %v1230 = vsel %vm1228, %v1223, %v1225
      %v1231 = vsel %vm1228, %v1225, %v1227
      %v1233 = vsel %vm479, %v1219, 0
      %v1236 = vsel %vm483, %v1229, 0
      %v1239 = vsel %vm483, %v1230, 0
      %v1242 = vsel %vm483, %v1231, 0
      %1244 = vmatprep.subr.bf16.mxu0 %v1239
      %1245 = vmatpush1.bf16.msra.mxu0 %v1236
      %1246 = vmatprep.subr.bf16.mxu0 0
      %1247 = vmatpush1.bf16.msra.mxu0 0
      %1248 = vmatprep.subr.bf16.mxu0 0
      %1249 = vmatpush1.bf16.msra.mxu0 0
      %1250 = vmatprep.subr.bf16.mxu0 0
      %1251 = vmatpush1.bf16.msra.mxu0 0
      %1252 = vmatprep.subr.bf16.mxu0 0
      %1253 = vmatpush1.bf16.msra.mxu0 0
      %1254 = vmatprep.subr.bf16.mxu0 0
      %1255 = vmatpush1.bf16.msra.mxu0 0
      %1256 = vmatprep.subr.bf16.mxu0 0
      %1257 = vmatpush1.bf16.msra.mxu0 0
      %1258 = vmatprep.subr.bf16.mxu0 0
      %1259 = vmatpush1.bf16.msra.mxu0 0
      %1260 = vmatprep.subr.bf16.mxu0 0
      %1261 = vmatpush1.bf16.msra.mxu0 0
      %1262 = vmatprep.subr.bf16.mxu0 0
      %1263 = vmatpush1.bf16.msra.mxu0 0
      %1264 = vmatprep.subr.bf16.mxu0 0
      %1265 = vmatpush1.bf16.msra.mxu0 0
      %1266 = vmatprep.subr.bf16.mxu0 0
      %1267 = vmatpush1.bf16.msra.mxu0 0
      %1268 = vmatprep.subr.bf16.mxu0 0
      %1269 = vmatpush1.bf16.msra.mxu0 0
      %1270 = vmatprep.subr.bf16.mxu0 0
      %1271 = vmatpush1.bf16.msra.mxu0 0
      %1272 = vmatprep.subr.bf16.mxu0 0
      %1273 = vmatpush1.bf16.msra.mxu0 0
      %1274 = vmatprep.subr.bf16.mxu0 0
      %1275 = vmatpush1.bf16.msra.mxu0 0
      %1276 = vmatprep.mubr.bf16.mxu0 0
      %1277 = vmatmul.mubr.bf16.gmra.mrb[0].mxu0 %v1233
      %v1278 = vpop.f32.mrb[0].mxu0
      %v1279 = vadd.f32 0.0, %v1278
      %v1280 = vpop.f32.mrb[0].mxu0
      %v1281 = vadd.f32 0.0, %v1280
      %v1282 = vpop.f32.mrb[0].mxu0
      %v1283 = vpop.f32.mrb[0].mxu0
      %1284 = vdwg.mxu0
      %1285 = vmatprep.subr.bf16.mxu0 0
      %1286 = vmatpush1.bf16.msra.mxu0 %v1242
      %1287 = vmatprep.subr.bf16.mxu0 0
      %1288 = vmatpush1.bf16.msra.mxu0 0
      %1289 = vmatprep.subr.bf16.mxu0 0
      %1290 = vmatpush1.bf16.msra.mxu0 0
      %1291 = vmatprep.subr.bf16.mxu0 0
      %1292 = vmatpush1.bf16.msra.mxu0 0
      %1293 = vmatprep.subr.bf16.mxu0 0
      %1294 = vmatpush1.bf16.msra.mxu0 0
      %1295 = vmatprep.subr.bf16.mxu0 0
      %1296 = vmatpush1.bf16.msra.mxu0 0
      %1297 = vmatprep.subr.bf16.mxu0 0
      %1298 = vmatpush1.bf16.msra.mxu0 0
      %1299 = vmatprep.subr.bf16.mxu0 0
      %1300 = vmatpush1.bf16.msra.mxu0 0
      %1301 = vmatprep.subr.bf16.mxu0 0
      %1302 = vmatpush1.bf16.msra.mxu0 0
      %1303 = vmatprep.subr.bf16.mxu0 0
      %1304 = vmatpush1.bf16.msra.mxu0 0
      %1305 = vmatprep.subr.bf16.mxu0 0
      %1306 = vmatpush1.bf16.msra.mxu0 0
      %1307 = vmatprep.subr.bf16.mxu0 0
      %1308 = vmatpush1.bf16.msra.mxu0 0
      %1309 = vmatprep.subr.bf16.mxu0 0
      %1310 = vmatpush1.bf16.msra.mxu0 0
      %1311 = vmatprep.subr.bf16.mxu0 0
      %1312 = vmatpush1.bf16.msra.mxu0 0
      %1313 = vmatprep.subr.bf16.mxu0 0
      %1314 = vmatpush1.bf16.msra.mxu0 0
      %1315 = vmatprep.subr.bf16.mxu0 0
      %1316 = vmatpush1.bf16.msra.mxu0 0
      %1317 = vmatprep.mubr.bf16.mxu0 0
      %1318 = vmatmul.mubr.bf16.gmra.mrb[0].mxu0 %v1233
      %v1319 = vpop.f32.mrb[0].mxu0
      %v1320 = vadd.f32 0.0, %v1319
      %v1321 = vpop.f32.mrb[0].mxu0
      %v1322 = vpop.f32.mrb[0].mxu0
      %v1323 = vpop.f32.mrb[0].mxu0
      %1324 = vdwg.mxu0
      %v1325 = vadd.f32 %v1215, %v1279
      %v1326 = vadd.f32 %v1216, %v1281
      %v1327 = vadd.f32 %v1217, %v1320
      %s1328 = scalar_lea.vmem %s4, 32
      %v1329 = vld [vmem:[%s1328] sm:$0xf]
      %1330 = vrot.lane.b32.xlu0 %v454, 109
      %v1331 = vpop.permute.xlu0 %1330
      %1332 = vrot.lane.b32.xlu0 %v462, 109
      %v1333 = vpop.permute.xlu0 %1332
      %1334 = vrot.lane.b32.xlu0 %v461, 109
      %v1335 = vpop.permute.xlu0 %1334
      %1336 = vrot.lane.b32.xlu0 %v445, 109
      %v1337 = vpop.permute.xlu0 %1336
      %vm1338 = vcmask 891904
      %v1339 = vsel %vm1338, %v1331, %v1333
      %v1340 = vsel %vm1338, %v1333, %v1335
      %v1341 = vsel %vm1338, %v1335, %v1337
      %v1343 = vsel %vm479, %v1329, 0
      %v1346 = vsel %vm483, %v1339, 0
      %v1349 = vsel %vm483, %v1340, 0
      %v1352 = vsel %vm483, %v1341, 0
      %1354 = vmatprep.subr.bf16.mxu0 %v1349
      %1355 = vmatpush1.bf16.msra.mxu0 %v1346
      %1356 = vmatprep.subr.bf16.mxu0 0
      %1357 = vmatpush1.bf16.msra.mxu0 0
      %1358 = vmatprep.subr.bf16.mxu0 0
      %1359 = vmatpush1.bf16.msra.mxu0 0
      %1360 = vmatprep.subr.bf16.mxu0 0
      %1361 = vmatpush1.bf16.msra.mxu0 0
      %1362 = vmatprep.subr.bf16.mxu0 0
      %1363 = vmatpush1.bf16.msra.mxu0 0
      %1364 = vmatprep.subr.bf16.mxu0 0
      %1365 = vmatpush1.bf16.msra.mxu0 0
      %1366 = vmatprep.subr.bf16.mxu0 0
      %1367 = vmatpush1.bf16.msra.mxu0 0
      %1368 = vmatprep.subr.bf16.mxu0 0
      %1369 = vmatpush1.bf16.msra.mxu0 0
      %1370 = vmatprep.subr.bf16.mxu0 0
      %1371 = vmatpush1.bf16.msra.mxu0 0
      %1372 = vmatprep.subr.bf16.mxu0 0
      %1373 = vmatpush1.bf16.msra.mxu0 0
      %1374 = vmatprep.subr.bf16.mxu0 0
      %1375 = vmatpush1.bf16.msra.mxu0 0
      %1376 = vmatprep.subr.bf16.mxu0 0
      %1377 = vmatpush1.bf16.msra.mxu0 0
      %1378 = vmatprep.subr.bf16.mxu0 0
      %1379 = vmatpush1.bf16.msra.mxu0 0
      %1380 = vmatprep.subr.bf16.mxu0 0
      %1381 = vmatpush1.bf16.msra.mxu0 0
      %1382 = vmatprep.subr.bf16.mxu0 0
      %1383 = vmatpush1.bf16.msra.mxu0 0
      %1384 = vmatprep.subr.bf16.mxu0 0
      %1385 = vmatpush1.bf16.msra.mxu0 0
      %1386 = vmatprep.mubr.bf16.mxu0 0
      %1387 = vmatmul.mubr.bf16.gmra.mrb[0].mxu0 %v1343
      %v1388 = vpop.f32.mrb[0].mxu0
      %v1389 = vadd.f32 0.0, %v1388
      %v1390 = vpop.f32.mrb[0].mxu0
      %v1391 = vadd.f32 0.0, %v1390
      %v1392 = vpop.f32.mrb[0].mxu0
      %v1393 = vpop.f32.mrb[0].mxu0
      %1394 = vdwg.mxu0
      %1395 = vmatprep.subr.bf16.mxu0 0
      %1396 = vmatpush1.bf16.msra.mxu0 %v1352
      %1397 = vmatprep.subr.bf16.mxu0 0
      %1398 = vmatpush1.bf16.msra.mxu0 0
      %1399 = vmatprep.subr.bf16.mxu0 0
      %1400 = vmatpush1.bf16.msra.mxu0 0
      %1401 = vmatprep.subr.bf16.mxu0 0
      %1402 = vmatpush1.bf16.msra.mxu0 0
      %1403 = vmatprep.subr.bf16.mxu0 0
      %1404 = vmatpush1.bf16.msra.mxu0 0
      %1405 = vmatprep.subr.bf16.mxu0 0
      %1406 = vmatpush1.bf16.msra.mxu0 0
      %1407 = vmatprep.subr.bf16.mxu0 0
      %1408 = vmatpush1.bf16.msra.mxu0 0
      %1409 = vmatprep.subr.bf16.mxu0 0
      %1410 = vmatpush1.bf16.msra.mxu0 0
      %1411 = vmatprep.subr.bf16.mxu0 0
      %1412 = vmatpush1.bf16.msra.mxu0 0
      %1413 = vmatprep.subr.bf16.mxu0 0
      %1414 = vmatpush1.bf16.msra.mxu0 0
      %1415 = vmatprep.subr.bf16.mxu0 0
      %1416 = vmatpush1.bf16.msra.mxu0 0
      %1417 = vmatprep.subr.bf16.mxu0 0
      %1418 = vmatpush1.bf16.msra.mxu0 0
      %1419 = vmatprep.subr.bf16.mxu0 0
      %1420 = vmatpush1.bf16.msra.mxu0 0
      %1421 = vmatprep.subr.bf16.mxu0 0
      %1422 = vmatpush1.bf16.msra.mxu0 0
      %1423 = vmatprep.subr.bf16.mxu0 0
      %1424 = vmatpush1.bf16.msra.mxu0 0
      %1425 = vmatprep.subr.bf16.mxu0 0
      %1426 = vmatpush1.bf16.msra.mxu0 0
      %1427 = vmatprep.mubr.bf16.mxu0 0
      %1428 = vmatmul.mubr.bf16.gmra.mrb[0].mxu0 %v1343
      %v1429 = vpop.f32.mrb[0].mxu0
      %v1430 = vadd.f32 0.0, %v1429
      %v1431 = vpop.f32.mrb[0].mxu0
      %v1432 = vpop.f32.mrb[0].mxu0
      %v1433 = vpop.f32.mrb[0].mxu0
      %1434 = vdwg.mxu0
      %v1435 = vadd.f32 %v1325, %v1389
      %v1436 = vadd.f32 %v1326, %v1391
      %v1437 = vadd.f32 %v1327, %v1430
      %1438 = vst [vmem:[%s430] sm:$0xff] %v1435
      %1439 = vst [vmem:[%s430 + $0x8] sm:$0xff] %v1436
      %1440 = vst [vmem:[%s430 + $0x10] sm:$0xff] %v1437
      %v1441 = vld [vmem:[%s424] sm:$0x7]
      %v1443 = vlaneseq
      %v1444 = vshrl.u32 %v1443, 7
      %v1445 = vsub.s32 0, %v1444
      %v1446 = vrot.slane %v1441, %v1445
      %v1447 = vlaneseq
      %v1448 = vshrl.u32 %v1447, 7
      %v1449 = vsub.s32 1, %v1448
      %v1450 = vrot.slane %v1441, %v1449
      %v1451 = vlaneseq
      %v1452 = vshrl.u32 %v1451, 7
      %v1453 = vsub.s32 2, %v1452
      %v1454 = vrot.slane %v1441, %v1453
      %v1458 = vmul.f32 %v1435, %v1446
      %v1459 = vmul.f32 %v1436, %v1450
      %v1460 = vmul.f32 %v1437, %v1454
      %v1461 = vadd.f32 %v1458, %v1459
      %v1462 = vadd.f32 %v1461, %v1460
      %1463 = vadd.xlane.f32.xlu0 %v1462
      %v1464 = vpop.xlane.xlu0 %1463
      %v1465 = vmul.f32 %v1435, %v1458
      %v1466 = vmul.f32 %v1436, %v1459
      %v1467 = vmul.f32 %v1437, %v1460
      %v1468 = vadd.f32 %v1465, %v1466
      %v1469 = vadd.f32 %v1468, %v1467
      %1470 = vadd.xlane.f32.xlu0 %v1469
      %v1471 = vpop.xlane.xlu0 %1470
      %v1472 = vld [vmem:[%s5] sm:$0xf]
      %v1474 = vsel %vm479, %v1472, 0
      %1476 = vmatprep.subr.bf16.mxu0 %v908
      %1477 = vmatpush1.bf16.msra.mxu0 %v905
      %1478 = vmatprep.subr.bf16.mxu0 0
      %1479 = vmatpush1.bf16.msra.mxu0 0
      %1480 = vmatprep.subr.bf16.mxu0 0
      %1481 = vmatpush1.bf16.msra.mxu0 0
      %1482 = vmatprep.subr.bf16.mxu0 0
      %1483 = vmatpush1.bf16.msra.mxu0 0
      %1484 = vmatprep.subr.bf16.mxu0 0
      %1485 = vmatpush1.bf16.msra.mxu0 0
      %1486 = vmatprep.subr.bf16.mxu0 0
      %1487 = vmatpush1.bf16.msra.mxu0 0
      %1488 = vmatprep.subr.bf16.mxu0 0
      %1489 = vmatpush1.bf16.msra.mxu0 0
      %1490 = vmatprep.subr.bf16.mxu0 0
      %1491 = vmatpush1.bf16.msra.mxu0 0
      %1492 = vmatprep.subr.bf16.mxu0 0
      %1493 = vmatpush1.bf16.msra.mxu0 0
      %1494 = vmatprep.subr.bf16.mxu0 0
      %1495 = vmatpush1.bf16.msra.mxu0 0
      %1496 = vmatprep.subr.bf16.mxu0 0
      %1497 = vmatpush1.bf16.msra.mxu0 0
      %1498 = vmatprep.subr.bf16.mxu0 0
      %1499 = vmatpush1.bf16.msra.mxu0 0
      %1500 = vmatprep.subr.bf16.mxu0 0
      %1501 = vmatpush1.bf16.msra.mxu0 0
      %1502 = vmatprep.subr.bf16.mxu0 0
      %1503 = vmatpush1.bf16.msra.mxu0 0
      %1504 = vmatprep.subr.bf16.mxu0 0
      %1505 = vmatpush1.bf16.msra.mxu0 0
      %1506 = vmatprep.subr.bf16.mxu0 0
      %1507 = vmatpush1.bf16.msra.mxu0 0
      %1508 = vmatprep.mubr.bf16.mxu0 0
      %1509 = vmatmul.mubr.bf16.gmra.mrb[0].mxu0 %v1474
      %v1510 = vpop.f32.mrb[0].mxu0
      %v1511 = vadd.f32 0.0, %v1510
      %v1512 = vpop.f32.mrb[0].mxu0
      %v1513 = vadd.f32 0.0, %v1512
      %v1514 = vpop.f32.mrb[0].mxu0
      %v1515 = vpop.f32.mrb[0].mxu0
      %1516 = vdwg.mxu0
      %1517 = vmatprep.subr.bf16.mxu0 0
      %1518 = vmatpush1.bf16.msra.mxu0 %v911
      %1519 = vmatprep.subr.bf16.mxu0 0
      %1520 = vmatpush1.bf16.msra.mxu0 0
      %1521 = vmatprep.subr.bf16.mxu0 0
      %1522 = vmatpush1.bf16.msra.mxu0 0
      %1523 = vmatprep.subr.bf16.mxu0 0
      %1524 = vmatpush1.bf16.msra.mxu0 0
      %1525 = vmatprep.subr.bf16.mxu0 0
      %1526 = vmatpush1.bf16.msra.mxu0 0
      %1527 = vmatprep.subr.bf16.mxu0 0
      %1528 = vmatpush1.bf16.msra.mxu0 0
      %1529 = vmatprep.subr.bf16.mxu0 0
      %1530 = vmatpush1.bf16.msra.mxu0 0
      %1531 = vmatprep.subr.bf16.mxu0 0
      %1532 = vmatpush1.bf16.msra.mxu0 0
      %1533 = vmatprep.subr.bf16.mxu0 0
      %1534 = vmatpush1.bf16.msra.mxu0 0
      %1535 = vmatprep.subr.bf16.mxu0 0
      %1536 = vmatpush1.bf16.msra.mxu0 0
      %1537 = vmatprep.subr.bf16.mxu0 0
      %1538 = vmatpush1.bf16.msra.mxu0 0
      %1539 = vmatprep.subr.bf16.mxu0 0
      %1540 = vmatpush1.bf16.msra.mxu0 0
      %1541 = vmatprep.subr.bf16.mxu0 0
      %1542 = vmatpush1.bf16.msra.mxu0 0
      %1543 = vmatprep.subr.bf16.mxu0 0
      %1544 = vmatpush1.bf16.msra.mxu0 0
      %1545 = vmatprep.subr.bf16.mxu0 0
      %1546 = vmatpush1.bf16.msra.mxu0 0
      %1547 = vmatprep.subr.bf16.mxu0 0
      %1548 = vmatpush1.bf16.msra.mxu0 0
      %1549 = vmatprep.mubr.bf16.mxu0 0
      %1550 = vmatmul.mubr.bf16.gmra.mrb[0].mxu0 %v1474
      %v1551 = vpop.f32.mrb[0].mxu0
      %v1552 = vadd.f32 0.0, %v1551
      %v1553 = vpop.f32.mrb[0].mxu0
      %v1554 = vpop.f32.mrb[0].mxu0
      %v1555 = vpop.f32.mrb[0].mxu0
      %1556 = vdwg.mxu0
      %1557 = vst [vmem:[%s436] sm:$0xff] %v1511
      %1558 = vst [vmem:[%s436 + $0x8] sm:$0xff] %v1513
      %1559 = vst [vmem:[%s436 + $0x10] sm:$0xff] %v1552
      %v1560 = vmul.f32 %v1511, %v1446
      %v1561 = vmul.f32 %v1513, %v1450
      %v1562 = vmul.f32 %v1552, %v1454
      %v1563 = vadd.f32 %v1560, %v1561
      %v1564 = vadd.f32 %v1563, %v1562
      %1565 = vadd.xlane.f32.xlu0 %v1564
      %v1566 = vpop.xlane.xlu0 %1565
      %v1567 = vmul.f32 %v1511, %v1560
      %v1568 = vmul.f32 %v1513, %v1561
      %v1569 = vmul.f32 %v1552, %v1562
      %v1570 = vadd.f32 %v1567, %v1568
      %v1571 = vadd.f32 %v1570, %v1569
      %1572 = vadd.xlane.f32.xlu0 %v1571
      %v1573 = vpop.xlane.xlu0 %1572
      %vm1574 = vcmask 7168
      %v1575 = vsel %vm1574, %v1464, %v1471
      %vm1576 = vcmask 15360
      %v1577 = vsel %vm1576, %v1575, %v1566
      %vm1578 = vcmask 23552
      %v1579 = vsel %vm1578, %v1577, %v1573
      %1580 = vst.msk [vmem:[%s441] sm:$0xff] %vm479, %v1579
      %s1581 = smul.u32 3, %s20
      %p1582 = scmp.lt.s32.totalorder %s1581, 5
      %s1583 = scalar_select %p1582, %s1581, 5
      %s1584 = smul.addr %s1583, 8
      %s1585 = scalar_lea.vmem %s6, %s1584
      %s1586 = smul.u32 3, %s20
      %p1587 = scmp.lt.s32.totalorder %s1586, 5
      %s1588 = scalar_select %p1587, %s1586, 5
      %s1589 = smul.addr %s1588, 8
      %s1590 = scalar_lea.vmem %s7, %s1589
      %p1591 = scmp.lt.s32.totalorder %s20, 1
      %s1592 = scalar_select %p1591, %s20, 1
      %s1593 = smul.addr %s1592, 8
      %s1594 = scalar_lea.vmem %s8, %s1593
      // Predicated region
      $region45: #{residual_block_forward.3} parent=43 // pred_check
        %p1595 = pneg %p200
      $region46: #{residual_block_forward.3} parent=43 // pred_check_branch
        %1597 = sbr.rel (%p1595) target = $region48
      $region47: #{residual_block_forward.3} parent=43 // pred_region
        %s1598 = smul.u32 3, %s20
      $region48: #{residual_block_forward.3} parent=43 // pred_fallthru
        _
      // Predicated region
      $region49: #{residual_block_forward.3} parent=43 // pred_check
        %p1599 = pneg %p226
      $region50: #{residual_block_forward.3} parent=43 // pred_check_branch
        %1601 = sbr.rel (%p1599) target = $region52
      $region51: #{residual_block_forward.3} parent=43 // pred_region
        %s1602 = smul.u32 3, %s20
      $region52: #{residual_block_forward.3} parent=43 // pred_fallthru
        _
      // Predicated region
      $region53: #{residual_block_forward.3} parent=43 // pred_check
        %p1603 = pneg %p252
      $region54: #{residual_block_forward.3} parent=43 // pred_check_branch
        %1605 = sbr.rel (%p1603) target = $region56
      $region55: #{residual_block_forward.3} parent=43 // pred_region
        _
      $region56: #{residual_block_forward.3} parent=43 // pred_fallthru
        _
    $region44: #{residual_block_forward.3} parent=5 // pred_fallthru
      _
    %p1606 = scmp.le.s32.totalorder 2, %s15
    // Predicated region
    $region57: #{residual_block_forward.3} parent=5 // pred_check
      %p1607 = pneg %p1606
    $region58: #{residual_block_forward.3} parent=5 // pred_check_branch
      %1609 = sbr.rel (%p1607) target = $region60
    $region59: #{residual_block_forward.3} parent=5 // pred_region
      %s1610 = ssub.s32 %s15, 2
      // Predicated region
      $region61: #{residual_block_forward.3} parent=59 // pred_check
        %p1611 = pneg %p206
      $region62: #{residual_block_forward.3} parent=59 // pred_check_branch
        %1613 = sbr.rel (%p1611) target = $region64
      $region63: #{residual_block_forward.3} parent=59 // pred_region
        %s1614 = smul.u32 3, %s21
        %p1615 = scmp.lt.s32.totalorder %s1614, 5
        %s1616 = scalar_select %p1615, %s1614, 5
        %s1617 = smul.addr %s1616, 8
        %s1618 = scalar_lea.vmem %s6, %s1617
      $region64: #{residual_block_forward.3} parent=59 // pred_fallthru
        _
      // Predicated region
      $region65: #{residual_block_forward.3} parent=59 // pred_check
        %p1619 = pneg %p232
      $region66: #{residual_block_forward.3} parent=59 // pred_check_branch
        %1621 = sbr.rel (%p1619) target = $region68
      $region67: #{residual_block_forward.3} parent=59 // pred_region
        %s1622 = smul.u32 3, %s21
        %p1623 = scmp.lt.s32.totalorder %s1622, 5
        %s1624 = scalar_select %p1623, %s1622, 5
        %s1625 = smul.addr %s1624, 8
        %s1626 = scalar_lea.vmem %s7, %s1625
      $region68: #{residual_block_forward.3} parent=59 // pred_fallthru
        _
      // Predicated region
      $region69: #{residual_block_forward.3} parent=59 // pred_check
        %p1627 = pneg %p258
      $region70: #{residual_block_forward.3} parent=59 // pred_check_branch
        %1629 = sbr.rel (%p1627) target = $region72
      $region71: #{residual_block_forward.3} parent=59 // pred_region
        %p1630 = scmp.lt.s32.totalorder %s21, 1
        %s1631 = scalar_select %p1630, %s21, 1
        %s1632 = smul.addr %s1631, 8
        %s1633 = scalar_lea.vmem %s8, %s1632
      $region72: #{residual_block_forward.3} parent=59 // pred_fallthru
        _
    $region60: #{residual_block_forward.3} parent=5 // pred_fallthru
      _
  $region6: #{residual_block_forward.3} parent=0 // loop_footer
    %s19 = sadd.s32 1, %s15
  $region7: #{residual_block_forward.3} parent=0 // loop_footer_branch
    %14 = sbr.rel target = $region3
  $region8: #{residual_block_forward.3} parent=0 // loop_exit
    _

// kernel: residual_block_forward.4
$region0: #{residual_block_forward.4}
  #allocation0 [shape = 'u32[]', space=smem, size = 0x4, offset = 0x4, fixed_abs, tag = 'smem constant byte address 0x4 - core index']
  #allocation1 [shape = 'u32[144,128]{1,0:T(1,128)}', space=vmem, size = 0x12000, scoped, tag = 'internal scratch']
  %s0 = inlined_call_operand.vmem [shape: f32[8,768], index: 0, kind: input, shape index: {}, may-alias: {0,1,2}]
  %s1 = inlined_call_operand.vmem [shape: f32[8,768], index: 1, kind: input, shape index: {}, may-alias: {0,1,2}]
  %s2 = inlined_call_operand.vmem [shape: f32[8,768], index: 2, kind: input, shape index: {}, may-alias: {0,1,2}]
  %s3 = inlined_call_operand.vmem [shape: f32[1,768], index: 3, kind: input, shape index: {}, may-alias: {3,4,5}]
  %s4 = inlined_call_operand.vmem [shape: f32[1,768], index: 4, kind: input, shape index: {}, may-alias: {3,4,5}]
  %s5 = inlined_call_operand.vmem [shape: f32[1,768], index: 5, kind: input, shape index: {}, may-alias: {3,4,5}]
  %s6 = inlined_call_operand.vmem [shape: f32[8,2], index: 6, kind: input, shape index: {}]
  %s7 = inlined_call_operand.vmem [shape: f32[9,8,8], index: 7, kind: input, shape index: {}]
  %s8 = inlined_call_operand.vmem [shape: f32[8,768], index: 8, kind: output, shape index: {0}]
  %s9 = inlined_call_operand.vmem [shape: f32[2,8,2], index: 9, kind: output, shape index: {1}]
  %10 = xla_tuple %s8, %s9
  %s11 = sld [smem:[#allocation0]]
  $region73: #{residual_block_forward.4} parent=0
    _
  %s13 = ssub.s32 1, %s11
  %s14 = scalar_select 0, %s13, %s11
  loop: start=0, step=1, limit=4
  $region2: #{residual_block_forward.4} parent=0 // loop_pre_header
    _
  $region3: #{residual_block_forward.4} parent=0 // loop_header
    %s16 = sphi 0, %s20
    %p17 = scmp.ge.s32.totalorder %s16, 4
    %s34 = sphi 0, %s36
    %s37 = sphi 0, %s34
    %s38 = sphi 0, %s37
    %s54 = sphi 0, %s38
    %s60 = sphi 0, %s62
    %s63 = sphi 0, %s60
    %s64 = sphi 0, %s63
    %s80 = sphi 0, %s64
    %s94 = sphi 0, %s96
    %s97 = sphi 0, %s94
    %s98 = sphi 0, %s97
    %s114 = sphi 0, %s98
    %s128 = sphi 0, %s130
    %s131 = sphi 0, %s128
    %s132 = sphi 0, %s131
    %s148 = sphi 0, %s132
    %s154 = sphi 0, %s156
    %s157 = sphi 0, %s154
    %s158 = sphi 0, %s157
    %s174 = sphi 0, %s158
    %s188 = sphi 0, %s190
    %s191 = sphi 0, %s188
    %s192 = sphi 0, %s191
    %s208 = sphi 0, %s192
    %s212 = sphi 0, %s212
    %s214 = sphi 0, %s212
    %s215 = sphi 0, %s214
    %s229 = sphi 0, %s215
    %s233 = sphi 0, %s233
    %s235 = sphi 0, %s233
    %s236 = sphi 0, %s235
    %s250 = sphi 0, %s236
    %s256 = sphi 0, %s258
    %s259 = sphi 0, %s256
    %s260 = sphi 0, %s259
    %s276 = sphi 0, %s260
    %s282 = sphi 0, %s284
    %s285 = sphi 0, %s282
    %s286 = sphi 0, %s285
    %s302 = sphi 0, %s286
  $region4: #{residual_block_forward.4} parent=0 // loop_header_branch
    %19 = sbr.rel (%p17) target = $region8
  $region5: #{residual_block_forward.4} parent=0 // loop_body
    %s21 = ssub.s32 %s16, 1
    %s22 = ssub.s32 %s16, 2
    %s23 = sadd.s32 %s16, 1
    %s24 = smul.u32 %s16, 3
    %s25 = ssub.s32 %s24, 1
    %p26 = scmp.gt.s32.totalorder %s25, 0
    %s27 = scalar_select %p26, %s25, 0
    %s28 = smul.u32 %s23, 3
    %s29 = ssub.s32 %s28, 1
    %p30 = scmp.gt.s32.totalorder %s29, 0
    %s31 = scalar_select %p30, %s29, 0
    %s32 = ssub.s32 %s27, %s31
    %p33 = scmp.eq.s32.totalorder %s32, 0
    %s35 = sadd.s32 %s34, 1
    %s36 = scalar_select %p33, %s34, %s35
    %p39 = pneg %p33
    %p40 = scmp.eq.s32.totalorder %s16, 1
    %p41 = por %p39, %p40
    %p42 = scmp.ne.s32.totalorder %s34, %s37
    %p43 = scmp.eq.s32.totalorder %s16, 0
    %p44 = por %p42, %p43
    %p45 = scmp.ne.s32.totalorder %s34, %s37
    %p46 = scmp.eq.s32.totalorder %s21, 1
    %p47 = por %p45, %p46
    %p48 = scmp.ne.s32.totalorder %s37, %s38
    %p49 = scmp.eq.s32.totalorder %s21, 0
    %p50 = por %p48, %p49
    %p51 = scmp.ne.s32.totalorder %s37, %s38
    %p52 = scmp.eq.s32.totalorder %s22, 1
    %p53 = por %p51, %p52
    %p55 = scmp.ne.s32.totalorder %s38, %s54
    %p56 = scmp.eq.s32.totalorder %s22, 0
    %p57 = por %p55, %p56
    %s58 = ssub.s32 %s16, %s23
    %p59 = scmp.eq.s32.totalorder %s58, 0
    %s61 = sadd.s32 %s60, 1
    %s62 = scalar_select %p59, %s60, %s61
    %p65 = pneg %p59
    %p66 = scmp.eq.s32.totalorder %s16, 1
    %p67 = por %p65, %p66
    %p68 = scmp.ne.s32.totalorder %s60, %s63
    %p69 = scmp.eq.s32.totalorder %s16, 0
    %p70 = por %p68, %p69
    %p71 = scmp.ne.s32.totalorder %s60, %s63
    %p72 = scmp.eq.s32.totalorder %s21, 1
    %p73 = por %p71, %p72
    %p74 = scmp.ne.s32.totalorder %s63, %s64
    %p75 = scmp.eq.s32.totalorder %s21, 0
    %p76 = por %p74, %p75
    %p77 = scmp.ne.s32.totalorder %s63, %s64
    %p78 = scmp.eq.s32.totalorder %s22, 1
    %p79 = por %p77, %p78
    %p81 = scmp.ne.s32.totalorder %s64, %s80
    %p82 = scmp.eq.s32.totalorder %s22, 0
    %p83 = por %p81, %p82
    %s84 = sadd.s32 %s16, 1
    %s85 = smul.u32 %s84, 3
    %p86 = scmp.lt.s32.totalorder %s85, 5
    %s87 = scalar_select %p86, %s85, 5
    %s88 = sadd.s32 %s23, 1
    %s89 = smul.u32 %s88, 3
    %p90 = scmp.lt.s32.totalorder %s89, 5
    %s91 = scalar_select %p90, %s89, 5
    %s92 = ssub.s32 %s87, %s91
    %p93 = scmp.eq.s32.totalorder %s92, 0
    %s95 = sadd.s32 %s94, 1
    %s96 = scalar_select %p93, %s94, %s95
    %p99 = pneg %p93
    %p100 = scmp.eq.s32.totalorder %s16, 1
    %p101 = por %p99, %p100
    %p102 = scmp.ne.s32.totalorder %s94, %s97
    %p103 = scmp.eq.s32.totalorder %s16, 0
    %p104 = por %p102, %p103
    %p105 = scmp.ne.s32.totalorder %s94, %s97
    %p106 = scmp.eq.s32.totalorder %s21, 1
    %p107 = por %p105, %p106
    %p108 = scmp.ne.s32.totalorder %s97, %s98
    %p109 = scmp.eq.s32.totalorder %s21, 0
    %p110 = por %p108, %p109
    %p111 = scmp.ne.s32.totalorder %s97, %s98
    %p112 = scmp.eq.s32.totalorder %s22, 1
    %p113 = por %p111, %p112
    %p115 = scmp.ne.s32.totalorder %s98, %s114
    %p116 = scmp.eq.s32.totalorder %s22, 0
    %p117 = por %p115, %p116
    %s118 = smul.u32 %s16, 3
    %s119 = ssub.s32 %s118, 1
    %p120 = scmp.gt.s32.totalorder %s119, 0
    %s121 = scalar_select %p120, %s119, 0
    %s122 = smul.u32 %s23, 3
    %s123 = ssub.s32 %s122, 1
    %p124 = scmp.gt.s32.totalorder %s123, 0
    %s125 = scalar_select %p124, %s123, 0
    %s126 = ssub.s32 %s121, %s125
    %p127 = scmp.eq.s32.totalorder %s126, 0
    %s129 = sadd.s32 %s128, 1
    %s130 = scalar_select %p127, %s128, %s129
    %p133 = pneg %p127
    %p134 = scmp.eq.s32.totalorder %s16, 1
    %p135 = por %p133, %p134
    %p136 = scmp.ne.s32.totalorder %s128, %s131
    %p137 = scmp.eq.s32.totalorder %s16, 0
    %p138 = por %p136, %p137
    %p139 = scmp.ne.s32.totalorder %s128, %s131
    %p140 = scmp.eq.s32.totalorder %s21, 1
    %p141 = por %p139, %p140
    %p142 = scmp.ne.s32.totalorder %s131, %s132
    %p143 = scmp.eq.s32.totalorder %s21, 0
    %p144 = por %p142, %p143
    %p145 = scmp.ne.s32.totalorder %s131, %s132
    %p146 = scmp.eq.s32.totalorder %s22, 1
    %p147 = por %p145, %p146
    %p149 = scmp.ne.s32.totalorder %s132, %s148
    %p150 = scmp.eq.s32.totalorder %s22, 0
    %p151 = por %p149, %p150
    %s152 = ssub.s32 %s16, %s23
    %p153 = scmp.eq.s32.totalorder %s152, 0
    %s155 = sadd.s32 %s154, 1
    %s156 = scalar_select %p153, %s154, %s155
    %p159 = pneg %p153
    %p160 = scmp.eq.s32.totalorder %s16, 1
    %p161 = por %p159, %p160
    %p162 = scmp.ne.s32.totalorder %s154, %s157
    %p163 = scmp.eq.s32.totalorder %s16, 0
    %p164 = por %p162, %p163
    %p165 = scmp.ne.s32.totalorder %s154, %s157
    %p166 = scmp.eq.s32.totalorder %s21, 1
    %p167 = por %p165, %p166
    %p168 = scmp.ne.s32.totalorder %s157, %s158
    %p169 = scmp.eq.s32.totalorder %s21, 0
    %p170 = por %p168, %p169
    %p171 = scmp.ne.s32.totalorder %s157, %s158
    %p172 = scmp.eq.s32.totalorder %s22, 1
    %p173 = por %p171, %p172
    %p175 = scmp.ne.s32.totalorder %s158, %s174
    %p176 = scmp.eq.s32.totalorder %s22, 0
    %p177 = por %p175, %p176
    %s178 = sadd.s32 %s16, 1
    %s179 = smul.u32 %s178, 3
    %p180 = scmp.lt.s32.totalorder %s179, 5
    %s181 = scalar_select %p180, %s179, 5
    %s182 = sadd.s32 %s23, 1
    %s183 = smul.u32 %s182, 3
    %p184 = scmp.lt.s32.totalorder %s183, 5
    %s185 = scalar_select %p184, %s183, 5
    %s186 = ssub.s32 %s181, %s185
    %p187 = scmp.eq.s32.totalorder %s186, 0
    %s189 = sadd.s32 %s188, 1
    %s190 = scalar_select %p187, %s188, %s189
    %p193 = pneg %p187
    %p194 = scmp.eq.s32.totalorder %s16, 1
    %p195 = por %p193, %p194
    %p196 = scmp.ne.s32.totalorder %s188, %s191
    %p197 = scmp.eq.s32.totalorder %s16, 0
    %p198 = por %p196, %p197
    %p199 = scmp.ne.s32.totalorder %s188, %s191
    %p200 = scmp.eq.s32.totalorder %s21, 1
    %p201 = por %p199, %p200
    %p202 = scmp.ne.s32.totalorder %s191, %s192
    %p203 = scmp.eq.s32.totalorder %s21, 0
    %p204 = por %p202, %p203
    %p205 = scmp.ne.s32.totalorder %s191, %s192
    %p206 = scmp.eq.s32.totalorder %s22, 1
    %p207 = por %p205, %p206
    %p209 = scmp.ne.s32.totalorder %s192, %s208
    %p210 = scmp.eq.s32.totalorder %s22, 0
    %p211 = por %p209, %p210
    %s213 = sadd.s32 %s212, 1
    %p216 = scmp.eq.s32.totalorder %s16, 1
    %p217 = scmp.ne.s32.totalorder %s212, %s214
    %p218 = scmp.eq.s32.totalorder %s16, 0
    %p219 = por %p217, %p218
    %p220 = scmp.ne.s32.totalorder %s212, %s214
    %p221 = scmp.eq.s32.totalorder %s21, 1
    %p222 = por %p220, %p221
    %p223 = scmp.ne.s32.totalorder %s214, %s215
    %p224 = scmp.eq.s32.totalorder %s21, 0
    %p225 = por %p223, %p224
    %p226 = scmp.ne.s32.totalorder %s214, %s215
    %p227 = scmp.eq.s32.totalorder %s22, 1
    %p228 = por %p226, %p227
    %p230 = scmp.ne.s32.totalorder %s215, %s229
    %p231 = scmp.eq.s32.totalorder %s22, 0
    %p232 = por %p230, %p231
    %s234 = sadd.s32 %s233, 1
    %p237 = scmp.eq.s32.totalorder %s16, 1
    %p238 = scmp.ne.s32.totalorder %s233, %s235
    %p239 = scmp.eq.s32.totalorder %s16, 0
    %p240 = por %p238, %p239
    %p241 = scmp.ne.s32.totalorder %s233, %s235
    %p242 = scmp.eq.s32.totalorder %s21, 1
    %p243 = por %p241, %p242
    %p244 = scmp.ne.s32.totalorder %s235, %s236
    %p245 = scmp.eq.s32.totalorder %s21, 0
    %p246 = por %p244, %p245
    %p247 = scmp.ne.s32.totalorder %s235, %s236
    %p248 = scmp.eq.s32.totalorder %s22, 1
    %p249 = por %p247, %p248
    %p251 = scmp.ne.s32.totalorder %s236, %s250
    %p252 = scmp.eq.s32.totalorder %s22, 0
    %p253 = por %p251, %p252
    %s254 = ssub.s32 %s16, %s23
    %p255 = scmp.eq.s32.totalorder %s254, 0
    %s257 = sadd.s32 %s256, 1
    %s258 = scalar_select %p255, %s256, %s257
    %p261 = pneg %p255
    %p262 = scmp.eq.s32.totalorder %s16, 1
    %p263 = por %p261, %p262
    %p264 = scmp.ne.s32.totalorder %s256, %s259
    %p265 = scmp.eq.s32.totalorder %s16, 0
    %p266 = por %p264, %p265
    %p267 = scmp.ne.s32.totalorder %s256, %s259
    %p268 = scmp.eq.s32.totalorder %s21, 1
    %p269 = por %p267, %p268
    %p270 = scmp.ne.s32.totalorder %s259, %s260
    %p271 = scmp.eq.s32.totalorder %s21, 0
    %p272 = por %p270, %p271
    %p273 = scmp.ne.s32.totalorder %s259, %s260
    %p274 = scmp.eq.s32.totalorder %s22, 1
    %p275 = por %p273, %p274
    %p277 = scmp.ne.s32.totalorder %s260, %s276
    %p278 = scmp.eq.s32.totalorder %s22, 0
    %p279 = por %p277, %p278
    %s280 = ssub.s32 %s16, %s23
    %p281 = scmp.eq.s32.totalorder %s280, 0
    %s283 = sadd.s32 %s282, 1
    %s284 = scalar_select %p281, %s282, %s283
    %p287 = pneg %p281
    %p288 = scmp.eq.s32.totalorder %s16, 1
    %p289 = por %p287, %p288
    %p290 = scmp.ne.s32.totalorder %s282, %s285
    %p291 = scmp.eq.s32.totalorder %s16, 0
    %p292 = por %p290, %p291
    %p293 = scmp.ne.s32.totalorder %s282, %s285
    %p294 = scmp.eq.s32.totalorder %s21, 1
    %p295 = por %p293, %p294
    %p296 = scmp.ne.s32.totalorder %s285, %s286
    %p297 = scmp.eq.s32.totalorder %s21, 0
    %p298 = por %p296, %p297
    %p299 = scmp.ne.s32.totalorder %s285, %s286
    %p300 = scmp.eq.s32.totalorder %s22, 1
    %p301 = por %p299, %p300
    %p303 = scmp.ne.s32.totalorder %s286, %s302
    %p304 = scmp.eq.s32.totalorder %s22, 0
    %p305 = por %p303, %p304
    %p306 = scmp.le.s32.totalorder 1, %s16
    %p307 = scmp.lt.s32.totalorder %s16, 3
    %p308 = pnand %p306, %p307
    %p309 = pneg %p308
    // Predicated region
    $region9: #{residual_block_forward.4} parent=5 // pred_check
      _
    $region10: #{residual_block_forward.4} parent=5 // pred_check_branch
      %311 = sbr.rel (%p308) target = $region12
    $region11: #{residual_block_forward.4} parent=5 // pred_region
      %s312 = ssub.s32 %s16, 1
      // Predicated region
      $region13: #{residual_block_forward.4} parent=11 // pred_check
        %p313 = pneg %p225
      $region14: #{residual_block_forward.4} parent=11 // pred_check_branch
        %315 = sbr.rel (%p313) target = $region16
      $region15: #{residual_block_forward.4} parent=11 // pred_region
        _
      $region16: #{residual_block_forward.4} parent=11 // pred_fallthru
        _
      // Predicated region
      $region17: #{residual_block_forward.4} parent=11 // pred_check
        %p316 = pneg %p246
      $region18: #{residual_block_forward.4} parent=11 // pred_check_branch
        %318 = sbr.rel (%p316) target = $region20
      $region19: #{residual_block_forward.4} parent=11 // pred_region
        _
      $region20: #{residual_block_forward.4} parent=11 // pred_fallthru
        _
    $region12: #{residual_block_forward.4} parent=5 // pred_fallthru
      _
    %p319 = scmp.lt.s32.totalorder %s16, 2
    // Predicated region
    $region21: #{residual_block_forward.4} parent=5 // pred_check
      %p320 = pneg %p319
    $region22: #{residual_block_forward.4} parent=5 // pred_check_branch
      %322 = sbr.rel (%p320) target = $region24
    $region23: #{residual_block_forward.4} parent=5 // pred_region
      // Predicated region
      $region25: #{residual_block_forward.4} parent=23 // pred_check
        %p323 = pneg %p44
      $region26: #{residual_block_forward.4} parent=23 // pred_check_branch
        %325 = sbr.rel (%p323) target = $region28
      $region27: #{residual_block_forward.4} parent=23 // pred_region
        %s326 = smul.u32 %s16, 3
        %s327 = ssub.s32 %s326, 1
        %p328 = scmp.gt.s32.totalorder %s327, 0
        %s329 = scalar_select %p328, %s327, 0
        %p330 = scmp.lt.s32.totalorder %s329, 5
        %s331 = scalar_select %p330, %s329, 5
        %s332 = smul.addr %s331, 8
        %s333 = scalar_lea.vmem %s0, %s332
        %s334 = smul.u32 %s16, 3
        %s335 = ssub.s32 %s334, 1
        %p336 = scmp.gt.s32.totalorder %s335, 0
        %s337 = scalar_select %p336, %s335, 0
      $region28: #{residual_block_forward.4} parent=23 // pred_fallthru
        _
      // Predicated region
      $region29: #{residual_block_forward.4} parent=23 // pred_check
        %p338 = pneg %p70
      $region30: #{residual_block_forward.4} parent=23 // pred_check_branch
        %340 = sbr.rel (%p338) target = $region32
      $region31: #{residual_block_forward.4} parent=23 // pred_region
        %s341 = smul.u32 3, %s16
        %p342 = scmp.lt.s32.totalorder %s341, 5
        %s343 = scalar_select %p342, %s341, 5
        %s344 = smul.addr %s343, 8
        %s345 = scalar_lea.vmem %s1, %s344
        %s346 = smul.u32 3, %s16
      $region32: #{residual_block_forward.4} parent=23 // pred_fallthru
        _
      // Predicated region
      $region33: #{residual_block_forward.4} parent=23 // pred_check
        %p347 = pneg %p104
      $region34: #{residual_block_forward.4} parent=23 // pred_check_branch
        %349 = sbr.rel (%p347) target = $region36
      $region35: #{residual_block_forward.4} parent=23 // pred_region
        %s350 = sadd.s32 %s16, 1
        %s351 = smul.u32 %s350, 3
        %p352 = scmp.lt.s32.totalorder %s351, 5
        %s353 = scalar_select %p352, %s351, 5
        %p354 = scmp.lt.s32.totalorder %s353, 5
        %s355 = scalar_select %p354, %s353, 5
        %s356 = smul.addr %s355, 8
        %s357 = scalar_lea.vmem %s2, %s356
        %s358 = sadd.s32 %s16, 1
        %s359 = smul.u32 %s358, 3
        %p360 = scmp.lt.s32.totalorder %s359, 5
        %s361 = scalar_select %p360, %s359, 5
      $region36: #{residual_block_forward.4} parent=23 // pred_fallthru
        _
      // Predicated region
      $region37: #{residual_block_forward.4} parent=23 // pred_check
        %p362 = pneg %p138
      $region38: #{residual_block_forward.4} parent=23 // pred_check_branch
        %364 = sbr.rel (%p362) target = $region40
      $region39: #{residual_block_forward.4} parent=23 // pred_region
        %s365 = smul.u32 %s16, 3
        %s366 = ssub.s32 %s365, 1
        %p367 = scmp.gt.s32.totalorder %s366, 0
        %s368 = scalar_select %p367, %s366, 0
        %p369 = scmp.lt.s32.totalorder %s368, 5
        %s370 = scalar_select %p369, %s368, 5
        %s371 = scalar_lea.vmem %s3, %s370
        %s372 = smul.u32 %s16, 3
        %s373 = ssub.s32 %s372, 1
        %p374 = scmp.gt.s32.totalorder %s373, 0
        %s375 = scalar_select %p374, %s373, 0
      $region40: #{residual_block_forward.4} parent=23 // pred_fallthru
        _
      // Predicated region
      $region41: #{residual_block_forward.4} parent=23 // pred_check
        %p376 = pneg %p164
      $region42: #{residual_block_forward.4} parent=23 // pred_check_branch
        %378 = sbr.rel (%p376) target = $region44
      $region43: #{residual_block_forward.4} parent=23 // pred_region
        %s379 = smul.u32 3, %s16
        %p380 = scmp.lt.s32.totalorder %s379, 5
        %s381 = scalar_select %p380, %s379, 5
        %s382 = scalar_lea.vmem %s4, %s381
        %s383 = smul.u32 3, %s16
      $region44: #{residual_block_forward.4} parent=23 // pred_fallthru
        _
      // Predicated region
      $region45: #{residual_block_forward.4} parent=23 // pred_check
        %p384 = pneg %p198
      $region46: #{residual_block_forward.4} parent=23 // pred_check_branch
        %386 = sbr.rel (%p384) target = $region48
      $region47: #{residual_block_forward.4} parent=23 // pred_region
        %s387 = sadd.s32 %s16, 1
        %s388 = smul.u32 %s387, 3
        %p389 = scmp.lt.s32.totalorder %s388, 5
        %s390 = scalar_select %p389, %s388, 5
        %p391 = scmp.lt.s32.totalorder %s390, 5
        %s392 = scalar_select %p391, %s390, 5
        %s393 = scalar_lea.vmem %s5, %s392
        %s394 = sadd.s32 %s16, 1
        %s395 = smul.u32 %s394, 3
        %p396 = scmp.lt.s32.totalorder %s395, 5
        %s397 = scalar_select %p396, %s395, 5
      $region48: #{residual_block_forward.4} parent=23 // pred_fallthru
        _
    $region24: #{residual_block_forward.4} parent=5 // pred_fallthru
      _
    %p398 = scmp.le.s32.totalorder 1, %s16
    %p399 = scmp.lt.s32.totalorder %s16, 3
    %p400 = pnand %p398, %p399
    %p401 = pneg %p400
    // Predicated region
    $region49: #{residual_block_forward.4} parent=5 // pred_check
      _
    $region50: #{residual_block_forward.4} parent=5 // pred_check_branch
      %403 = sbr.rel (%p400) target = $region52
    $region51: #{residual_block_forward.4} parent=5 // pred_region
      %s404 = ssub.s32 %s16, 1
      %s405 = smul.u32 %s21, 3
      %s406 = ssub.s32 %s405, 1
      %p407 = scmp.gt.s32.totalorder %s406, 0
      %s408 = scalar_select %p407, %s406, 0
      %p409 = scmp.lt.s32.totalorder %s408, 5
      %s410 = scalar_select %p409, %s408, 5
      %s411 = smul.addr %s410, 8
      %s412 = scalar_lea.vmem %s0, %s411
      %p413 = pneg %p50
      %p414 = pneg %p47
      %s415 = smul.u32 3, %s21
      %p416 = scmp.lt.s32.totalorder %s415, 5
      %s417 = scalar_select %p416, %s415, 5
      %s418 = smul.addr %s417, 8
      %s419 = scalar_lea.vmem %s1, %s418
      %p420 = pneg %p76
      %p421 = pneg %p73
      %s422 = sadd.s32 %s21, 1
      %s423 = smul.u32 %s422, 3
      %p424 = scmp.lt.s32.totalorder %s423, 5
      %s425 = scalar_select %p424, %s423, 5
      %p426 = scmp.lt.s32.totalorder %s425, 5
      %s427 = scalar_select %p426, %s425, 5
      %s428 = smul.addr %s427, 8
      %s429 = scalar_lea.vmem %s2, %s428
      %p430 = pneg %p110
      %p431 = pneg %p107
      %s432 = smul.u32 %s21, 3
      %s433 = ssub.s32 %s432, 1
      %p434 = scmp.gt.s32.totalorder %s433, 0
      %s435 = scalar_select %p434, %s433, 0
      %p436 = scmp.lt.s32.totalorder %s435, 5
      %s437 = scalar_select %p436, %s435, 5
      %s438 = scalar_lea.vmem %s3, %s437
      %p439 = pneg %p144
      %p440 = pneg %p141
      %s441 = smul.u32 3, %s21
      %p442 = scmp.lt.s32.totalorder %s441, 5
      %s443 = scalar_select %p442, %s441, 5
      %s444 = scalar_lea.vmem %s4, %s443
      %p445 = pneg %p170
      %p446 = pneg %p167
      %s447 = sadd.s32 %s21, 1
      %s448 = smul.u32 %s447, 3
      %p449 = scmp.lt.s32.totalorder %s448, 5
      %s450 = scalar_select %p449, %s448, 5
      %p451 = scmp.lt.s32.totalorder %s450, 5
      %s452 = scalar_select %p451, %s450, 5
      %s453 = scalar_lea.vmem %s5, %s452
      %p454 = pneg %p204
      %p455 = pneg %p201
      %p456 = pneg %p225
      %p457 = pneg %p222
      %p458 = pneg %p246
      %p459 = pneg %p243
      %p460 = pneg %p272
      %p461 = pneg %p269
      %s462 = smul.u32 3, %s21
      %p463 = scmp.lt.s32.totalorder %s462, 5
      %s464 = scalar_select %p463, %s462, 5
      %s465 = smul.addr %s464, 8
      %s466 = scalar_lea.vmem %s8, %s465
      %p467 = pneg %p298
      %p468 = pneg %p295
      %p469 = scmp.lt.s32.totalorder %s21, 1
      %s470 = scalar_select %p469, %s21, 1
      %s471 = smul.addr %s470, 8
      %s472 = scalar_lea.vmem %s9, %s471
      %s473 = smul.u32 %s21, 3
      %s474 = ssub.s32 %s473, 1
      %p475 = scmp.gt.s32.totalorder %s474, 0
      %s476 = scalar_select %p475, %s474, 0
      %p477 = scmp.lt.s32.totalorder %s476, 5
      %s478 = scalar_select %p477, %s476, 5
      %s479 = smul.addr %s478, 8
      %s480 = scalar_lea.vmem %s0, %s479
      %s481 = smul.u32 %s21, 3
      %s482 = ssub.s32 %s481, 1
      %p483 = scmp.gt.s32.totalorder %s482, 0
      %s484 = scalar_select %p483, %s482, 0
      %s485 = smul.u32 3, %s21
      %p486 = scmp.lt.s32.totalorder %s485, 5
      %s487 = scalar_select %p486, %s485, 5
      %s488 = smul.addr %s487, 8
      %s489 = scalar_lea.vmem %s1, %s488
      %s490 = smul.u32 3, %s21
      %s491 = sadd.s32 %s21, 1
      %s492 = smul.u32 %s491, 3
      %p493 = scmp.lt.s32.totalorder %s492, 5
      %s494 = scalar_select %p493, %s492, 5
      %p495 = scmp.lt.s32.totalorder %s494, 5
      %s496 = scalar_select %p495, %s494, 5
      %s497 = smul.addr %s496, 8
      %s498 = scalar_lea.vmem %s2, %s497
      %s499 = sadd.s32 %s21, 1
      %s500 = smul.u32 %s499, 3
      %p501 = scmp.lt.s32.totalorder %s500, 5
      %s502 = scalar_select %p501, %s500, 5
      %s503 = smul.u32 %s21, 3
      %s504 = ssub.s32 %s503, 1
      %p505 = scmp.gt.s32.totalorder %s504, 0
      %s506 = scalar_select %p505, %s504, 0
      %p507 = scmp.lt.s32.totalorder %s506, 5
      %s508 = scalar_select %p507, %s506, 5
      %s509 = scalar_lea.vmem %s3, %s508
      %s510 = smul.u32 %s21, 3
      %s511 = ssub.s32 %s510, 1
      %p512 = scmp.gt.s32.totalorder %s511, 0
      %s513 = scalar_select %p512, %s511, 0
      %s514 = smul.u32 3, %s21
      %p515 = scmp.lt.s32.totalorder %s514, 5
      %s516 = scalar_select %p515, %s514, 5
      %s517 = scalar_lea.vmem %s4, %s516
      %s518 = smul.u32 3, %s21
      %s519 = sadd.s32 %s21, 1
      %s520 = smul.u32 %s519, 3
      %p521 = scmp.lt.s32.totalorder %s520, 5
      %s522 = scalar_select %p521, %s520, 5
      %p523 = scmp.lt.s32.totalorder %s522, 5
      %s524 = scalar_select %p523, %s522, 5
      %s525 = scalar_lea.vmem %s5, %s524
      %s526 = sadd.s32 %s21, 1
      %s527 = smul.u32 %s526, 3
      %p528 = scmp.lt.s32.totalorder %s527, 5
      %s529 = scalar_select %p528, %s527, 5
      %s530 = smul.u32 3, %s21
      %p531 = scmp.lt.s32.totalorder %s530, 5
      %s532 = scalar_select %p531, %s530, 5
      %s533 = smul.addr %s532, 8
      %s534 = scalar_lea.vmem %s8, %s533
      %s535 = smul.u32 3, %s21
      %p536 = scmp.lt.s32.totalorder %s21, 1
      %s537 = scalar_select %p536, %s21, 1
      %s538 = smul.addr %s537, 8
      %s539 = scalar_lea.vmem %s9, %s538
      %v540 = vld [vmem:[%s6] sm:$0xff]
      %v541 = vld [vmem:[%s489] sm:$0xff]
      %v542 = vld [vmem:[%s489 + $0x8] sm:$0xff]
      %v543 = vld [vmem:[%s489 + $0x10] sm:$0xff]
      %545 = vset.pattern.permute.xlu0 0
      %546 = vperm.xlu0 %545, %v540
      %v547 = vpop.permute.xlu0 %546
      %v549 = vmul.f32 %v541, %v547
      %v550 = vmul.f32 %v542, %v547
      %v551 = vmul.f32 %v543, %v547
      %552 = vset.pattern.permute.xlu0 1
      %553 = vperm.xlu0 %552, %v540
      %v554 = vpop.permute.xlu0 %553
      %v556 = vadd.f32 %v549, %v554
      %v557 = vadd.f32 %v550, %v554
      %v558 = vadd.f32 %v551, %v554
      %v559 = vmax.f32 %v556, 0.0
      %v560 = vmax.f32 %v557, 0.0
      %v561 = vmax.f32 %v558, 0.0
      %v562 = vld [vmem:[%s517] sm:$0x7]
      %v564 = vlaneseq
      %v565 = vshrl.u32 %v564, 7
      %v566 = vsub.s32 0, %v565
      %v567 = vrot.slane %v562, %v566
      %v568 = vlaneseq
      %v569 = vshrl.u32 %v568, 7
      %v570 = vsub.s32 1, %v569
      %v571 = vrot.slane %v562, %v570
      %v572 = vlaneseq
      %v573 = vshrl.u32 %v572, 7
      %v574 = vsub.s32 2, %v573
      %v575 = vrot.slane %v562, %v574
      %v579 = vmul.f32 %v559, %v567
      %v580 = vmul.f32 %v560, %v571
      %v581 = vmul.f32 %v561, %v575
      %v582 = vld [vmem:[%s480] sm:$0xff]
      %v583 = vmul.f32 %v582, %v547
      %v584 = vadd.f32 %v583, %v554
      %v585 = vmax.f32 %v584, 0.0
      %v586 = vld [vmem:[%s509] sm:$0x1]
      %v588 = vlaneseq
      %v589 = vshrl.u32 %v588, 7
      %v590 = vsub.s32 0, %v589
      %v591 = vrot.slane %v586, %v590
      %v593 = vmul.f32 %v585, %v591
      %v594 = vld [vmem:[%s498] sm:$0xff]
      %v595 = vmul.f32 %v594, %v547
      %v596 = vadd.f32 %v595, %v554
      %v597 = vmax.f32 %v596, 0.0
      %v598 = vld [vmem:[%s525] sm:$0x1]
      %v600 = vlaneseq
      %v601 = vshrl.u32 %v600, 7
      %v602 = vsub.s32 0, %v601
      %v603 = vrot.slane %v598, %v602
      %v605 = vmul.f32 %v597, %v603
      %v606 = vld [vmem:[%s7] sm:$0xff]
      %s607 = scalar_lea.vmem %s7, 8
      %v608 = vld [vmem:[%s607] sm:$0xff]
      %613 = vrot.lane.b32.xlu0 %v593, 18
      %v614 = vpop.permute.xlu0 %613
      %615 = vrot.lane.b32.xlu0 %v579, 18
      %v616 = vpop.permute.xlu0 %615
      %617 = vrot.lane.b32.xlu0 %v580, 18
      %v618 = vpop.permute.xlu0 %617
      %619 = vrot.lane.b32.xlu0 %v581, 18
      %v620 = vpop.permute.xlu0 %619
      %vm621 = vcmask 146432
      %v622 = vsel %vm621, %v614, %v616
      %v623 = vsel %vm621, %v616, %v618
      %v624 = vsel %vm621, %v618, %v620
      %vm628 = vcmask 64512
      %v630 = vsel %vm628, %v608, 0
      %632 = vmatprep.subr.mxu0 %v623
      %633 = vmatpush1.msra.mxu0 %v622
      %634 = vmatprep.subr.mxu0 0.0
      %635 = vmatpush1.msra.mxu0 0.0
      %636 = vmatprep.subr.mxu0 0.0
      %637 = vmatpush1.msra.mxu0 0.0
      %638 = vmatprep.subr.mxu0 0.0
      %639 = vmatpush1.msra.mxu0 0.0
      %640 = vmatprep.subr.mxu0 0.0
      %641 = vmatpush1.msra.mxu0 0.0
      %642 = vmatprep.subr.mxu0 0.0
      %643 = vmatpush1.msra.mxu0 0.0
      %644 = vmatprep.subr.mxu0 0.0
      %645 = vmatpush1.msra.mxu0 0.0
      %646 = vmatprep.subr.mxu0 0.0
      %647 = vmatpush1.msra.mxu0 0.0
      %648 = vmatprep.subr.mxu0 0.0
      %649 = vmatpush1.msra.mxu0 0.0
      %650 = vmatprep.subr.mxu0 0.0
      %651 = vmatpush1.msra.mxu0 0.0
      %652 = vmatprep.subr.mxu0 0.0
      %653 = vmatpush1.msra.mxu0 0.0
      %654 = vmatprep.subr.mxu0 0.0
      %655 = vmatpush1.msra.mxu0 0.0
      %656 = vmatprep.subr.mxu0 0.0
      %657 = vmatpush1.msra.mxu0 0.0
      %658 = vmatprep.subr.mxu0 0.0
      %659 = vmatpush1.msra.mxu0 0.0
      %660 = vmatprep.subr.mxu0 0.0
      %661 = vmatpush1.msra.mxu0 0.0
      %662 = vmatprep.subr.mxu0 0.0
      %663 = vmatpush1.msra.mxu0 0.0
      %664 = vmatprep.subr.mxu0 0.0
      %665 = vmatpush1.msra.mxu0 0.0
      %666 = vmatprep.subr.mxu0 0.0
      %667 = vmatpush1.msra.mxu0 0.0
      %668 = vmatprep.subr.mxu0 0.0
      %669 = vmatpush1.msra.mxu0 0.0
      %670 = vmatprep.subr.mxu0 0.0
      %671 = vmatpush1.msra.mxu0 0.0
      %672 = vmatprep.subr.mxu0 0.0
      %673 = vmatpush1.msra.mxu0 0.0
      %674 = vmatprep.subr.mxu0 0.0
      %675 = vmatpush1.msra.mxu0 0.0
      %676 = vmatprep.subr.mxu0 0.0
      %677 = vmatpush1.msra.mxu0 0.0
      %678 = vmatprep.subr.mxu0 0.0
      %679 = vmatpush1.msra.mxu0 0.0
      %680 = vmatprep.subr.mxu0 0.0
      %681 = vmatpush1.msra.mxu0 0.0
      %682 = vmatprep.subr.mxu0 0.0
      %683 = vmatpush1.msra.mxu0 0.0
      %684 = vmatprep.subr.mxu0 0.0
      %685 = vmatpush1.msra.mxu0 0.0
      %686 = vmatprep.subr.mxu0 0.0
      %687 = vmatpush1.msra.mxu0 0.0
      %688 = vmatprep.subr.mxu0 0.0
      %689 = vmatpush1.msra.mxu0 0.0
      %690 = vmatprep.subr.mxu0 0.0
      %691 = vmatpush1.msra.mxu0 0.0
      %692 = vmatprep.subr.mxu0 0.0
      %693 = vmatpush1.msra.mxu0 0.0
      %694 = vmatprep.subr.mxu0 0.0
      %695 = vmatpush1.msra.mxu0 0.0
      %696 = vmatprep.mubr.f32.mxu0 0.0
      %697 = vmatmul.mubr.f32.gmra.mrb[0].mxu0 %v630
      %v698 = vpop.f32.mrb[0].mxu0
      %v699 = vadd.f32 0.0, %v698
      %v700 = vpop.f32.mrb[0].mxu0
      %v701 = vadd.f32 0.0, %v700
      %702 = vdwg.mxu0
      %703 = vmatprep.subr.mxu0 0.0
      %704 = vmatpush1.msra.mxu0 %v624
      %705 = vmatprep.subr.mxu0 0.0
      %706 = vmatpush1.msra.mxu0 0.0
      %707 = vmatprep.subr.mxu0 0.0
      %708 = vmatpush1.msra.mxu0 0.0
      %709 = vmatprep.subr.mxu0 0.0
      %710 = vmatpush1.msra.mxu0 0.0
      %711 = vmatprep.subr.mxu0 0.0
      %712 = vmatpush1.msra.mxu0 0.0
      %713 = vmatprep.subr.mxu0 0.0
      %714 = vmatpush1.msra.mxu0 0.0
      %715 = vmatprep.subr.mxu0 0.0
      %716 = vmatpush1.msra.mxu0 0.0
      %717 = vmatprep.subr.mxu0 0.0
      %718 = vmatpush1.msra.mxu0 0.0
      %719 = vmatprep.subr.mxu0 0.0
      %720 = vmatpush1.msra.mxu0 0.0
      %721 = vmatprep.subr.mxu0 0.0
      %722 = vmatpush1.msra.mxu0 0.0
      %723 = vmatprep.subr.mxu0 0.0
      %724 = vmatpush1.msra.mxu0 0.0
      %725 = vmatprep.subr.mxu0 0.0
      %726 = vmatpush1.msra.mxu0 0.0
      %727 = vmatprep.subr.mxu0 0.0
      %728 = vmatpush1.msra.mxu0 0.0
      %729 = vmatprep.subr.mxu0 0.0
      %730 = vmatpush1.msra.mxu0 0.0
      %731 = vmatprep.subr.mxu0 0.0
      %732 = vmatpush1.msra.mxu0 0.0
      %733 = vmatprep.subr.mxu0 0.0
      %734 = vmatpush1.msra.mxu0 0.0
      %735 = vmatprep.subr.mxu0 0.0
      %736 = vmatpush1.msra.mxu0 0.0
      %737 = vmatprep.subr.mxu0 0.0
      %738 = vmatpush1.msra.mxu0 0.0
      %739 = vmatprep.subr.mxu0 0.0
      %740 = vmatpush1.msra.mxu0 0.0
      %741 = vmatprep.subr.mxu0 0.0
      %742 = vmatpush1.msra.mxu0 0.0
      %743 = vmatprep.subr.mxu0 0.0
      %744 = vmatpush1.msra.mxu0 0.0
      %745 = vmatprep.subr.mxu0 0.0
      %746 = vmatpush1.msra.mxu0 0.0
      %747 = vmatprep.subr.mxu0 0.0
      %748 = vmatpush1.msra.mxu0 0.0
      %749 = vmatprep.subr.mxu0 0.0
      %750 = vmatpush1.msra.mxu0 0.0
      %751 = vmatprep.subr.mxu0 0.0
      %752 = vmatpush1.msra.mxu0 0.0
      %753 = vmatprep.subr.mxu0 0.0
      %754 = vmatpush1.msra.mxu0 0.0
      %755 = vmatprep.subr.mxu0 0.0
      %756 = vmatpush1.msra.mxu0 0.0
      %757 = vmatprep.subr.mxu0 0.0
      %758 = vmatpush1.msra.mxu0 0.0
      %759 = vmatprep.subr.mxu0 0.0
      %760 = vmatpush1.msra.mxu0 0.0
      %761 = vmatprep.subr.mxu0 0.0
      %762 = vmatpush1.msra.mxu0 0.0
      %763 = vmatprep.subr.mxu0 0.0
      %764 = vmatpush1.msra.mxu0 0.0
      %765 = vmatprep.subr.mxu0 0.0
      %766 = vmatpush1.msra.mxu0 0.0
      %767 = vmatprep.mubr.f32.mxu0 0.0
      %768 = vmatmul.mubr.f32.gmra.mrb[0].mxu0 %v630
      %v769 = vpop.f32.mrb[0].mxu0
      %v770 = vadd.f32 0.0, %v769
      %v771 = vpop.f32.mrb[0].mxu0
      %772 = vdwg.mxu0
      %773 = vrot.lane.b32.xlu0 %v593, 19
      %v774 = vpop.permute.xlu0 %773
      %775 = vrot.lane.b32.xlu0 %v579, 19
      %v776 = vpop.permute.xlu0 %775
      %777 = vrot.lane.b32.xlu0 %v580, 19
      %v778 = vpop.permute.xlu0 %777
      %779 = vrot.lane.b32.xlu0 %v581, 19
      %v780 = vpop.permute.xlu0 %779
      %vm781 = vcmask 154624
      %v782 = vsel %vm781, %v774, %v776
      %v783 = vsel %vm781, %v776, %v778
      %v784 = vsel %vm781, %v778, %v780
      %v789 = vsel %vm628, %v606, 0
      %791 = vmatprep.subr.mxu0 %v783
      %792 = vmatpush1.msra.mxu0 %v782
      %793 = vmatprep.subr.mxu0 0.0
      %794 = vmatpush1.msra.mxu0 0.0
      %795 = vmatprep.subr.mxu0 0.0
      %796 = vmatpush1.msra.mxu0 0.0
      %797 = vmatprep.subr.mxu0 0.0
      %798 = vmatpush1.msra.mxu0 0.0
      %799 = vmatprep.subr.mxu0 0.0
      %800 = vmatpush1.msra.mxu0 0.0
      %801 = vmatprep.subr.mxu0 0.0
      %802 = vmatpush1.msra.mxu0 0.0
      %803 = vmatprep.subr.mxu0 0.0
      %804 = vmatpush1.msra.mxu0 0.0
      %805 = vmatprep.subr.mxu0 0.0
      %806 = vmatpush1.msra.mxu0 0.0
      %807 = vmatprep.subr.mxu0 0.0
      %808 = vmatpush1.msra.mxu0 0.0
      %809 = vmatprep.subr.mxu0 0.0
      %810 = vmatpush1.msra.mxu0 0.0
      %811 = vmatprep.subr.mxu0 0.0
      %812 = vmatpush1.msra.mxu0 0.0
      %813 = vmatprep.subr.mxu0 0.0
      %814 = vmatpush1.msra.mxu0 0.0
      %815 = vmatprep.subr.mxu0 0.0
      %816 = vmatpush1.msra.mxu0 0.0
      %817 = vmatprep.subr.mxu0 0.0
      %818 = vmatpush1.msra.mxu0 0.0
      %819 = vmatprep.subr.mxu0 0.0
      %820 = vmatpush1.msra.mxu0 0.0
      %821 = vmatprep.subr.mxu0 0.0
      %822 = vmatpush1.msra.mxu0 0.0
      %823 = vmatprep.subr.mxu0 0.0
      %824 = vmatpush1.msra.mxu0 0.0
      %825 = vmatprep.subr.mxu0 0.0
      %826 = vmatpush1.msra.mxu0 0.0
      %827 = vmatprep.subr.mxu0 0.0
      %828 = vmatpush1.msra.mxu0 0.0
      %829 = vmatprep.subr.mxu0 0.0
      %830 = vmatpush1.msra.mxu0 0.0
      %831 = vmatprep.subr.mxu0 0.0
      %832 = vmatpush1.msra.mxu0 0.0
      %833 = vmatprep.subr.mxu0 0.0
      %834 = vmatpush1.msra.mxu0 0.0
      %835 = vmatprep.subr.mxu0 0.0
      %836 = vmatpush1.msra.mxu0 0.0
      %837 = vmatprep.subr.mxu0 0.0
      %838 = vmatpush1.msra.mxu0 0.0
      %839 = vmatprep.subr.mxu0 0.0
      %840 = vmatpush1.msra.mxu0 0.0
      %841 = vmatprep.subr.mxu0 0.0
      %842 = vmatpush1.msra.mxu0 0.0
      %843 = vmatprep.subr.mxu0 0.0
      %844 = vmatpush1.msra.mxu0 0.0
      %845 = vmatprep.subr.mxu0 0.0
      %846 = vmatpush1.msra.mxu0 0.0
      %847 = vmatprep.subr.mxu0 0.0
      %848 = vmatpush1.msra.mxu0 0.0
      %849 = vmatprep.subr.mxu0 0.0
      %850 = vmatpush1.msra.mxu0 0.0
      %851 = vmatprep.subr.mxu0 0.0
      %852 = vmatpush1.msra.mxu0 0.0
      %853 = vmatprep.subr.mxu0 0.0
      %854 = vmatpush1.msra.mxu0 0.0
      %855 = vmatprep.mubr.f32.mxu0 0.0
      %856 = vmatmul.mubr.f32.gmra.mrb[0].mxu0 %v789
      %v857 = vpop.f32.mrb[0].mxu0
      %v858 = vadd.f32 %v699, %v857
      %v859 = vpop.f32.mrb[0].mxu0
      %v860 = vadd.f32 %v701, %v859
      %861 = vdwg.mxu0
      %862 = vmatprep.subr.mxu0 0.0
      %863 = vmatpush1.msra.mxu0 %v784
      %864 = vmatprep.subr.mxu0 0.0
      %865 = vmatpush1.msra.mxu0 0.0
      %866 = vmatprep.subr.mxu0 0.0
      %867 = vmatpush1.msra.mxu0 0.0
      %868 = vmatprep.subr.mxu0 0.0
      %869 = vmatpush1.msra.mxu0 0.0
      %870 = vmatprep.subr.mxu0 0.0
      %871 = vmatpush1.msra.mxu0 0.0
      %872 = vmatprep.subr.mxu0 0.0
      %873 = vmatpush1.msra.mxu0 0.0
      %874 = vmatprep.subr.mxu0 0.0
      %875 = vmatpush1.msra.mxu0 0.0
      %876 = vmatprep.subr.mxu0 0.0
      %877 = vmatpush1.msra.mxu0 0.0
      %878 = vmatprep.subr.mxu0 0.0
      %879 = vmatpush1.msra.mxu0 0.0
      %880 = vmatprep.subr.mxu0 0.0
      %881 = vmatpush1.msra.mxu0 0.0
      %882 = vmatprep.subr.mxu0 0.0
      %883 = vmatpush1.msra.mxu0 0.0
      %884 = vmatprep.subr.mxu0 0.0
      %885 = vmatpush1.msra.mxu0 0.0
      %886 = vmatprep.subr.mxu0 0.0
      %887 = vmatpush1.msra.mxu0 0.0
      %888 = vmatprep.subr.mxu0 0.0
      %889 = vmatpush1.msra.mxu0 0.0
      %890 = vmatprep.subr.mxu0 0.0
      %891 = vmatpush1.msra.mxu0 0.0
      %892 = vmatprep.subr.mxu0 0.0
      %893 = vmatpush1.msra.mxu0 0.0
      %894 = vmatprep.subr.mxu0 0.0
      %895 = vmatpush1.msra.mxu0 0.0
      %896 = vmatprep.subr.mxu0 0.0
      %897 = vmatpush1.msra.mxu0 0.0
      %898 = vmatprep.subr.mxu0 0.0
      %899 = vmatpush1.msra.mxu0 0.0
      %900 = vmatprep.subr.mxu0 0.0
      %901 = vmatpush1.msra.mxu0 0.0
      %902 = vmatprep.subr.mxu0 0.0
      %903 = vmatpush1.msra.mxu0 0.0
      %904 = vmatprep.subr.mxu0 0.0
      %905 = vmatpush1.msra.mxu0 0.0
      %906 = vmatprep.subr.mxu0 0.0
      %907 = vmatpush1.msra.mxu0 0.0
      %908 = vmatprep.subr.mxu0 0.0
      %909 = vmatpush1.msra.mxu0 0.0
      %910 = vmatprep.subr.mxu0 0.0
      %911 = vmatpush1.msra.mxu0 0.0
      %912 = vmatprep.subr.mxu0 0.0
      %913 = vmatpush1.msra.mxu0 0.0
      %914 = vmatprep.subr.mxu0 0.0
      %915 = vmatpush1.msra.mxu0 0.0
      %916 = vmatprep.subr.mxu0 0.0
      %917 = vmatpush1.msra.mxu0 0.0
      %918 = vmatprep.subr.mxu0 0.0
      %919 = vmatpush1.msra.mxu0 0.0
      %920 = vmatprep.subr.mxu0 0.0
      %921 = vmatpush1.msra.mxu0 0.0
      %922 = vmatprep.subr.mxu0 0.0
      %923 = vmatpush1.msra.mxu0 0.0
      %924 = vmatprep.subr.mxu0 0.0
      %925 = vmatpush1.msra.mxu0 0.0
      %926 = vmatprep.mubr.f32.mxu0 0.0
      %927 = vmatmul.mubr.f32.gmra.mrb[0].mxu0 %v789
      %v928 = vpop.f32.mrb[0].mxu0
      %v929 = vadd.f32 %v770, %v928
      %v930 = vpop.f32.mrb[0].mxu0
      %931 = vdwg.mxu0
      %s932 = scalar_lea.vmem %s7, 16
      %v933 = vld [vmem:[%s932] sm:$0xff]
      %934 = vrot.lane.b32.xlu0 %v593, 17
      %v935 = vpop.permute.xlu0 %934
      %936 = vrot.lane.b32.xlu0 %v579, 17
      %v937 = vpop.permute.xlu0 %936
      %938 = vrot.lane.b32.xlu0 %v580, 17
      %v939 = vpop.permute.xlu0 %938
      %940 = vrot.lane.b32.xlu0 %v581, 17
      %v941 = vpop.permute.xlu0 %940
      %vm942 = vcmask 138240
      %v943 = vsel %vm942, %v935, %v937
      %v944 = vsel %vm942, %v937, %v939
      %v945 = vsel %vm942, %v939, %v941
      %v950 = vsel %vm628, %v933, 0
      %952 = vmatprep.subr.mxu0 %v944
      %953 = vmatpush1.msra.mxu0 %v943
      %954 = vmatprep.subr.mxu0 0.0
      %955 = vmatpush1.msra.mxu0 0.0
      %956 = vmatprep.subr.mxu0 0.0
      %957 = vmatpush1.msra.mxu0 0.0
      %958 = vmatprep.subr.mxu0 0.0
      %959 = vmatpush1.msra.mxu0 0.0
      %960 = vmatprep.subr.mxu0 0.0
      %961 = vmatpush1.msra.mxu0 0.0
      %962 = vmatprep.subr.mxu0 0.0
      %963 = vmatpush1.msra.mxu0 0.0
      %964 = vmatprep.subr.mxu0 0.0
      %965 = vmatpush1.msra.mxu0 0.0
      %966 = vmatprep.subr.mxu0 0.0
      %967 = vmatpush1.msra.mxu0 0.0
      %968 = vmatprep.subr.mxu0 0.0
      %969 = vmatpush1.msra.mxu0 0.0
      %970 = vmatprep.subr.mxu0 0.0
      %971 = vmatpush1.msra.mxu0 0.0
      %972 = vmatprep.subr.mxu0 0.0
      %973 = vmatpush1.msra.mxu0 0.0
      %974 = vmatprep.subr.mxu0 0.0
      %975 = vmatpush1.msra.mxu0 0.0
      %976 = vmatprep.subr.mxu0 0.0
      %977 = vmatpush1.msra.mxu0 0.0
      %978 = vmatprep.subr.mxu0 0.0
      %979 = vmatpush1.msra.mxu0 0.0
      %980 = vmatprep.subr.mxu0 0.0
      %981 = vmatpush1.msra.mxu0 0.0
      %982 = vmatprep.subr.mxu0 0.0
      %983 = vmatpush1.msra.mxu0 0.0
      %984 = vmatprep.subr.mxu0 0.0
      %985 = vmatpush1.msra.mxu0 0.0
      %986 = vmatprep.subr.mxu0 0.0
      %987 = vmatpush1.msra.mxu0 0.0
      %988 = vmatprep.subr.mxu0 0.0
      %989 = vmatpush1.msra.mxu0 0.0
      %990 = vmatprep.subr.mxu0 0.0
      %991 = vmatpush1.msra.mxu0 0.0
      %992 = vmatprep.subr.mxu0 0.0
      %993 = vmatpush1.msra.mxu0 0.0
      %994 = vmatprep.subr.mxu0 0.0
      %995 = vmatpush1.msra.mxu0 0.0
      %996 = vmatprep.subr.mxu0 0.0
      %997 = vmatpush1.msra.mxu0 0.0
      %998 = vmatprep.subr.mxu0 0.0
      %999 = vmatpush1.msra.mxu0 0.0
      %1000 = vmatprep.subr.mxu0 0.0
      %1001 = vmatpush1.msra.mxu0 0.0
      %1002 = vmatprep.subr.mxu0 0.0
      %1003 = vmatpush1.msra.mxu0 0.0
      %1004 = vmatprep.subr.mxu0 0.0
      %1005 = vmatpush1.msra.mxu0 0.0
      %1006 = vmatprep.subr.mxu0 0.0
      %1007 = vmatpush1.msra.mxu0 0.0
      %1008 = vmatprep.subr.mxu0 0.0
      %1009 = vmatpush1.msra.mxu0 0.0
      %1010 = vmatprep.subr.mxu0 0.0
      %1011 = vmatpush1.msra.mxu0 0.0
      %1012 = vmatprep.subr.mxu0 0.0
      %1013 = vmatpush1.msra.mxu0 0.0
      %1014 = vmatprep.subr.mxu0 0.0
      %1015 = vmatpush1.msra.mxu0 0.0
      %1016 = vmatprep.mubr.f32.mxu0 0.0
      %1017 = vmatmul.mubr.f32.gmra.mrb[0].mxu0 %v950
      %v1018 = vpop.f32.mrb[0].mxu0
      %v1019 = vadd.f32 0.0, %v1018
      %v1020 = vpop.f32.mrb[0].mxu0
      %v1021 = vadd.f32 0.0, %v1020
      %1022 = vdwg.mxu0
      %1023 = vmatprep.subr.mxu0 0.0
      %1024 = vmatpush1.msra.mxu0 %v945
      %1025 = vmatprep.subr.mxu0 0.0
      %1026 = vmatpush1.msra.mxu0 0.0
      %1027 = vmatprep.subr.mxu0 0.0
      %1028 = vmatpush1.msra.mxu0 0.0
      %1029 = vmatprep.subr.mxu0 0.0
      %1030 = vmatpush1.msra.mxu0 0.0
      %1031 = vmatprep.subr.mxu0 0.0
      %1032 = vmatpush1.msra.mxu0 0.0
      %1033 = vmatprep.subr.mxu0 0.0
      %1034 = vmatpush1.msra.mxu0 0.0
      %1035 = vmatprep.subr.mxu0 0.0
      %1036 = vmatpush1.msra.mxu0 0.0
      %1037 = vmatprep.subr.mxu0 0.0
      %1038 = vmatpush1.msra.mxu0 0.0
      %1039 = vmatprep.subr.mxu0 0.0
      %1040 = vmatpush1.msra.mxu0 0.0
      %1041 = vmatprep.subr.mxu0 0.0
      %1042 = vmatpush1.msra.mxu0 0.0
      %1043 = vmatprep.subr.mxu0 0.0
      %1044 = vmatpush1.msra.mxu0 0.0
      %1045 = vmatprep.subr.mxu0 0.0
      %1046 = vmatpush1.msra.mxu0 0.0
      %1047 = vmatprep.subr.mxu0 0.0
      %1048 = vmatpush1.msra.mxu0 0.0
      %1049 = vmatprep.subr.mxu0 0.0
      %1050 = vmatpush1.msra.mxu0 0.0
      %1051 = vmatprep.subr.mxu0 0.0
      %1052 = vmatpush1.msra.mxu0 0.0
      %1053 = vmatprep.subr.mxu0 0.0
      %1054 = vmatpush1.msra.mxu0 0.0
      %1055 = vmatprep.subr.mxu0 0.0
      %1056 = vmatpush1.msra.mxu0 0.0
      %1057 = vmatprep.subr.mxu0 0.0
      %1058 = vmatpush1.msra.mxu0 0.0
      %1059 = vmatprep.subr.mxu0 0.0
      %1060 = vmatpush1.msra.mxu0 0.0
      %1061 = vmatprep.subr.mxu0 0.0
      %1062 = vmatpush1.msra.mxu0 0.0
      %1063 = vmatprep.subr.mxu0 0.0
      %1064 = vmatpush1.msra.mxu0 0.0
      %1065 = vmatprep.subr.mxu0 0.0
      %1066 = vmatpush1.msra.mxu0 0.0
      %1067 = vmatprep.subr.mxu0 0.0
      %1068 = vmatpush1.msra.mxu0 0.0
      %1069 = vmatprep.subr.mxu0 0.0
      %1070 = vmatpush1.msra.mxu0 0.0
      %1071 = vmatprep.subr.mxu0 0.0
      %1072 = vmatpush1.msra.mxu0 0.0
      %1073 = vmatprep.subr.mxu0 0.0
      %1074 = vmatpush1.msra.mxu0 0.0
      %1075 = vmatprep.subr.mxu0 0.0
      %1076 = vmatpush1.msra.mxu0 0.0
      %1077 = vmatprep.subr.mxu0 0.0
      %1078 = vmatpush1.msra.mxu0 0.0
      %1079 = vmatprep.subr.mxu0 0.0
      %1080 = vmatpush1.msra.mxu0 0.0
      %1081 = vmatprep.subr.mxu0 0.0
      %1082 = vmatpush1.msra.mxu0 0.0
      %1083 = vmatprep.subr.mxu0 0.0
      %1084 = vmatpush1.msra.mxu0 0.0
      %1085 = vmatprep.subr.mxu0 0.0
      %1086 = vmatpush1.msra.mxu0 0.0
      %1087 = vmatprep.mubr.f32.mxu0 0.0
      %1088 = vmatmul.mubr.f32.gmra.mrb[0].mxu0 %v950
      %v1089 = vpop.f32.mrb[0].mxu0
      %v1090 = vadd.f32 0.0, %v1089
      %v1091 = vpop.f32.mrb[0].mxu0
      %1092 = vdwg.mxu0
      %v1093 = vadd.f32 %v858, %v1019
      %v1094 = vadd.f32 %v860, %v1021
      %v1095 = vadd.f32 %v929, %v1090
      %s1096 = scalar_lea.vmem %s7, 24
      %v1097 = vld [vmem:[%s1096] sm:$0xff]
      %1098 = vrot.lane.b32.xlu0 %v593, 1
      %v1099 = vpop.permute.xlu0 %1098
      %1100 = vrot.lane.b32.xlu0 %v579, 1
      %v1101 = vpop.permute.xlu0 %1100
      %1102 = vrot.lane.b32.xlu0 %v580, 1
      %v1103 = vpop.permute.xlu0 %1102
      %1104 = vrot.lane.b32.xlu0 %v581, 1
      %v1105 = vpop.permute.xlu0 %1104
      %vm1106 = vcmask 7168
      %v1107 = vsel %vm1106, %v1099, %v1101
      %v1108 = vsel %vm1106, %v1101, %v1103
      %v1109 = vsel %vm1106, %v1103, %v1105
      %v1114 = vsel %vm628, %v1097, 0
      %1116 = vmatprep.subr.mxu0 %v1108
      %1117 = vmatpush1.msra.mxu0 %v1107
      %1118 = vmatprep.subr.mxu0 0.0
      %1119 = vmatpush1.msra.mxu0 0.0
      %1120 = vmatprep.subr.mxu0 0.0
      %1121 = vmatpush1.msra.mxu0 0.0
      %1122 = vmatprep.subr.mxu0 0.0
      %1123 = vmatpush1.msra.mxu0 0.0
      %1124 = vmatprep.subr.mxu0 0.0
      %1125 = vmatpush1.msra.mxu0 0.0
      %1126 = vmatprep.subr.mxu0 0.0
      %1127 = vmatpush1.msra.mxu0 0.0
      %1128 = vmatprep.subr.mxu0 0.0
      %1129 = vmatpush1.msra.mxu0 0.0
      %1130 = vmatprep.subr.mxu0 0.0
      %1131 = vmatpush1.msra.mxu0 0.0
      %1132 = vmatprep.subr.mxu0 0.0
      %1133 = vmatpush1.msra.mxu0 0.0
      %1134 = vmatprep.subr.mxu0 0.0
      %1135 = vmatpush1.msra.mxu0 0.0
      %1136 = vmatprep.subr.mxu0 0.0
      %1137 = vmatpush1.msra.mxu0 0.0
      %1138 = vmatprep.subr.mxu0 0.0
      %1139 = vmatpush1.msra.mxu0 0.0
      %1140 = vmatprep.subr.mxu0 0.0
      %1141 = vmatpush1.msra.mxu0 0.0
      %1142 = vmatprep.subr.mxu0 0.0
      %1143 = vmatpush1.msra.mxu0 0.0
      %1144 = vmatprep.subr.mxu0 0.0
      %1145 = vmatpush1.msra.mxu0 0.0
      %1146 = vmatprep.subr.mxu0 0.0
      %1147 = vmatpush1.msra.mxu0 0.0
      %1148 = vmatprep.subr.mxu0 0.0
      %1149 = vmatpush1.msra.mxu0 0.0
      %1150 = vmatprep.subr.mxu0 0.0
      %1151 = vmatpush1.msra.mxu0 0.0
      %1152 = vmatprep.subr.mxu0 0.0
      %1153 = vmatpush1.msra.mxu0 0.0
      %1154 = vmatprep.subr.mxu0 0.0
      %1155 = vmatpush1.msra.mxu0 0.0
      %1156 = vmatprep.subr.mxu0 0.0
      %1157 = vmatpush1.msra.mxu0 0.0
      %1158 = vmatprep.subr.mxu0 0.0
      %1159 = vmatpush1.msra.mxu0 0.0
      %1160 = vmatprep.subr.mxu0 0.0
      %1161 = vmatpush1.msra.mxu0 0.0
      %1162 = vmatprep.subr.mxu0 0.0
      %1163 = vmatpush1.msra.mxu0 0.0
      %1164 = vmatprep.subr.mxu0 0.0
      %1165 = vmatpush1.msra.mxu0 0.0
      %1166 = vmatprep.subr.mxu0 0.0
      %1167 = vmatpush1.msra.mxu0 0.0
      %1168 = vmatprep.subr.mxu0 0.0
      %1169 = vmatpush1.msra.mxu0 0.0
      %1170 = vmatprep.subr.mxu0 0.0
      %1171 = vmatpush1.msra.mxu0 0.0
      %1172 = vmatprep.subr.mxu0 0.0
      %1173 = vmatpush1.msra.mxu0 0.0
      %1174 = vmatprep.subr.mxu0 0.0
      %1175 = vmatpush1.msra.mxu0 0.0
      %1176 = vmatprep.subr.mxu0 0.0
      %1177 = vmatpush1.msra.mxu0 0.0
      %1178 = vmatprep.subr.mxu0 0.0
      %1179 = vmatpush1.msra.mxu0 0.0
      %1180 = vmatprep.mubr.f32.mxu0 0.0
      %1181 = vmatmul.mubr.f32.gmra.mrb[0].mxu0 %v1114
      %v1182 = vpop.f32.mrb[0].mxu0
      %v1183 = vadd.f32 0.0, %v1182
      %v1184 = vpop.f32.mrb[0].mxu0
      %v1185 = vadd.f32 0.0, %v1184
      %1186 = vdwg.mxu0
      %1187 = vmatprep.subr.mxu0 0.0
      %1188 = vmatpush1.msra.mxu0 %v1109
      %1189 = vmatprep.subr.mxu0 0.0
      %1190 = vmatpush1.msra.mxu0 0.0
      %1191 = vmatprep.subr.mxu0 0.0
      %1192 = vmatpush1.msra.mxu0 0.0
      %1193 = vmatprep.subr.mxu0 0.0
      %1194 = vmatpush1.msra.mxu0 0.0
      %1195 = vmatprep.subr.mxu0 0.0
      %1196 = vmatpush1.msra.mxu0 0.0
      %1197 = vmatprep.subr.mxu0 0.0
      %1198 = vmatpush1.msra.mxu0 0.0
      %1199 = vmatprep.subr.mxu0 0.0
      %1200 = vmatpush1.msra.mxu0 0.0
      %1201 = vmatprep.subr.mxu0 0.0
      %1202 = vmatpush1.msra.mxu0 0.0
      %1203 = vmatprep.subr.mxu0 0.0
      %1204 = vmatpush1.msra.mxu0 0.0
      %1205 = vmatprep.subr.mxu0 0.0
      %1206 = vmatpush1.msra.mxu0 0.0
      %1207 = vmatprep.subr.mxu0 0.0
      %1208 = vmatpush1.msra.mxu0 0.0
      %1209 = vmatprep.subr.mxu0 0.0
      %1210 = vmatpush1.msra.mxu0 0.0
      %1211 = vmatprep.subr.mxu0 0.0
      %1212 = vmatpush1.msra.mxu0 0.0
      %1213 = vmatprep.subr.mxu0 0.0
      %1214 = vmatpush1.msra.mxu0 0.0
      %1215 = vmatprep.subr.mxu0 0.0
      %1216 = vmatpush1.msra.mxu0 0.0
      %1217 = vmatprep.subr.mxu0 0.0
      %1218 = vmatpush1.msra.mxu0 0.0
      %1219 = vmatprep.subr.mxu0 0.0
      %1220 = vmatpush1.msra.mxu0 0.0
      %1221 = vmatprep.subr.mxu0 0.0
      %1222 = vmatpush1.msra.mxu0 0.0
      %1223 = vmatprep.subr.mxu0 0.0
      %1224 = vmatpush1.msra.mxu0 0.0
      %1225 = vmatprep.subr.mxu0 0.0
      %1226 = vmatpush1.msra.mxu0 0.0
      %1227 = vmatprep.subr.mxu0 0.0
      %1228 = vmatpush1.msra.mxu0 0.0
      %1229 = vmatprep.subr.mxu0 0.0
      %1230 = vmatpush1.msra.mxu0 0.0
      %1231 = vmatprep.subr.mxu0 0.0
      %1232 = vmatpush1.msra.mxu0 0.0
      %1233 = vmatprep.subr.mxu0 0.0
      %1234 = vmatpush1.msra.mxu0 0.0
      %1235 = vmatprep.subr.mxu0 0.0
      %1236 = vmatpush1.msra.mxu0 0.0
      %1237 = vmatprep.subr.mxu0 0.0
      %1238 = vmatpush1.msra.mxu0 0.0
      %1239 = vmatprep.subr.mxu0 0.0
      %1240 = vmatpush1.msra.mxu0 0.0
      %1241 = vmatprep.subr.mxu0 0.0
      %1242 = vmatpush1.msra.mxu0 0.0
      %1243 = vmatprep.subr.mxu0 0.0
      %1244 = vmatpush1.msra.mxu0 0.0
      %1245 = vmatprep.subr.mxu0 0.0
      %1246 = vmatpush1.msra.mxu0 0.0
      %1247 = vmatprep.subr.mxu0 0.0
      %1248 = vmatpush1.msra.mxu0 0.0
      %1249 = vmatprep.subr.mxu0 0.0
      %1250 = vmatpush1.msra.mxu0 0.0
      %1251 = vmatprep.mubr.f32.mxu0 0.0
      %1252 = vmatmul.mubr.f32.gmra.mrb[0].mxu0 %v1114
      %v1253 = vpop.f32.mrb[0].mxu0
      %v1254 = vadd.f32 0.0, %v1253
      %v1255 = vpop.f32.mrb[0].mxu0
      %1256 = vdwg.mxu0
      %v1257 = vadd.f32 %v1093, %v1183
      %v1258 = vadd.f32 %v1094, %v1185
      %v1259 = vadd.f32 %v1095, %v1254
      %s1260 = scalar_lea.vmem %s7, 32
      %v1261 = vld [vmem:[%s1260] sm:$0xff]
      %v1263 = vsel %vm628, %v1261, 0
      %1265 = vmatprep.subr.mxu0 %v580
      %1266 = vmatpush1.msra.mxu0 %v579
      %1267 = vmatprep.subr.mxu0 0.0
      %1268 = vmatpush1.msra.mxu0 0.0
      %1269 = vmatprep.subr.mxu0 0.0
      %1270 = vmatpush1.msra.mxu0 0.0
      %1271 = vmatprep.subr.mxu0 0.0
      %1272 = vmatpush1.msra.mxu0 0.0
      %1273 = vmatprep.subr.mxu0 0.0
      %1274 = vmatpush1.msra.mxu0 0.0
      %1275 = vmatprep.subr.mxu0 0.0
      %1276 = vmatpush1.msra.mxu0 0.0
      %1277 = vmatprep.subr.mxu0 0.0
      %1278 = vmatpush1.msra.mxu0 0.0
      %1279 = vmatprep.subr.mxu0 0.0
      %1280 = vmatpush1.msra.mxu0 0.0
      %1281 = vmatprep.subr.mxu0 0.0
      %1282 = vmatpush1.msra.mxu0 0.0
      %1283 = vmatprep.subr.mxu0 0.0
      %1284 = vmatpush1.msra.mxu0 0.0
      %1285 = vmatprep.subr.mxu0 0.0
      %1286 = vmatpush1.msra.mxu0 0.0
      %1287 = vmatprep.subr.mxu0 0.0
      %1288 = vmatpush1.msra.mxu0 0.0
      %1289 = vmatprep.subr.mxu0 0.0
      %1290 = vmatpush1.msra.mxu0 0.0
      %1291 = vmatprep.subr.mxu0 0.0
      %1292 = vmatpush1.msra.mxu0 0.0
      %1293 = vmatprep.subr.mxu0 0.0
      %1294 = vmatpush1.msra.mxu0 0.0
      %1295 = vmatprep.subr.mxu0 0.0
      %1296 = vmatpush1.msra.mxu0 0.0
      %1297 = vmatprep.subr.mxu0 0.0
      %1298 = vmatpush1.msra.mxu0 0.0
      %1299 = vmatprep.subr.mxu0 0.0
      %1300 = vmatpush1.msra.mxu0 0.0
      %1301 = vmatprep.subr.mxu0 0.0
      %1302 = vmatpush1.msra.mxu0 0.0
      %1303 = vmatprep.subr.mxu0 0.0
      %1304 = vmatpush1.msra.mxu0 0.0
      %1305 = vmatprep.subr.mxu0 0.0
      %1306 = vmatpush1.msra.mxu0 0.0
      %1307 = vmatprep.subr.mxu0 0.0
      %1308 = vmatpush1.msra.mxu0 0.0
      %1309 = vmatprep.subr.mxu0 0.0
      %1310 = vmatpush1.msra.mxu0 0.0
      %1311 = vmatprep.subr.mxu0 0.0
      %1312 = vmatpush1.msra.mxu0 0.0
      %1313 = vmatprep.subr.mxu0 0.0
      %1314 = vmatpush1.msra.mxu0 0.0
      %1315 = vmatprep.subr.mxu0 0.0
      %1316 = vmatpush1.msra.mxu0 0.0
      %1317 = vmatprep.subr.mxu0 0.0
      %1318 = vmatpush1.msra.mxu0 0.0
      %1319 = vmatprep.subr.mxu0 0.0
      %1320 = vmatpush1.msra.mxu0 0.0
      %1321 = vmatprep.subr.mxu0 0.0
      %1322 = vmatpush1.msra.mxu0 0.0
      %1323 = vmatprep.subr.mxu0 0.0
      %1324 = vmatpush1.msra.mxu0 0.0
      %1325 = vmatprep.subr.mxu0 0.0
      %1326 = vmatpush1.msra.mxu0 0.0
      %1327 = vmatprep.subr.mxu0 0.0
      %1328 = vmatpush1.msra.mxu0 0.0
      %1329 = vmatprep.mubr.f32.mxu0 0.0
      %1330 = vmatmul.mubr.f32.gmra.mrb[0].mxu0 %v1263
      %v1331 = vpop.f32.mrb[0].mxu0
      %v1332 = vadd.f32 0.0, %v1331
      %v1333 = vpop.f32.mrb[0].mxu0
      %v1334 = vadd.f32 0.0, %v1333
      %1335 = vdwg.mxu0
      %1336 = vmatprep.subr.mxu0 0.0
      %1337 = vmatpush1.msra.mxu0 %v581
      %1338 = vmatprep.subr.mxu0 0.0
      %1339 = vmatpush1.msra.mxu0 0.0
      %1340 = vmatprep.subr.mxu0 0.0
      %1341 = vmatpush1.msra.mxu0 0.0
      %1342 = vmatprep.subr.mxu0 0.0
      %1343 = vmatpush1.msra.mxu0 0.0
      %1344 = vmatprep.subr.mxu0 0.0
      %1345 = vmatpush1.msra.mxu0 0.0
      %1346 = vmatprep.subr.mxu0 0.0
      %1347 = vmatpush1.msra.mxu0 0.0
      %1348 = vmatprep.subr.mxu0 0.0
      %1349 = vmatpush1.msra.mxu0 0.0
      %1350 = vmatprep.subr.mxu0 0.0
      %1351 = vmatpush1.msra.mxu0 0.0
      %1352 = vmatprep.subr.mxu0 0.0
      %1353 = vmatpush1.msra.mxu0 0.0
      %1354 = vmatprep.subr.mxu0 0.0
      %1355 = vmatpush1.msra.mxu0 0.0
      %1356 = vmatprep.subr.mxu0 0.0
      %1357 = vmatpush1.msra.mxu0 0.0
      %1358 = vmatprep.subr.mxu0 0.0
      %1359 = vmatpush1.msra.mxu0 0.0
      %1360 = vmatprep.subr.mxu0 0.0
      %1361 = vmatpush1.msra.mxu0 0.0
      %1362 = vmatprep.subr.mxu0 0.0
      %1363 = vmatpush1.msra.mxu0 0.0
      %1364 = vmatprep.subr.mxu0 0.0
      %1365 = vmatpush1.msra.mxu0 0.0
      %1366 = vmatprep.subr.mxu0 0.0
      %1367 = vmatpush1.msra.mxu0 0.0
      %1368 = vmatprep.subr.mxu0 0.0
      %1369 = vmatpush1.msra.mxu0 0.0
      %1370 = vmatprep.subr.mxu0 0.0
      %1371 = vmatpush1.msra.mxu0 0.0
      %1372 = vmatprep.subr.mxu0 0.0
      %1373 = vmatpush1.msra.mxu0 0.0
      %1374 = vmatprep.subr.mxu0 0.0
      %1375 = vmatpush1.msra.mxu0 0.0
      %1376 = vmatprep.subr.mxu0 0.0
      %1377 = vmatpush1.msra.mxu0 0.0
      %1378 = vmatprep.subr.mxu0 0.0
      %1379 = vmatpush1.msra.mxu0 0.0
      %1380 = vmatprep.subr.mxu0 0.0
      %1381 = vmatpush1.msra.mxu0 0.0
      %1382 = vmatprep.subr.mxu0 0.0
      %1383 = vmatpush1.msra.mxu0 0.0
      %1384 = vmatprep.subr.mxu0 0.0
      %1385 = vmatpush1.msra.mxu0 0.0
      %1386 = vmatprep.subr.mxu0 0.0
      %1387 = vmatpush1.msra.mxu0 0.0
      %1388 = vmatprep.subr.mxu0 0.0
      %1389 = vmatpush1.msra.mxu0 0.0
      %1390 = vmatprep.subr.mxu0 0.0
      %1391 = vmatpush1.msra.mxu0 0.0
      %1392 = vmatprep.subr.mxu0 0.0
      %1393 = vmatpush1.msra.mxu0 0.0
      %1394 = vmatprep.subr.mxu0 0.0
      %1395 = vmatpush1.msra.mxu0 0.0
      %1396 = vmatprep.subr.mxu0 0.0
      %1397 = vmatpush1.msra.mxu0 0.0
      %1398 = vmatprep.subr.mxu0 0.0
      %1399 = vmatpush1.msra.mxu0 0.0
      %1400 = vmatprep.mubr.f32.mxu0 0.0
      %1401 = vmatmul.mubr.f32.gmra.mrb[0].mxu0 %v1263
      %v1402 = vpop.f32.mrb[0].mxu0
      %v1403 = vadd.f32 0.0, %v1402
      %v1404 = vpop.f32.mrb[0].mxu0
      %1405 = vdwg.mxu0
      %v1406 = vadd.f32 %v1257, %v1332
      %v1407 = vadd.f32 %v1258, %v1334
      %v1408 = vadd.f32 %v1259, %v1403
      %s1409 = scalar_lea.vmem %s7, 40
      %v1410 = vld [vmem:[%s1409] sm:$0xff]
      %1412 = vrot.lane.b32.xlu0 %v579, 127
      %v1413 = vpop.permute.xlu0 %1412
      %1414 = vrot.lane.b32.xlu0 %v580, 127
      %v1415 = vpop.permute.xlu0 %1414
      %1416 = vrot.lane.b32.xlu0 %v581, 127
      %v1417 = vpop.permute.xlu0 %1416
      %1418 = vrot.lane.b32.xlu0 %v605, 127
      %v1419 = vpop.permute.xlu0 %1418
      %vm1420 = vcmask 1039360
      %v1421 = vsel %vm1420, %v1413, %v1415
      %v1422 = vsel %vm1420, %v1415, %v1417
      %v1423 = vsel %vm1420, %v1417, %v1419
      %v1428 = vsel %vm628, %v1410, 0
      %1430 = vmatprep.subr.mxu0 %v1422
      %1431 = vmatpush1.msra.mxu0 %v1421
      %1432 = vmatprep.subr.mxu0 0.0
      %1433 = vmatpush1.msra.mxu0 0.0
      %1434 = vmatprep.subr.mxu0 0.0
      %1435 = vmatpush1.msra.mxu0 0.0
      %1436 = vmatprep.subr.mxu0 0.0
      %1437 = vmatpush1.msra.mxu0 0.0
      %1438 = vmatprep.subr.mxu0 0.0
      %1439 = vmatpush1.msra.mxu0 0.0
      %1440 = vmatprep.subr.mxu0 0.0
      %1441 = vmatpush1.msra.mxu0 0.0
      %1442 = vmatprep.subr.mxu0 0.0
      %1443 = vmatpush1.msra.mxu0 0.0
      %1444 = vmatprep.subr.mxu0 0.0
      %1445 = vmatpush1.msra.mxu0 0.0
      %1446 = vmatprep.subr.mxu0 0.0
      %1447 = vmatpush1.msra.mxu0 0.0
      %1448 = vmatprep.subr.mxu0 0.0
      %1449 = vmatpush1.msra.mxu0 0.0
      %1450 = vmatprep.subr.mxu0 0.0
      %1451 = vmatpush1.msra.mxu0 0.0
      %1452 = vmatprep.subr.mxu0 0.0
      %1453 = vmatpush1.msra.mxu0 0.0
      %1454 = vmatprep.subr.mxu0 0.0
      %1455 = vmatpush1.msra.mxu0 0.0
      %1456 = vmatprep.subr.mxu0 0.0
      %1457 = vmatpush1.msra.mxu0 0.0
      %1458 = vmatprep.subr.mxu0 0.0
      %1459 = vmatpush1.msra.mxu0 0.0
      %1460 = vmatprep.subr.mxu0 0.0
      %1461 = vmatpush1.msra.mxu0 0.0
      %1462 = vmatprep.subr.mxu0 0.0
      %1463 = vmatpush1.msra.mxu0 0.0
      %1464 = vmatprep.subr.mxu0 0.0
      %1465 = vmatpush1.msra.mxu0 0.0
      %1466 = vmatprep.subr.mxu0 0.0
      %1467 = vmatpush1.msra.mxu0 0.0
      %1468 = vmatprep.subr.mxu0 0.0
      %1469 = vmatpush1.msra.mxu0 0.0
      %1470 = vmatprep.subr.mxu0 0.0
      %1471 = vmatpush1.msra.mxu0 0.0
      %1472 = vmatprep.subr.mxu0 0.0
      %1473 = vmatpush1.msra.mxu0 0.0
      %1474 = vmatprep.subr.mxu0 0.0
      %1475 = vmatpush1.msra.mxu0 0.0
      %1476 = vmatprep.subr.mxu0 0.0
      %1477 = vmatpush1.msra.mxu0 0.0
      %1478 = vmatprep.subr.mxu0 0.0
      %1479 = vmatpush1.msra.mxu0 0.0
      %1480 = vmatprep.subr.mxu0 0.0
      %1481 = vmatpush1.msra.mxu0 0.0
      %1482 = vmatprep.subr.mxu0 0.0
      %1483 = vmatpush1.msra.mxu0 0.0
      %1484 = vmatprep.subr.mxu0 0.0
      %1485 = vmatpush1.msra.mxu0 0.0
      %1486 = vmatprep.subr.mxu0 0.0
      %1487 = vmatpush1.msra.mxu0 0.0
      %1488 = vmatprep.subr.mxu0 0.0
      %1489 = vmatpush1.msra.mxu0 0.0
      %1490 = vmatprep.subr.mxu0 0.0
      %1491 = vmatpush1.msra.mxu0 0.0
      %1492 = vmatprep.subr.mxu0 0.0
      %1493 = vmatpush1.msra.mxu0 0.0
      %1494 = vmatprep.mubr.f32.mxu0 0.0
      %1495 = vmatmul.mubr.f32.gmra.mrb[0].mxu0 %v1428
      %v1496 = vpop.f32.mrb[0].mxu0
      %v1497 = vadd.f32 0.0, %v1496
      %v1498 = vpop.f32.mrb[0].mxu0
      %v1499 = vadd.f32 0.0, %v1498
      %1500 = vdwg.mxu0
      %1501 = vmatprep.subr.mxu0 0.0
      %1502 = vmatpush1.msra.mxu0 %v1423
      %1503 = vmatprep.subr.mxu0 0.0
      %1504 = vmatpush1.msra.mxu0 0.0
      %1505 = vmatprep.subr.mxu0 0.0
      %1506 = vmatpush1.msra.mxu0 0.0
      %1507 = vmatprep.subr.mxu0 0.0
      %1508 = vmatpush1.msra.mxu0 0.0
      %1509 = vmatprep.subr.mxu0 0.0
      %1510 = vmatpush1.msra.mxu0 0.0
      %1511 = vmatprep.subr.mxu0 0.0
      %1512 = vmatpush1.msra.mxu0 0.0
      %1513 = vmatprep.subr.mxu0 0.0
      %1514 = vmatpush1.msra.mxu0 0.0
      %1515 = vmatprep.subr.mxu0 0.0
      %1516 = vmatpush1.msra.mxu0 0.0
      %1517 = vmatprep.subr.mxu0 0.0
      %1518 = vmatpush1.msra.mxu0 0.0
      %1519 = vmatprep.subr.mxu0 0.0
      %1520 = vmatpush1.msra.mxu0 0.0
      %1521 = vmatprep.subr.mxu0 0.0
      %1522 = vmatpush1.msra.mxu0 0.0
      %1523 = vmatprep.subr.mxu0 0.0
      %1524 = vmatpush1.msra.mxu0 0.0
      %1525 = vmatprep.subr.mxu0 0.0
      %1526 = vmatpush1.msra.mxu0 0.0
      %1527 = vmatprep.subr.mxu0 0.0
      %1528 = vmatpush1.msra.mxu0 0.0
      %1529 = vmatprep.subr.mxu0 0.0
      %1530 = vmatpush1.msra.mxu0 0.0
      %1531 = vmatprep.subr.mxu0 0.0
      %1532 = vmatpush1.msra.mxu0 0.0
      %1533 = vmatprep.subr.mxu0 0.0
      %1534 = vmatpush1.msra.mxu0 0.0
      %1535 = vmatprep.subr.mxu0 0.0
      %1536 = vmatpush1.msra.mxu0 0.0
      %1537 = vmatprep.subr.mxu0 0.0
      %1538 = vmatpush1.msra.mxu0 0.0
      %1539 = vmatprep.subr.mxu0 0.0
      %1540 = vmatpush1.msra.mxu0 0.0
      %1541 = vmatprep.subr.mxu0 0.0
      %1542 = vmatpush1.msra.mxu0 0.0
      %1543 = vmatprep.subr.mxu0 0.0
      %1544 = vmatpush1.msra.mxu0 0.0
      %1545 = vmatprep.subr.mxu0 0.0
      %1546 = vmatpush1.msra.mxu0 0.0
      %1547 = vmatprep.subr.mxu0 0.0
      %1548 = vmatpush1.msra.mxu0 0.0
      %1549 = vmatprep.subr.mxu0 0.0
      %1550 = vmatpush1.msra.mxu0 0.0
      %1551 = vmatprep.subr.mxu0 0.0
      %1552 = vmatpush1.msra.mxu0 0.0
      %1553 = vmatprep.subr.mxu0 0.0
      %1554 = vmatpush1.msra.mxu0 0.0
      %1555 = vmatprep.subr.mxu0 0.0
      %1556 = vmatpush1.msra.mxu0 0.0
      %1557 = vmatprep.subr.mxu0 0.0
      %1558 = vmatpush1.msra.mxu0 0.0
      %1559 = vmatprep.subr.mxu0 0.0
      %1560 = vmatpush1.msra.mxu0 0.0
      %1561 = vmatprep.subr.mxu0 0.0
      %1562 = vmatpush1.msra.mxu0 0.0
      %1563 = vmatprep.subr.mxu0 0.0
      %1564 = vmatpush1.msra.mxu0 0.0
      %1565 = vmatprep.mubr.f32.mxu0 0.0
      %1566 = vmatmul.mubr.f32.gmra.mrb[0].mxu0 %v1428
      %v1567 = vpop.f32.mrb[0].mxu0
      %v1568 = vadd.f32 0.0, %v1567
      %v1569 = vpop.f32.mrb[0].mxu0
      %1570 = vdwg.mxu0
      %v1571 = vadd.f32 %v1406, %v1497
      %v1572 = vadd.f32 %v1407, %v1499
      %v1573 = vadd.f32 %v1408, %v1568
      %s1574 = scalar_lea.vmem %s7, 48
      %v1575 = vld [vmem:[%s1574] sm:$0xff]
      %1576 = vrot.lane.b32.xlu0 %v579, 111
      %v1577 = vpop.permute.xlu0 %1576
      %1578 = vrot.lane.b32.xlu0 %v580, 111
      %v1579 = vpop.permute.xlu0 %1578
      %1580 = vrot.lane.b32.xlu0 %v581, 111
      %v1581 = vpop.permute.xlu0 %1580
      %1582 = vrot.lane.b32.xlu0 %v605, 111
      %v1583 = vpop.permute.xlu0 %1582
      %vm1584 = vcmask 908288
      %v1585 = vsel %vm1584, %v1577, %v1579
      %v1586 = vsel %vm1584, %v1579, %v1581
      %v1587 = vsel %vm1584, %v1581, %v1583
      %v1592 = vsel %vm628, %v1575, 0
      %1594 = vmatprep.subr.mxu0 %v1586
      %1595 = vmatpush1.msra.mxu0 %v1585
      %1596 = vmatprep.subr.mxu0 0.0
      %1597 = vmatpush1.msra.mxu0 0.0
      %1598 = vmatprep.subr.mxu0 0.0
      %1599 = vmatpush1.msra.mxu0 0.0
      %1600 = vmatprep.subr.mxu0 0.0
      %1601 = vmatpush1.msra.mxu0 0.0
      %1602 = vmatprep.subr.mxu0 0.0
      %1603 = vmatpush1.msra.mxu0 0.0
      %1604 = vmatprep.subr.mxu0 0.0
      %1605 = vmatpush1.msra.mxu0 0.0
      %1606 = vmatprep.subr.mxu0 0.0
      %1607 = vmatpush1.msra.mxu0 0.0
      %1608 = vmatprep.subr.mxu0 0.0
      %1609 = vmatpush1.msra.mxu0 0.0
      %1610 = vmatprep.subr.mxu0 0.0
      %1611 = vmatpush1.msra.mxu0 0.0
      %1612 = vmatprep.subr.mxu0 0.0
      %1613 = vmatpush1.msra.mxu0 0.0
      %1614 = vmatprep.subr.mxu0 0.0
      %1615 = vmatpush1.msra.mxu0 0.0
      %1616 = vmatprep.subr.mxu0 0.0
      %1617 = vmatpush1.msra.mxu0 0.0
      %1618 = vmatprep.subr.mxu0 0.0
      %1619 = vmatpush1.msra.mxu0 0.0
      %1620 = vmatprep.subr.mxu0 0.0
      %1621 = vmatpush1.msra.mxu0 0.0
      %1622 = vmatprep.subr.mxu0 0.0
      %1623 = vmatpush1.msra.mxu0 0.0
      %1624 = vmatprep.subr.mxu0 0.0
      %1625 = vmatpush1.msra.mxu0 0.0
      %1626 = vmatprep.subr.mxu0 0.0
      %1627 = vmatpush1.msra.mxu0 0.0
      %1628 = vmatprep.subr.mxu0 0.0
      %1629 = vmatpush1.msra.mxu0 0.0
      %1630 = vmatprep.subr.mxu0 0.0
      %1631 = vmatpush1.msra.mxu0 0.0
      %1632 = vmatprep.subr.mxu0 0.0
      %1633 = vmatpush1.msra.mxu0 0.0
      %1634 = vmatprep.subr.mxu0 0.0
      %1635 = vmatpush1.msra.mxu0 0.0
      %1636 = vmatprep.subr.mxu0 0.0
      %1637 = vmatpush1.msra.mxu0 0.0
      %1638 = vmatprep.subr.mxu0 0.0
      %1639 = vmatpush1.msra.mxu0 0.0
      %1640 = vmatprep.subr.mxu0 0.0
      %1641 = vmatpush1.msra.mxu0 0.0
      %1642 = vmatprep.subr.mxu0 0.0
      %1643 = vmatpush1.msra.mxu0 0.0
      %1644 = vmatprep.subr.mxu0 0.0
      %1645 = vmatpush1.msra.mxu0 0.0
      %1646 = vmatprep.subr.mxu0 0.0
      %1647 = vmatpush1.msra.mxu0 0.0
      %1648 = vmatprep.subr.mxu0 0.0
      %1649 = vmatpush1.msra.mxu0 0.0
      %1650 = vmatprep.subr.mxu0 0.0
      %1651 = vmatpush1.msra.mxu0 0.0
      %1652 = vmatprep.subr.mxu0 0.0
      %1653 = vmatpush1.msra.mxu0 0.0
      %1654 = vmatprep.subr.mxu0 0.0
      %1655 = vmatpush1.msra.mxu0 0.0
      %1656 = vmatprep.subr.mxu0 0.0
      %1657 = vmatpush1.msra.mxu0 0.0
      %1658 = vmatprep.mubr.f32.mxu0 0.0
      %1659 = vmatmul.mubr.f32.gmra.mrb[0].mxu0 %v1592
      %v1660 = vpop.f32.mrb[0].mxu0
      %v1661 = vadd.f32 0.0, %v1660
      %v1662 = vpop.f32.mrb[0].mxu0
      %v1663 = vadd.f32 0.0, %v1662
      %1664 = vdwg.mxu0
      %1665 = vmatprep.subr.mxu0 0.0
      %1666 = vmatpush1.msra.mxu0 %v1587
      %1667 = vmatprep.subr.mxu0 0.0
      %1668 = vmatpush1.msra.mxu0 0.0
      %1669 = vmatprep.subr.mxu0 0.0
      %1670 = vmatpush1.msra.mxu0 0.0
      %1671 = vmatprep.subr.mxu0 0.0
      %1672 = vmatpush1.msra.mxu0 0.0
      %1673 = vmatprep.subr.mxu0 0.0
      %1674 = vmatpush1.msra.mxu0 0.0
      %1675 = vmatprep.subr.mxu0 0.0
      %1676 = vmatpush1.msra.mxu0 0.0
      %1677 = vmatprep.subr.mxu0 0.0
      %1678 = vmatpush1.msra.mxu0 0.0
      %1679 = vmatprep.subr.mxu0 0.0
      %1680 = vmatpush1.msra.mxu0 0.0
      %1681 = vmatprep.subr.mxu0 0.0
      %1682 = vmatpush1.msra.mxu0 0.0
      %1683 = vmatprep.subr.mxu0 0.0
      %1684 = vmatpush1.msra.mxu0 0.0
      %1685 = vmatprep.subr.mxu0 0.0
      %1686 = vmatpush1.msra.mxu0 0.0
      %1687 = vmatprep.subr.mxu0 0.0
      %1688 = vmatpush1.msra.mxu0 0.0
      %1689 = vmatprep.subr.mxu0 0.0
      %1690 = vmatpush1.msra.mxu0 0.0
      %1691 = vmatprep.subr.mxu0 0.0
      %1692 = vmatpush1.msra.mxu0 0.0
      %1693 = vmatprep.subr.mxu0 0.0
      %1694 = vmatpush1.msra.mxu0 0.0
      %1695 = vmatprep.subr.mxu0 0.0
      %1696 = vmatpush1.msra.mxu0 0.0
      %1697 = vmatprep.subr.mxu0 0.0
      %1698 = vmatpush1.msra.mxu0 0.0
      %1699 = vmatprep.subr.mxu0 0.0
      %1700 = vmatpush1.msra.mxu0 0.0
      %1701 = vmatprep.subr.mxu0 0.0
      %1702 = vmatpush1.msra.mxu0 0.0
      %1703 = vmatprep.subr.mxu0 0.0
      %1704 = vmatpush1.msra.mxu0 0.0
      %1705 = vmatprep.subr.mxu0 0.0
      %1706 = vmatpush1.msra.mxu0 0.0
      %1707 = vmatprep.subr.mxu0 0.0
      %1708 = vmatpush1.msra.mxu0 0.0
      %1709 = vmatprep.subr.mxu0 0.0
      %1710 = vmatpush1.msra.mxu0 0.0
      %1711 = vmatprep.subr.mxu0 0.0
      %1712 = vmatpush1.msra.mxu0 0.0
      %1713 = vmatprep.subr.mxu0 0.0
      %1714 = vmatpush1.msra.mxu0 0.0
      %1715 = vmatprep.subr.mxu0 0.0
      %1716 = vmatpush1.msra.mxu0 0.0
      %1717 = vmatprep.subr.mxu0 0.0
      %1718 = vmatpush1.msra.mxu0 0.0
      %1719 = vmatprep.subr.mxu0 0.0
      %1720 = vmatpush1.msra.mxu0 0.0
      %1721 = vmatprep.subr.mxu0 0.0
      %1722 = vmatpush1.msra.mxu0 0.0
      %1723 = vmatprep.subr.mxu0 0.0
      %1724 = vmatpush1.msra.mxu0 0.0
      %1725 = vmatprep.subr.mxu0 0.0
      %1726 = vmatpush1.msra.mxu0 0.0
      %1727 = vmatprep.subr.mxu0 0.0
      %1728 = vmatpush1.msra.mxu0 0.0
      %1729 = vmatprep.mubr.f32.mxu0 0.0
      %1730 = vmatmul.mubr.f32.gmra.mrb[0].mxu0 %v1592
      %v1731 = vpop.f32.mrb[0].mxu0
      %v1732 = vadd.f32 0.0, %v1731
      %v1733 = vpop.f32.mrb[0].mxu0
      %1734 = vdwg.mxu0
      %v1735 = vadd.f32 %v1571, %v1661
      %v1736 = vadd.f32 %v1572, %v1663
      %v1737 = vadd.f32 %v1573, %v1732
      %s1738 = scalar_lea.vmem %s7, 56
      %v1739 = vld [vmem:[%s1738] sm:$0xff]
      %1740 = vrot.lane.b32.xlu0 %v579, 110
      %v1741 = vpop.permute.xlu0 %1740
      %1742 = vrot.lane.b32.xlu0 %v580, 110
      %v1743 = vpop.permute.xlu0 %1742
      %1744 = vrot.lane.b32.xlu0 %v581, 110
      %v1745 = vpop.permute.xlu0 %1744
      %1746 = vrot.lane.b32.xlu0 %v605, 110
      %v1747 = vpop.permute.xlu0 %1746
      %vm1748 = vcmask 900096
      %v1749 = vsel %vm1748, %v1741, %v1743
      %v1750 = vsel %vm1748, %v1743, %v1745
      %v1751 = vsel %vm1748, %v1745, %v1747
      %v1756 = vsel %vm628, %v1739, 0
      %1758 = vmatprep.subr.mxu0 %v1750
      %1759 = vmatpush1.msra.mxu0 %v1749
      %1760 = vmatprep.subr.mxu0 0.0
      %1761 = vmatpush1.msra.mxu0 0.0
      %1762 = vmatprep.subr.mxu0 0.0
      %1763 = vmatpush1.msra.mxu0 0.0
      %1764 = vmatprep.subr.mxu0 0.0
      %1765 = vmatpush1.msra.mxu0 0.0
      %1766 = vmatprep.subr.mxu0 0.0
      %1767 = vmatpush1.msra.mxu0 0.0
      %1768 = vmatprep.subr.mxu0 0.0
      %1769 = vmatpush1.msra.mxu0 0.0
      %1770 = vmatprep.subr.mxu0 0.0
      %1771 = vmatpush1.msra.mxu0 0.0
      %1772 = vmatprep.subr.mxu0 0.0
      %1773 = vmatpush1.msra.mxu0 0.0
      %1774 = vmatprep.subr.mxu0 0.0
      %1775 = vmatpush1.msra.mxu0 0.0
      %1776 = vmatprep.subr.mxu0 0.0
      %1777 = vmatpush1.msra.mxu0 0.0
      %1778 = vmatprep.subr.mxu0 0.0
      %1779 = vmatpush1.msra.mxu0 0.0
      %1780 = vmatprep.subr.mxu0 0.0
      %1781 = vmatpush1.msra.mxu0 0.0
      %1782 = vmatprep.subr.mxu0 0.0
      %1783 = vmatpush1.msra.mxu0 0.0
      %1784 = vmatprep.subr.mxu0 0.0
      %1785 = vmatpush1.msra.mxu0 0.0
      %1786 = vmatprep.subr.mxu0 0.0
      %1787 = vmatpush1.msra.mxu0 0.0
      %1788 = vmatprep.subr.mxu0 0.0
      %1789 = vmatpush1.msra.mxu0 0.0
      %1790 = vmatprep.subr.mxu0 0.0
      %1791 = vmatpush1.msra.mxu0 0.0
      %1792 = vmatprep.subr.mxu0 0.0
      %1793 = vmatpush1.msra.mxu0 0.0
      %1794 = vmatprep.subr.mxu0 0.0
      %1795 = vmatpush1.msra.mxu0 0.0
      %1796 = vmatprep.subr.mxu0 0.0
      %1797 = vmatpush1.msra.mxu0 0.0
      %1798 = vmatprep.subr.mxu0 0.0
      %1799 = vmatpush1.msra.mxu0 0.0
      %1800 = vmatprep.subr.mxu0 0.0
      %1801 = vmatpush1.msra.mxu0 0.0
      %1802 = vmatprep.subr.mxu0 0.0
      %1803 = vmatpush1.msra.mxu0 0.0
      %1804 = vmatprep.subr.mxu0 0.0
      %1805 = vmatpush1.msra.mxu0 0.0
      %1806 = vmatprep.subr.mxu0 0.0
      %1807 = vmatpush1.msra.mxu0 0.0
      %1808 = vmatprep.subr.mxu0 0.0
      %1809 = vmatpush1.msra.mxu0 0.0
      %1810 = vmatprep.subr.mxu0 0.0
      %1811 = vmatpush1.msra.mxu0 0.0
      %1812 = vmatprep.subr.mxu0 0.0
      %1813 = vmatpush1.msra.mxu0 0.0
      %1814 = vmatprep.subr.mxu0 0.0
      %1815 = vmatpush1.msra.mxu0 0.0
      %1816 = vmatprep.subr.mxu0 0.0
      %1817 = vmatpush1.msra.mxu0 0.0
      %1818 = vmatprep.subr.mxu0 0.0
      %1819 = vmatpush1.msra.mxu0 0.0
      %1820 = vmatprep.subr.mxu0 0.0
      %1821 = vmatpush1.msra.mxu0 0.0
      %1822 = vmatprep.mubr.f32.mxu0 0.0
      %1823 = vmatmul.mubr.f32.gmra.mrb[0].mxu0 %v1756
      %v1824 = vpop.f32.mrb[0].mxu0
      %v1825 = vadd.f32 0.0, %v1824
      %v1826 = vpop.f32.mrb[0].mxu0
      %v1827 = vadd.f32 0.0, %v1826
      %1828 = vdwg.mxu0
      %1829 = vmatprep.subr.mxu0 0.0
      %1830 = vmatpush1.msra.mxu0 %v1751
      %1831 = vmatprep.subr.mxu0 0.0
      %1832 = vmatpush1.msra.mxu0 0.0
      %1833 = vmatprep.subr.mxu0 0.0
      %1834 = vmatpush1.msra.mxu0 0.0
      %1835 = vmatprep.subr.mxu0 0.0
      %1836 = vmatpush1.msra.mxu0 0.0
      %1837 = vmatprep.subr.mxu0 0.0
      %1838 = vmatpush1.msra.mxu0 0.0
      %1839 = vmatprep.subr.mxu0 0.0
      %1840 = vmatpush1.msra.mxu0 0.0
      %1841 = vmatprep.subr.mxu0 0.0
      %1842 = vmatpush1.msra.mxu0 0.0
      %1843 = vmatprep.subr.mxu0 0.0
      %1844 = vmatpush1.msra.mxu0 0.0
      %1845 = vmatprep.subr.mxu0 0.0
      %1846 = vmatpush1.msra.mxu0 0.0
      %1847 = vmatprep.subr.mxu0 0.0
      %1848 = vmatpush1.msra.mxu0 0.0
      %1849 = vmatprep.subr.mxu0 0.0
      %1850 = vmatpush1.msra.mxu0 0.0
      %1851 = vmatprep.subr.mxu0 0.0
      %1852 = vmatpush1.msra.mxu0 0.0
      %1853 = vmatprep.subr.mxu0 0.0
      %1854 = vmatpush1.msra.mxu0 0.0
      %1855 = vmatprep.subr.mxu0 0.0
      %1856 = vmatpush1.msra.mxu0 0.0
      %1857 = vmatprep.subr.mxu0 0.0
      %1858 = vmatpush1.msra.mxu0 0.0
      %1859 = vmatprep.subr.mxu0 0.0
      %1860 = vmatpush1.msra.mxu0 0.0
      %1861 = vmatprep.subr.mxu0 0.0
      %1862 = vmatpush1.msra.mxu0 0.0
      %1863 = vmatprep.subr.mxu0 0.0
      %1864 = vmatpush1.msra.mxu0 0.0
      %1865 = vmatprep.subr.mxu0 0.0
      %1866 = vmatpush1.msra.mxu0 0.0
      %1867 = vmatprep.subr.mxu0 0.0
      %1868 = vmatpush1.msra.mxu0 0.0
      %1869 = vmatprep.subr.mxu0 0.0
      %1870 = vmatpush1.msra.mxu0 0.0
      %1871 = vmatprep.subr.mxu0 0.0
      %1872 = vmatpush1.msra.mxu0 0.0
      %1873 = vmatprep.subr.mxu0 0.0
      %1874 = vmatpush1.msra.mxu0 0.0
      %1875 = vmatprep.subr.mxu0 0.0
      %1876 = vmatpush1.msra.mxu0 0.0
      %1877 = vmatprep.subr.mxu0 0.0
      %1878 = vmatpush1.msra.mxu0 0.0
      %1879 = vmatprep.subr.mxu0 0.0
      %1880 = vmatpush1.msra.mxu0 0.0
      %1881 = vmatprep.subr.mxu0 0.0
      %1882 = vmatpush1.msra.mxu0 0.0
      %1883 = vmatprep.subr.mxu0 0.0
      %1884 = vmatpush1.msra.mxu0 0.0
      %1885 = vmatprep.subr.mxu0 0.0
      %1886 = vmatpush1.msra.mxu0 0.0
      %1887 = vmatprep.subr.mxu0 0.0
      %1888 = vmatpush1.msra.mxu0 0.0
      %1889 = vmatprep.subr.mxu0 0.0
      %1890 = vmatpush1.msra.mxu0 0.0
      %1891 = vmatprep.subr.mxu0 0.0
      %1892 = vmatpush1.msra.mxu0 0.0
      %1893 = vmatprep.mubr.f32.mxu0 0.0
      %1894 = vmatmul.mubr.f32.gmra.mrb[0].mxu0 %v1756
      %v1895 = vpop.f32.mrb[0].mxu0
      %v1896 = vadd.f32 0.0, %v1895
      %v1897 = vpop.f32.mrb[0].mxu0
      %1898 = vdwg.mxu0
      %v1899 = vadd.f32 %v1735, %v1825
      %v1900 = vadd.f32 %v1736, %v1827
      %v1901 = vadd.f32 %v1737, %v1896
      %s1902 = scalar_lea.vmem %s7, 64
      %v1903 = vld [vmem:[%s1902] sm:$0xff]
      %1904 = vrot.lane.b32.xlu0 %v579, 109
      %v1905 = vpop.permute.xlu0 %1904
      %1906 = vrot.lane.b32.xlu0 %v580, 109
      %v1907 = vpop.permute.xlu0 %1906
      %1908 = vrot.lane.b32.xlu0 %v581, 109
      %v1909 = vpop.permute.xlu0 %1908
      %1910 = vrot.lane.b32.xlu0 %v605, 109
      %v1911 = vpop.permute.xlu0 %1910
      %vm1912 = vcmask 891904
      %v1913 = vsel %vm1912, %v1905, %v1907
      %v1914 = vsel %vm1912, %v1907, %v1909
      %v1915 = vsel %vm1912, %v1909, %v1911
      %v1920 = vsel %vm628, %v1903, 0
      %1922 = vmatprep.subr.mxu0 %v1914
      %1923 = vmatpush1.msra.mxu0 %v1913
      %1924 = vmatprep.subr.mxu0 0.0
      %1925 = vmatpush1.msra.mxu0 0.0
      %1926 = vmatprep.subr.mxu0 0.0
      %1927 = vmatpush1.msra.mxu0 0.0
      %1928 = vmatprep.subr.mxu0 0.0
      %1929 = vmatpush1.msra.mxu0 0.0
      %1930 = vmatprep.subr.mxu0 0.0
      %1931 = vmatpush1.msra.mxu0 0.0
      %1932 = vmatprep.subr.mxu0 0.0
      %1933 = vmatpush1.msra.mxu0 0.0
      %1934 = vmatprep.subr.mxu0 0.0
      %1935 = vmatpush1.msra.mxu0 0.0
      %1936 = vmatprep.subr.mxu0 0.0
      %1937 = vmatpush1.msra.mxu0 0.0
      %1938 = vmatprep.subr.mxu0 0.0
      %1939 = vmatpush1.msra.mxu0 0.0
      %1940 = vmatprep.subr.mxu0 0.0
      %1941 = vmatpush1.msra.mxu0 0.0
      %1942 = vmatprep.subr.mxu0 0.0
      %1943 = vmatpush1.msra.mxu0 0.0
      %1944 = vmatprep.subr.mxu0 0.0
      %1945 = vmatpush1.msra.mxu0 0.0
      %1946 = vmatprep.subr.mxu0 0.0
      %1947 = vmatpush1.msra.mxu0 0.0
      %1948 = vmatprep.subr.mxu0 0.0
      %1949 = vmatpush1.msra.mxu0 0.0
      %1950 = vmatprep.subr.mxu0 0.0
      %1951 = vmatpush1.msra.mxu0 0.0
      %1952 = vmatprep.subr.mxu0 0.0
      %1953 = vmatpush1.msra.mxu0 0.0
      %1954 = vmatprep.subr.mxu0 0.0
      %1955 = vmatpush1.msra.mxu0 0.0
      %1956 = vmatprep.subr.mxu0 0.0
      %1957 = vmatpush1.msra.mxu0 0.0
      %1958 = vmatprep.subr.mxu0 0.0
      %1959 = vmatpush1.msra.mxu0 0.0
      %1960 = vmatprep.subr.mxu0 0.0
      %1961 = vmatpush1.msra.mxu0 0.0
      %1962 = vmatprep.subr.mxu0 0.0
      %1963 = vmatpush1.msra.mxu0 0.0
      %1964 = vmatprep.subr.mxu0 0.0
      %1965 = vmatpush1.msra.mxu0 0.0
      %1966 = vmatprep.subr.mxu0 0.0
      %1967 = vmatpush1.msra.mxu0 0.0
      %1968 = vmatprep.subr.mxu0 0.0
      %1969 = vmatpush1.msra.mxu0 0.0
      %1970 = vmatprep.subr.mxu0 0.0
      %1971 = vmatpush1.msra.mxu0 0.0
      %1972 = vmatprep.subr.mxu0 0.0
      %1973 = vmatpush1.msra.mxu0 0.0
      %1974 = vmatprep.subr.mxu0 0.0
      %1975 = vmatpush1.msra.mxu0 0.0
      %1976 = vmatprep.subr.mxu0 0.0
      %1977 = vmatpush1.msra.mxu0 0.0
      %1978 = vmatprep.subr.mxu0 0.0
      %1979 = vmatpush1.msra.mxu0 0.0
      %1980 = vmatprep.subr.mxu0 0.0
      %1981 = vmatpush1.msra.mxu0 0.0
      %1982 = vmatprep.subr.mxu0 0.0
      %1983 = vmatpush1.msra.mxu0 0.0
      %1984 = vmatprep.subr.mxu0 0.0
      %1985 = vmatpush1.msra.mxu0 0.0
      %1986 = vmatprep.mubr.f32.mxu0 0.0
      %1987 = vmatmul.mubr.f32.gmra.mrb[0].mxu0 %v1920
      %v1988 = vpop.f32.mrb[0].mxu0
      %v1989 = vadd.f32 0.0, %v1988
      %v1990 = vpop.f32.mrb[0].mxu0
      %v1991 = vadd.f32 0.0, %v1990
      %1992 = vdwg.mxu0
      %1993 = vmatprep.subr.mxu0 0.0
      %1994 = vmatpush1.msra.mxu0 %v1915
      %1995 = vmatprep.subr.mxu0 0.0
      %1996 = vmatpush1.msra.mxu0 0.0
      %1997 = vmatprep.subr.mxu0 0.0
      %1998 = vmatpush1.msra.mxu0 0.0
      %1999 = vmatprep.subr.mxu0 0.0
      %2000 = vmatpush1.msra.mxu0 0.0
      %2001 = vmatprep.subr.mxu0 0.0
      %2002 = vmatpush1.msra.mxu0 0.0
      %2003 = vmatprep.subr.mxu0 0.0
      %2004 = vmatpush1.msra.mxu0 0.0
      %2005 = vmatprep.subr.mxu0 0.0
      %2006 = vmatpush1.msra.mxu0 0.0
      %2007 = vmatprep.subr.mxu0 0.0
      %2008 = vmatpush1.msra.mxu0 0.0
      %2009 = vmatprep.subr.mxu0 0.0
      %2010 = vmatpush1.msra.mxu0 0.0
      %2011 = vmatprep.subr.mxu0 0.0
      %2012 = vmatpush1.msra.mxu0 0.0
      %2013 = vmatprep.subr.mxu0 0.0
      %2014 = vmatpush1.msra.mxu0 0.0
      %2015 = vmatprep.subr.mxu0 0.0
      %2016 = vmatpush1.msra.mxu0 0.0
      %2017 = vmatprep.subr.mxu0 0.0
      %2018 = vmatpush1.msra.mxu0 0.0
      %2019 = vmatprep.subr.mxu0 0.0
      %2020 = vmatpush1.msra.mxu0 0.0
      %2021 = vmatprep.subr.mxu0 0.0
      %2022 = vmatpush1.msra.mxu0 0.0
      %2023 = vmatprep.subr.mxu0 0.0
      %2024 = vmatpush1.msra.mxu0 0.0
      %2025 = vmatprep.subr.mxu0 0.0
      %2026 = vmatpush1.msra.mxu0 0.0
      %2027 = vmatprep.subr.mxu0 0.0
      %2028 = vmatpush1.msra.mxu0 0.0
      %2029 = vmatprep.subr.mxu0 0.0
      %2030 = vmatpush1.msra.mxu0 0.0
      %2031 = vmatprep.subr.mxu0 0.0
      %2032 = vmatpush1.msra.mxu0 0.0
      %2033 = vmatprep.subr.mxu0 0.0
      %2034 = vmatpush1.msra.mxu0 0.0
      %2035 = vmatprep.subr.mxu0 0.0
      %2036 = vmatpush1.msra.mxu0 0.0
      %2037 = vmatprep.subr.mxu0 0.0
      %2038 = vmatpush1.msra.mxu0 0.0
      %2039 = vmatprep.subr.mxu0 0.0
      %2040 = vmatpush1.msra.mxu0 0.0
      %2041 = vmatprep.subr.mxu0 0.0
      %2042 = vmatpush1.msra.mxu0 0.0
      %2043 = vmatprep.subr.mxu0 0.0
      %2044 = vmatpush1.msra.mxu0 0.0
      %2045 = vmatprep.subr.mxu0 0.0
      %2046 = vmatpush1.msra.mxu0 0.0
      %2047 = vmatprep.subr.mxu0 0.0
      %2048 = vmatpush1.msra.mxu0 0.0
      %2049 = vmatprep.subr.mxu0 0.0
      %2050 = vmatpush1.msra.mxu0 0.0
      %2051 = vmatprep.subr.mxu0 0.0
      %2052 = vmatpush1.msra.mxu0 0.0
      %2053 = vmatprep.subr.mxu0 0.0
      %2054 = vmatpush1.msra.mxu0 0.0
      %2055 = vmatprep.subr.mxu0 0.0
      %2056 = vmatpush1.msra.mxu0 0.0
      %2057 = vmatprep.mubr.f32.mxu0 0.0
      %2058 = vmatmul.mubr.f32.gmra.mrb[0].mxu0 %v1920
      %v2059 = vpop.f32.mrb[0].mxu0
      %v2060 = vadd.f32 0.0, %v2059
      %v2061 = vpop.f32.mrb[0].mxu0
      %2062 = vdwg.mxu0
      %v2063 = vadd.f32 %v1899, %v1989
      %v2064 = vadd.f32 %v1900, %v1991
      %v2065 = vadd.f32 %v1901, %v2060
      %2066 = vst [vmem:[%s534] sm:$0xff] %v2063
      %2067 = vst [vmem:[%s534 + $0x8] sm:$0xff] %v2064
      %2068 = vst [vmem:[%s534 + $0x10] sm:$0xff] %v2065
      %v2069 = vld [vmem:[%s517] sm:$0x7]
      %v2071 = vlaneseq
      %v2072 = vshrl.u32 %v2071, 7
      %v2073 = vsub.s32 0, %v2072
      %v2074 = vrot.slane %v2069, %v2073
      %v2075 = vlaneseq
      %v2076 = vshrl.u32 %v2075, 7
      %v2077 = vsub.s32 1, %v2076
      %v2078 = vrot.slane %v2069, %v2077
      %v2079 = vlaneseq
      %v2080 = vshrl.u32 %v2079, 7
      %v2081 = vsub.s32 2, %v2080
      %v2082 = vrot.slane %v2069, %v2081
      %v2086 = vmul.f32 %v2063, %v2074
      %v2087 = vmul.f32 %v2064, %v2078
      %v2088 = vmul.f32 %v2065, %v2082
      %v2089 = vadd.f32 %v2086, %v2087
      %v2090 = vadd.f32 %v2089, %v2088
      %2091 = vadd.xlane.f32.xlu0 %v2090
      %v2092 = vpop.xlane.xlu0 %2091
      %v2093 = vmul.f32 %v2063, %v2086
      %v2094 = vmul.f32 %v2064, %v2087
      %v2095 = vmul.f32 %v2065, %v2088
      %v2096 = vadd.f32 %v2093, %v2094
      %v2097 = vadd.f32 %v2096, %v2095
      %2098 = vadd.xlane.f32.xlu0 %v2097
      %v2099 = vpop.xlane.xlu0 %2098
      %v2100 = vsel %vm1106, %v2092, %v2099
      %vm2101 = vcmask 15360
      %2102 = vst.msk [vmem:[%s539] sm:$0xff] %vm2101, %v2100
      %s2103 = smul.u32 3, %s21
      %p2104 = scmp.lt.s32.totalorder %s2103, 5
      %s2105 = scalar_select %p2104, %s2103, 5
      %s2106 = smul.addr %s2105, 8
      %s2107 = scalar_lea.vmem %s8, %s2106
      %p2108 = scmp.lt.s32.totalorder %s21, 1
      %s2109 = scalar_select %p2108, %s21, 1
      %s2110 = smul.addr %s2109, 8
      %s2111 = scalar_lea.vmem %s9, %s2110
      // Predicated region
      $region53: #{residual_block_forward.4} parent=51 // pred_check
        %p2112 = pneg %p269
      $region54: #{residual_block_forward.4} parent=51 // pred_check_branch
        %2114 = sbr.rel (%p2112) target = $region56
      $region55: #{residual_block_forward.4} parent=51 // pred_region
        %s2115 = smul.u32 3, %s21
      $region56: #{residual_block_forward.4} parent=51 // pred_fallthru
        _
      // Predicated region
      $region57: #{residual_block_forward.4} parent=51 // pred_check
        %p2116 = pneg %p295
      $region58: #{residual_block_forward.4} parent=51 // pred_check_branch
        %2118 = sbr.rel (%p2116) target = $region60
      $region59: #{residual_block_forward.4} parent=51 // pred_region
        _
      $region60: #{residual_block_forward.4} parent=51 // pred_fallthru
        _
    $region52: #{residual_block_forward.4} parent=5 // pred_fallthru
      _
    %p2119 = scmp.le.s32.totalorder 2, %s16
    // Predicated region
    $region61: #{residual_block_forward.4} parent=5 // pred_check
      %p2120 = pneg %p2119
    $region62: #{residual_block_forward.4} parent=5 // pred_check_branch
      %2122 = sbr.rel (%p2120) target = $region64
    $region63: #{residual_block_forward.4} parent=5 // pred_region
      %s2123 = ssub.s32 %s16, 2
      // Predicated region
      $region65: #{residual_block_forward.4} parent=63 // pred_check
        %p2124 = pneg %p275
      $region66: #{residual_block_forward.4} parent=63 // pred_check_branch
        %2126 = sbr.rel (%p2124) target = $region68
      $region67: #{residual_block_forward.4} parent=63 // pred_region
        %s2127 = smul.u32 3, %s22
        %p2128 = scmp.lt.s32.totalorder %s2127, 5
        %s2129 = scalar_select %p2128, %s2127, 5
        %s2130 = smul.addr %s2129, 8
        %s2131 = scalar_lea.vmem %s8, %s2130
      $region68: #{residual_block_forward.4} parent=63 // pred_fallthru
        _
      // Predicated region
      $region69: #{residual_block_forward.4} parent=63 // pred_check
        %p2132 = pneg %p301
      $region70: #{residual_block_forward.4} parent=63 // pred_check_branch
        %2134 = sbr.rel (%p2132) target = $region72
      $region71: #{residual_block_forward.4} parent=63 // pred_region
        %p2135 = scmp.lt.s32.totalorder %s22, 1
        %s2136 = scalar_select %p2135, %s22, 1
        %s2137 = smul.addr %s2136, 8
        %s2138 = scalar_lea.vmem %s9, %s2137
      $region72: #{residual_block_forward.4} parent=63 // pred_fallthru
        _
    $region64: #{residual_block_forward.4} parent=5 // pred_fallthru
      _
  $region6: #{residual_block_forward.4} parent=0 // loop_footer
    %s20 = sadd.s32 1, %s16
  $region7: #{residual_block_forward.4} parent=0 // loop_footer_branch
    %15 = sbr.rel target = $region3
  $region8: #{residual_block_forward.4} parent=0 // loop_exit
    _

</llo_original>
